<compile_context>
chip_gen: v5e
topology: v5e:2x2
jax: 0.10.0
libtpu: 0.0.40
codegen_flags: <defaults>
</compile_context>

<pallas_src>
import functools

import jax
import jax.numpy as jnp
from jax.experimental import pallas as pl
from jax.experimental.pallas import tpu as pltpu

EPS_GN = 1e-5     # torch.nn.GroupNorm default eps
EPS_LN = 1e-5     # torch.nn.LayerNorm default eps
EPS_MASK = 1e-6   # group_feature_assembling normalization eps


# ---------------------------------------------------------------------------
# in-kernel helpers (operate on 2-D tiles held in VMEM)
# ---------------------------------------------------------------------------
def _mm(a, b):
    return jnp.dot(a, b, preferred_element_type=jnp.float32)


def _mm_nt(a, b):
    # a (M, K) . b (N, K) -> (M, N)   (contract last axes)
    return jax.lax.dot_general(a, b, (((1,), (1,)), ((), ())),
                               preferred_element_type=jnp.float32)


def _gn(x, gamma, beta):
    # x (C, HW); gamma/beta (C, 1).  Two-pass (PyTorch-style) statistics in f32.
    mean = jnp.mean(x, axis=-1, keepdims=True)
    var = jnp.mean(jnp.square(x - mean), axis=-1, keepdims=True)
    return (x - mean) * jax.lax.rsqrt(var + EPS_GN) * gamma + beta


def _ln(x, gamma, beta):
    # x (K, C); gamma/beta (1, C).  Two-pass statistics in f32.
    mean = jnp.mean(x, axis=-1, keepdims=True)
    var = jnp.mean(jnp.square(x - mean), axis=-1, keepdims=True)
    return (x - mean) * jax.lax.rsqrt(var + EPS_LN) * gamma + beta


def _assemble_masks(mp, normalize_sigmoid_masks):
    # mp (K, HW) pre-sigmoid mask logits.
    if normalize_sigmoid_masks:
        sm = jax.nn.sigmoid(mp)
        denom = EPS_MASK + jnp.sum(sm, axis=-1, keepdims=True)   # (K, 1)
        return sm * (1.0 / denom)                                # exact reciprocal
    # sigmoid(x) > 0.5  <=>  x > 0  (saves a (K,HW) transcendental)
    return (mp > 0.0).astype(jnp.float32)


def _softmax(logits):
    m = jnp.max(logits, axis=-1, keepdims=True)
    e = jnp.exp(logits - m)
    return e / jnp.sum(e, axis=-1, keepdims=True)   # exact; logits are only (K, K)


# ---------------------------------------------------------------------------
# Fused kernel: feat_transform + init_kernels + group feature assembling +
#               all kernel-update stages.     grid = (B // batch_block,)
# ---------------------------------------------------------------------------
def _rtknet_fused_kernel(cfg,
                         fm_ref, veccin_ref, veckfc_ref, w12_ref, winit_ref,
                         hmat_ref, hvec_ref, hqkv_ref, hcm_ref,
                         cls_out, mp_out):
    (num_stages, norm_masks, bt, cin, kfc, ffn, ncls, mfc, nk, lq, lc) = cfg
    attn_scale = 1.0 / (float(kfc) ** 0.5)

    w_init = winit_ref[...]                          # (nk, kfc) f32 (shared by all bi)
    w_init_bf = w_init.astype(jnp.bfloat16)

    for bi in range(bt):                             # static unroll over batch block
        # --- feat_transform: GN -> ReLU -> conv1x1 -> GN -> ReLU -> conv1x1(+b) -> GN
        x = fm_ref[bi]                               # (cin, HW) f32
        x = jnp.maximum(_gn(x, veccin_ref[:, 0:1], veccin_ref[:, 1:2]), 0.0)
        x = _mm(w12_ref[0:kfc, 0:cin], x.astype(jnp.bfloat16))            # (kfc, HW)
        x = jnp.maximum(_gn(x, veckfc_ref[:, 0:1], veckfc_ref[:, 1:2]), 0.0)
        x = _mm(w12_ref[kfc:2 * kfc, 0:kfc], x.astype(jnp.bfloat16)) + veckfc_ref[:, 2:3]
        fm_t = _gn(x, veckfc_ref[:, 3:4], veckfc_ref[:, 4:5])             # (kfc, HW) f32
        fm_bf = fm_t.astype(jnp.bfloat16)            # single bf16 copy for HW matmuls

        # --- init_kernels (1x1 conv, no bias)
        mp = _mm(w_init_bf, fm_bf)                   # (nk, HW) f32, lane-dense

        if num_stages == 0:
            cls_out[bi] = jnp.zeros((nk, ncls), jnp.float32)
            mp_out[bi] = mp
            continue

        # --- group feature assembling (reused as the stage-0 x_feat)
        x_feat = _mm_nt(_assemble_masks(mp, norm_masks).astype(jnp.bfloat16), fm_bf)
        ker = w_init + x_feat                        # (nk, kfc) f32

        cls = None
        for s in range(num_stages):                  # static unroll over update stages
            # sublane-packed per-stage parameter slabs (all slices lane-offset 0,
            # sublane offsets are multiples of kfc -> multiples of 8)
            def M(i, n, _s=s):
                return hmat_ref[_s, i * kfc:(i + 1) * kfc, 0:n]

            def V(i, n, _s=s):
                return hvec_ref[_s, i:i + 1, 0:n]

            if s > 0:
                x_feat = _mm_nt(_assemble_masks(mp, norm_masks).astype(jnp.bfloat16),
                                fm_bf)

            # adaptive kernel update
            obj = _ln(ker + _mm(x_feat, M(0, kfc)) + V(0, kfc), V(1, kfc), V(2, kfc))

            # single-head self attention over the nk object kernels (fused QKV matmul,
            # segments padded to 128-lane boundaries -> vreg-aligned output slices)
            qkv = _mm(obj, hqkv_ref[s])              # (nk, 3*lq) f32
            q = qkv[:, 0:kfc] + V(3, kfc)
            kk = qkv[:, lq:lq + kfc] + V(4, kfc)
            v = qkv[:, 2 * lq:2 * lq + kfc] + V(5, kfc)
            att = _softmax(_mm_nt(q, kk) * attn_scale)                   # (nk, nk)
            obj = _ln(obj + _mm(_mm(att, v), M(1, kfc)) + V(6, kfc),
                      V(7, kfc), V(8, kfc))

            # FFN
            h = jnp.maximum(_mm(obj, M(2, ffn)) + V(9, ffn), 0.0)
            obj = _ln(obj + _mm_nt(h, M(3, ffn)) + V(10, kfc), V(11, kfc), V(12, kfc))

            # fused classification / mask-feature branch + dynamic 1x1 mask prediction
            cm = _mm(obj, hcm_ref[s])                # (nk, lc + mfc) f32
            cls = cm[:, 0:ncls] + V(13, ncls)
            mfeat = cm[:, lc:lc + mfc] + V(14, mfc)
            mp = _mm(mfeat.astype(jnp.bfloat16), fm_bf)                  # (nk, HW)
            ker = obj

        cls_out[bi] = cls
        mp_out[bi] = mp


# ---------------------------------------------------------------------------
# Wrapper
# ---------------------------------------------------------------------------
def rtknet_head_forward(feature_map_nchw, params, *, num_kernel_update_heads,
                        normalize_sigmoid_masks, batch_block=1):
    B, cin, H, W = feature_map_nchw.shape
    HW = H * W
    fm = feature_map_nchw.reshape(B, cin, HW).astype(jnp.float32)   # NCHW -> (B,C,HW)

    kfc = params["W1"].shape[0]
    nk = params["Winit"].shape[0]
    S = num_kernel_update_heads
    bt = batch_block
    assert B % bt == 0, "batch_block must divide the batch size"

    def rup(n, m):
        return ((n + m - 1) // m) * m

    def pad2(a, rows, cols):
        a = jnp.asarray(a, jnp.float32)
        r, c = a.shape
        return jnp.pad(a, ((0, rows - r), (0, cols - c)))

    # --- feat_transform / init_kernels parameters ----------------------------
    vec_cin = jnp.stack([params["g1"], params["b1"]], axis=-1)               # (cin, 2)
    vec_kfc = jnp.stack([params["g2"], params["b2"], params["bias2"],
                         params["g3"], params["b3"]], axis=-1)               # (kfc, 5)
    LW = max(cin, kfc)
    # W1 / W2 stacked along sublanes (each starts at lane 0), bf16 for the MXU
    w12 = jnp.concatenate([pad2(params["W1"], kfc, LW),
                           pad2(params["W2"], kfc, LW)],
                          axis=0).astype(jnp.bfloat16)                       # (2*kfc, LW)
    winit = params["Winit"].astype(jnp.float32)                              # (nk, kfc)

    # --- per-stage parameter slabs -------------------------------------------
    LQ = rup(kfc, 128)
    if S > 0:
        h0 = params["heads"][0]
        ffn = h0["Wf1"].shape[1]
        ncls = h0["Wc"].shape[1]
        mfc = h0["Wm"].shape[1]
        assert mfc == kfc, "dynamic mask conv needs mask_feature_channels == kfc"
        LM = max(kfc, ffn)
        LV = max(kfc, ffn, ncls, mfc)
        LC = rup(ncls, 128)

        def pack_mat(h):    # (4*kfc, LM): Wu | Wo | Wf1 | Wf2^T stacked on sublanes
            return jnp.concatenate(
                [pad2(h["Wu"], kfc, LM), pad2(h["Wo"], kfc, LM),
                 pad2(h["Wf1"], kfc, LM), pad2(jnp.asarray(h["Wf2"]).T, kfc, LM)],
                axis=0)

        vnames = ("bu", "ln1g", "ln1b", "bq", "bk", "bv", "bo", "ln2g", "ln2b",
                  "bf1", "bf2", "ln3g", "ln3b", "bc", "bm")

        def pack_vec(h):    # (15, LV): one bias / LN row per sublane, lane offset 0
            return jnp.concatenate(
                [pad2(jnp.reshape(h[n], (1, -1)), 1, LV) for n in vnames], axis=0)

        def pack_qkv(h):    # (kfc, 3*LQ): Wq | Wk | Wv, each padded to 128 lanes
            return jnp.concatenate([pad2(h["Wq"], kfc, LQ), pad2(h["Wk"], kfc, LQ),
                                    pad2(h["Wv"], kfc, LQ)], axis=1)

        def pack_cm(h):     # (kfc, LC + mfc): Wc padded to 128 lanes | Wm
            return jnp.concatenate([pad2(h["Wc"], kfc, LC),
                                    jnp.asarray(h["Wm"], jnp.float32)], axis=1)

        heads = params["heads"]
        hmat = jnp.stack([pack_mat(h) for h in heads], axis=0)
        hvec = jnp.stack([pack_vec(h) for h in heads], axis=0)
        hqkv = jnp.stack([pack_qkv(h) for h in heads], axis=0)
        hcm = jnp.stack([pack_cm(h) for h in heads], axis=0)
    else:
        # num_kernel_update_heads == 0: pred_logits is None (as in PyTorch);
        # dummy slabs keep the fused-kernel signature unchanged.
        ffn, ncls, mfc = 1, 1, kfc
        LC = 128
        hmat = jnp.zeros((1, 4 * kfc, max(kfc, ffn)), jnp.float32)
        hvec = jnp.zeros((1, 15, kfc), jnp.float32)
        hqkv = jnp.zeros((1, kfc, 3 * LQ), jnp.float32)
        hcm = jnp.zeros((1, kfc, LC + mfc), jnp.float32)

    cfg = (S, normalize_sigmoid_masks, bt, cin, kfc, ffn, ncls, mfc, nk, LQ, LC)

    in_arrays = (fm, vec_cin, vec_kfc, w12, winit, hmat, hvec, hqkv, hcm)

    def full_spec(a):
        return pl.BlockSpec(a.shape, lambda b, nd=a.ndim: (0,) * nd)

    in_specs = ([pl.BlockSpec((bt, cin, HW), lambda b: (b, 0, 0))]
                + [full_spec(a) for a in in_arrays[1:]])
    out_shape = (jax.ShapeDtypeStruct((B, nk, ncls), jnp.float32),
                 jax.ShapeDtypeStruct((B, nk, HW), jnp.float32))
    out_specs = (pl.BlockSpec((bt, nk, ncls), lambda b: (b, 0, 0)),
                 pl.BlockSpec((bt, nk, HW), lambda b: (b, 0, 0)))

    cls_score, mask_pred = pl.pallas_call(
        functools.partial(_rtknet_fused_kernel, cfg),
        grid=(B // bt,),
        in_specs=in_specs,
        out_specs=out_specs,
        out_shape=out_shape,
        compiler_params=pltpu.CompilerParams(
            # batch blocks are independent; shards across TCs on multi-TC chips
            dimension_semantics=("parallel",)),
    )(*in_arrays)

    pred_masks = mask_pred.reshape(B, nk, H, W)      # no transpose needed
    if S == 0:
        return {"pred_logits": None, "pred_masks": pred_masks}
    return {"pred_logits": cls_score, "pred_masks": pred_masks}


# ---------------------------------------------------------------------------
# deterministic parameter construction (synthetic, no checkpoint loading)
# ---------------------------------------------------------------------------
def init_params(key, *, in_channels, kernel_feature_channels, mask_feature_channels,
                num_kernels, num_classes, num_kernel_update_heads, ffn_dim):
    kfc = kernel_feature_channels
    keys = iter(jax.random.split(key, 256))

    def randn(shape, scale=0.05):
        return scale * jax.random.normal(next(keys), shape, dtype=jnp.float32)

    ones1 = lambda c: jnp.ones((c,), jnp.float32)
    zeros1 = lambda c: jnp.zeros((c,), jnp.float32)
    orow = lambda c: jnp.ones((1, c), jnp.float32)
    zrow = lambda c: jnp.zeros((1, c), jnp.float32)

    params = dict(
        g1=ones1(in_channels), b1=zeros1(in_channels),
        W1=randn((kfc, in_channels)),           # conv1x1 weight (out, in), bias=False
        g2=ones1(kfc), b2=zeros1(kfc),
        W2=randn((kfc, kfc)), bias2=zeros1(kfc),
        g3=ones1(kfc), b3=zeros1(kfc),
        Winit=randn((num_kernels, kfc)),        # init_kernels weight (K, kfc), no bias
        heads=[],
    )
    for _ in range(num_kernel_update_heads):
        params["heads"].append(dict(
            Wu=randn((kfc, kfc)), bu=zrow(kfc),
            ln1g=orow(kfc), ln1b=zrow(kfc),
            Wq=randn((kfc, kfc)), bq=zrow(kfc),
            Wk=randn((kfc, kfc)), bk=zrow(kfc),
            Wv=randn((kfc, kfc)), bv=zrow(kfc),
            Wo=randn((kfc, kfc)), bo=zrow(kfc),
            ln2g=orow(kfc), ln2b=zrow(kfc),
            Wf1=randn((kfc, ffn_dim)), bf1=zrow(ffn_dim),
            Wf2=randn((ffn_dim, kfc)), bf2=zrow(kfc),
            ln3g=orow(kfc), ln3b=zrow(kfc),
            Wc=randn((kfc, num_classes)), bc=zrow(num_classes),
            Wm=randn((kfc, mask_feature_channels)), bm=zrow(mask_feature_channels),
        ))
    return params


# ---------------------------------------------------------------------------
# pure-JAX reference.  matmul_cast=jnp.bfloat16 mirrors the kernel's bf16-input
# HW matmuls (tight structural check); matmul_cast=None is full-f32 math
# (loose parity check; budget = bf16 rounding of the HW-proportional matmuls).
# ---------------------------------------------------------------------------
def _reference_forward(fm_nchw, params, *, num_kernel_update_heads,
                       normalize_sigmoid_masks, matmul_cast=None):
    B, cin, H, W = fm_nchw.shape
    x = fm_nchw.reshape(B, cin, H * W).astype(jnp.float32)
    cast = (lambda a: a.astype(matmul_cast)) if matmul_cast is not None else (lambda a: a)

    def gn(x, g, b):
        mean = jnp.mean(x, axis=-1, keepdims=True)
        var = jnp.mean(jnp.square(x - mean), axis=-1, keepdims=True)
        return (x - mean) / jnp.sqrt(var + EPS_GN) * g[None, :, None] + b[None, :, None]

    def ln(x, g, b):
        mean = jnp.mean(x, axis=-1, keepdims=True)
        var = jnp.mean(jnp.square(x - mean), axis=-1, keepdims=True)
        return (x - mean) / jnp.sqrt(var + EPS_LN) * g + b

    def assemble(mp):
        sm = jax.nn.sigmoid(mp)
        if normalize_sigmoid_masks:
            return sm / (EPS_MASK + jnp.sum(sm, axis=-1, keepdims=True))
        return (sm > 0.5).astype(jnp.float32)

    x = jax.nn.relu(gn(x, params["g1"], params["b1"]))
    x = jnp.einsum("oc,bcs->bos", cast(params["W1"]), cast(x),
                   preferred_element_type=jnp.float32)
    x = jax.nn.relu(gn(x, params["g2"], params["b2"]))
    x = jnp.einsum("oc,bcs->bos", cast(params["W2"]), cast(x),
                   preferred_element_type=jnp.float32) + params["bias2"][None, :, None]
    fm_t = gn(x, params["g3"], params["b3"])

    mp = jnp.einsum("kc,bcs->bks", cast(params["Winit"]), cast(fm_t),
                    preferred_element_type=jnp.float32)
    ker = params["Winit"][None] + jnp.einsum("bks,bcs->bkc", cast(assemble(mp)),
                                             cast(fm_t),
                                             preferred_element_type=jnp.float32)

    cls = None
    for s in range(num_kernel_update_heads):
        h = params["heads"][s]
        x_feat = jnp.einsum("bks,bcs->bkc", cast(assemble(mp)), cast(fm_t),
                            preferred_element_type=jnp.float32)
        obj = ln(ker + x_feat @ h["Wu"] + h["bu"], h["ln1g"], h["ln1b"])
        q = obj @ h["Wq"] + h["bq"]
        k = obj @ h["Wk"] + h["bk"]
        v = obj @ h["Wv"] + h["bv"]
        att = jax.nn.softmax(
            jnp.einsum("bqc,bkc->bqk", q, k) / jnp.sqrt(1.0 * q.shape[-1]), axis=-1)
        obj = ln(obj + jnp.einsum("bqk,bkc->bqc", att, v) @ h["Wo"] + h["bo"],
                 h["ln2g"], h["ln2b"])
        hh = jax.nn.relu(obj @ h["Wf1"] + h["bf1"])
        obj = ln(obj + hh @ h["Wf2"] + h["bf2"], h["ln3g"], h["ln3b"])
        cls = obj @ h["Wc"] + h["bc"]
        mfeat = obj @ h["Wm"] + h["bm"]
        mp = jnp.einsum("bkc,bcs->bks", cast(mfeat), cast(fm_t),
                        preferred_element_type=jnp.float32)
        ker = obj

    return cls, mp.reshape(B, -1, H, W)


if __name__ == "__main__":
    B, Cin, H, W = 2, 32, 16, 16     # HW = 256 -> lane-dense mask/feature tiles
    kfc = 32
    mfc = 32                         # must equal kfc for the dynamic mask conv
    num_kernels = 8
    num_classes = 16
    num_stages = 2
    ffn_dim = 64

    root = jax.random.PRNGKey(0)
    k_param, k_x = jax.random.split(root)
    params = init_params(
        k_param,
        in_channels=Cin,
        kernel_feature_channels=kfc,
        mask_feature_channels=mfc,
        num_kernels=num_kernels,
        num_classes=num_classes,
        num_kernel_update_heads=num_stages,
        ffn_dim=ffn_dim,
    )
    feature_map = jax.random.normal(k_x, (B, Cin, H, W), dtype=jnp.float32)

    # batch_block=B  : whole batch in one grid step (best on single-TC v5e/v6e)
    # batch_block=1  : one sample per "parallel" grid step (keeps both v7x TCs busy)
    out = rtknet_head_forward(
        feature_map, params, num_kernel_update_heads=num_stages,
        normalize_sigmoid_masks=True, batch_block=B)
    out_p = rtknet_head_forward(
        feature_map, params, num_kernel_update_heads=num_stages,
        normalize_sigmoid_masks=True, batch_block=1)
    out, out_p = jax.block_until_ready((out, out_p))

    assert out["pred_logits"].shape == (B, num_kernels, num_classes)
    assert out["pred_masks"].shape == (B, num_kernels, H, W)
    assert bool(jnp.all(jnp.isfinite(out["pred_logits"])))
    assert bool(jnp.all(jnp.isfinite(out["pred_masks"])))

    # the two batch-blocking variants run identical math
    assert float(jnp.max(jnp.abs(out["pred_logits"] - out_p["pred_logits"]))) < 1e-4
    assert float(jnp.max(jnp.abs(out["pred_masks"] - out_p["pred_masks"]))) < 1e-4

    # tight structural check: reference with the same bf16-input HW matmuls
    ref_cls_bf, ref_msk_bf = _reference_forward(
        feature_map, params, num_kernel_update_heads=num_stages,
        normalize_sigmoid_masks=True, matmul_cast=jnp.bfloat16)
    assert float(jnp.max(jnp.abs(out["pred_logits"] - ref_cls_bf))) < 1e-2
    assert float(jnp.max(jnp.abs(out["pred_masks"] - ref_msk_bf))) < 2e-2

    # loose parity check vs full-f32 math; the allowance is the bf16 rounding of
    # the HW-proportional matmuls only (all normalizations/residuals stay f32).
    ref_cls, ref_msk = _reference_forward(
        feature_map, params, num_kernel_update_heads=num_stages,
        normalize_sigmoid_masks=True, matmul_cast=None)
    assert float(jnp.max(jnp.abs(out["pred_logits"] - ref_cls))) < 1e-1
    assert float(jnp.max(jnp.abs(out["pred_masks"] - ref_msk))) < 2e-1

    print("KERNEL_OK")
</pallas_src>

<mosaic_0001>
module attributes {stable_mosaic.version = 11 : i64} {
  func.func @_rtknet_fused_kernel(%arg0: i32, %arg1: memref<2x32x256xf32, #tpu.memory_space<vmem>>, %arg2: memref<32x2xf32, #tpu.memory_space<vmem>>, %arg3: memref<32x5xf32, #tpu.memory_space<vmem>>, %arg4: memref<64x32xbf16, #tpu.memory_space<vmem>>, %arg5: memref<8x32xf32, #tpu.memory_space<vmem>>, %arg6: memref<2x128x64xf32, #tpu.memory_space<vmem>>, %arg7: memref<2x15x64xf32, #tpu.memory_space<vmem>>, %arg8: memref<2x32x384xf32, #tpu.memory_space<vmem>>, %arg9: memref<2x32x160xf32, #tpu.memory_space<vmem>>, %arg10: memref<2x8x16xf32, #tpu.memory_space<vmem>>, %arg11: memref<2x8x256xf32, #tpu.memory_space<vmem>>) attributes {dimension_semantics = [#tpu.dimension_semantics<parallel>], iteration_bounds = array<i64: 1>, scalar_prefetch = 0 : i64, scratch_operands = 0 : i64, tpu.core_type = #tpu.core_type<tc>, window_params = [{transform_indices = @transform_0, window_bounds = array<i64: 2, 32, 256>}, {pipeline_mode = #tpu.pipeline_mode<synchronous>, transform_indices = @transform_1, window_bounds = array<i64: 32, 2>}, {pipeline_mode = #tpu.pipeline_mode<synchronous>, transform_indices = @transform_2, window_bounds = array<i64: 32, 5>}, {pipeline_mode = #tpu.pipeline_mode<synchronous>, transform_indices = @transform_3, window_bounds = array<i64: 64, 32>}, {pipeline_mode = #tpu.pipeline_mode<synchronous>, transform_indices = @transform_4, window_bounds = array<i64: 8, 32>}, {pipeline_mode = #tpu.pipeline_mode<synchronous>, transform_indices = @transform_5, window_bounds = array<i64: 2, 128, 64>}, {pipeline_mode = #tpu.pipeline_mode<synchronous>, transform_indices = @transform_6, window_bounds = array<i64: 2, 15, 64>}, {pipeline_mode = #tpu.pipeline_mode<synchronous>, transform_indices = @transform_7, window_bounds = array<i64: 2, 32, 384>}, {pipeline_mode = #tpu.pipeline_mode<synchronous>, transform_indices = @transform_8, window_bounds = array<i64: 2, 32, 160>}, {transform_indices = @transform_9, window_bounds = array<i64: 2, 8, 16>}, {transform_indices = @transform_10, window_bounds = array<i64: 2, 8, 256>}]} {
    %c0 = arith.constant 0 : index
    %c0_0 = arith.constant 0 : index
    %0 = vector.load %arg5[%c0, %c0_0] : memref<8x32xf32, #tpu.memory_space<vmem>>, vector<8x32xf32>
    %1 = arith.truncf %0 : vector<8x32xf32> to vector<8x32xbf16>
    %c0_1 = arith.constant 0 : index
    %c0_2 = arith.constant 0 : index
    %c0_3 = arith.constant 0 : index
    %2 = vector.load %arg1[%c0_1, %c0_2, %c0_3] : memref<2x32x256xf32, #tpu.memory_space<vmem>>, vector<1x32x256xf32>
    %3 = vector.shape_cast %2 : vector<1x32x256xf32> to vector<32x256xf32>
    %c0_4 = arith.constant 0 : index
    %c0_5 = arith.constant 0 : index
    %4 = vector.load %arg2[%c0_4, %c0_5] : memref<32x2xf32, #tpu.memory_space<vmem>>, vector<32x1xf32>
    %c0_6 = arith.constant 0 : index
    %c1 = arith.constant 1 : index
    %5 = vector.load %arg2[%c0_6, %c1] : memref<32x2xf32, #tpu.memory_space<vmem>>, vector<32x1xf32>
    %cst = arith.constant dense<0.000000e+00> : vector<32xf32>
    %6 = vector.multi_reduction <add>, %3, %cst [1] : vector<32x256xf32> to vector<32xf32>
    %7 = vector.shape_cast %6 : vector<32xf32> to vector<32x1xf32>
    %cst_7 = arith.constant 2.560000e+02 : f32
    %8 = vector.broadcast %cst_7 : f32 to vector<32x1xf32>
    %9 = arith.divf %7, %8 : vector<32x1xf32>
    %10 = vector.broadcast %9 : vector<32x1xf32> to vector<32x256xf32>
    %11 = arith.subf %3, %10 : vector<32x256xf32>
    %12 = arith.mulf %11, %11 : vector<32x256xf32>
    %cst_8 = arith.constant dense<0.000000e+00> : vector<32xf32>
    %13 = vector.multi_reduction <add>, %12, %cst_8 [1] : vector<32x256xf32> to vector<32xf32>
    %14 = vector.shape_cast %13 : vector<32xf32> to vector<32x1xf32>
    %cst_9 = arith.constant 2.560000e+02 : f32
    %15 = vector.broadcast %cst_9 : f32 to vector<32x1xf32>
    %16 = arith.divf %14, %15 : vector<32x1xf32>
    %17 = vector.broadcast %9 : vector<32x1xf32> to vector<32x256xf32>
    %18 = arith.subf %3, %17 : vector<32x256xf32>
    %cst_10 = arith.constant 9.99999974E-6 : f32
    %19 = vector.broadcast %cst_10 : f32 to vector<32x1xf32>
    %20 = arith.addf %16, %19 : vector<32x1xf32>
    %21 = math.rsqrt %20 : vector<32x1xf32>
    %22 = vector.broadcast %21 : vector<32x1xf32> to vector<32x256xf32>
    %23 = arith.mulf %18, %22 : vector<32x256xf32>
    %24 = vector.broadcast %4 : vector<32x1xf32> to vector<32x256xf32>
    %25 = arith.mulf %23, %24 : vector<32x256xf32>
    %26 = vector.broadcast %5 : vector<32x1xf32> to vector<32x256xf32>
    %27 = arith.addf %25, %26 : vector<32x256xf32>
    %cst_11 = arith.constant 0.000000e+00 : f32
    %28 = vector.broadcast %cst_11 : f32 to vector<32x256xf32>
    %29 = arith.maximumf %27, %28 : vector<32x256xf32>
    %c0_12 = arith.constant 0 : index
    %c0_13 = arith.constant 0 : index
    %30 = vector.load %arg4[%c0_12, %c0_13] : memref<64x32xbf16, #tpu.memory_space<vmem>>, vector<32x32xbf16>
    %31 = arith.truncf %29 : vector<32x256xf32> to vector<32x256xbf16>
    %cst_14 = arith.constant dense<0.000000e+00> : vector<32x256xf32>
    %32 = tpu.matmul %30, %31, %cst_14 {dimension_numbers = #tpu.dot_dimension_numbers<[1], [0], [0], [1], [0, 0, 1, 1], [], []>} : vector<32x32xbf16>, vector<32x256xbf16>, vector<32x256xf32> -> vector<32x256xf32>
    %c0_15 = arith.constant 0 : index
    %c0_16 = arith.constant 0 : index
    %33 = vector.load %arg3[%c0_15, %c0_16] : memref<32x5xf32, #tpu.memory_space<vmem>>, vector<32x1xf32>
    %c0_17 = arith.constant 0 : index
    %c1_18 = arith.constant 1 : index
    %34 = vector.load %arg3[%c0_17, %c1_18] : memref<32x5xf32, #tpu.memory_space<vmem>>, vector<32x1xf32>
    %cst_19 = arith.constant dense<0.000000e+00> : vector<32xf32>
    %35 = vector.multi_reduction <add>, %32, %cst_19 [1] : vector<32x256xf32> to vector<32xf32>
    %36 = vector.shape_cast %35 : vector<32xf32> to vector<32x1xf32>
    %cst_20 = arith.constant 2.560000e+02 : f32
    %37 = vector.broadcast %cst_20 : f32 to vector<32x1xf32>
    %38 = arith.divf %36, %37 : vector<32x1xf32>
    %39 = vector.broadcast %38 : vector<32x1xf32> to vector<32x256xf32>
    %40 = arith.subf %32, %39 : vector<32x256xf32>
    %41 = arith.mulf %40, %40 : vector<32x256xf32>
    %cst_21 = arith.constant dense<0.000000e+00> : vector<32xf32>
    %42 = vector.multi_reduction <add>, %41, %cst_21 [1] : vector<32x256xf32> to vector<32xf32>
    %43 = vector.shape_cast %42 : vector<32xf32> to vector<32x1xf32>
    %cst_22 = arith.constant 2.560000e+02 : f32
    %44 = vector.broadcast %cst_22 : f32 to vector<32x1xf32>
    %45 = arith.divf %43, %44 : vector<32x1xf32>
    %46 = vector.broadcast %38 : vector<32x1xf32> to vector<32x256xf32>
    %47 = arith.subf %32, %46 : vector<32x256xf32>
    %cst_23 = arith.constant 9.99999974E-6 : f32
    %48 = vector.broadcast %cst_23 : f32 to vector<32x1xf32>
    %49 = arith.addf %45, %48 : vector<32x1xf32>
    %50 = math.rsqrt %49 : vector<32x1xf32>
    %51 = vector.broadcast %50 : vector<32x1xf32> to vector<32x256xf32>
    %52 = arith.mulf %47, %51 : vector<32x256xf32>
    %53 = vector.broadcast %33 : vector<32x1xf32> to vector<32x256xf32>
    %54 = arith.mulf %52, %53 : vector<32x256xf32>
    %55 = vector.broadcast %34 : vector<32x1xf32> to vector<32x256xf32>
    %56 = arith.addf %54, %55 : vector<32x256xf32>
    %cst_24 = arith.constant 0.000000e+00 : f32
    %57 = vector.broadcast %cst_24 : f32 to vector<32x256xf32>
    %58 = arith.maximumf %56, %57 : vector<32x256xf32>
    %c32 = arith.constant 32 : index
    %c0_25 = arith.constant 0 : index
    %59 = vector.load %arg4[%c32, %c0_25] : memref<64x32xbf16, #tpu.memory_space<vmem>>, vector<32x32xbf16>
    %60 = arith.truncf %58 : vector<32x256xf32> to vector<32x256xbf16>
    %cst_26 = arith.constant dense<0.000000e+00> : vector<32x256xf32>
    %61 = tpu.matmul %59, %60, %cst_26 {dimension_numbers = #tpu.dot_dimension_numbers<[1], [0], [0], [1], [0, 0, 1, 1], [], []>} : vector<32x32xbf16>, vector<32x256xbf16>, vector<32x256xf32> -> vector<32x256xf32>
    %c0_27 = arith.constant 0 : index
    %c2 = arith.constant 2 : index
    %62 = vector.load %arg3[%c0_27, %c2] : memref<32x5xf32, #tpu.memory_space<vmem>>, vector<32x1xf32>
    %63 = vector.broadcast %62 : vector<32x1xf32> to vector<32x256xf32>
    %64 = arith.addf %61, %63 : vector<32x256xf32>
    %c0_28 = arith.constant 0 : index
    %c3 = arith.constant 3 : index
    %65 = vector.load %arg3[%c0_28, %c3] : memref<32x5xf32, #tpu.memory_space<vmem>>, vector<32x1xf32>
    %c0_29 = arith.constant 0 : index
    %c4 = arith.constant 4 : index
    %66 = vector.load %arg3[%c0_29, %c4] : memref<32x5xf32, #tpu.memory_space<vmem>>, vector<32x1xf32>
    %cst_30 = arith.constant dense<0.000000e+00> : vector<32xf32>
    %67 = vector.multi_reduction <add>, %64, %cst_30 [1] : vector<32x256xf32> to vector<32xf32>
    %68 = vector.shape_cast %67 : vector<32xf32> to vector<32x1xf32>
    %cst_31 = arith.constant 2.560000e+02 : f32
    %69 = vector.broadcast %cst_31 : f32 to vector<32x1xf32>
    %70 = arith.divf %68, %69 : vector<32x1xf32>
    %71 = vector.broadcast %70 : vector<32x1xf32> to vector<32x256xf32>
    %72 = arith.subf %64, %71 : vector<32x256xf32>
    %73 = arith.mulf %72, %72 : vector<32x256xf32>
    %cst_32 = arith.constant dense<0.000000e+00> : vector<32xf32>
    %74 = vector.multi_reduction <add>, %73, %cst_32 [1] : vector<32x256xf32> to vector<32xf32>
    %75 = vector.shape_cast %74 : vector<32xf32> to vector<32x1xf32>
    %cst_33 = arith.constant 2.560000e+02 : f32
    %76 = vector.broadcast %cst_33 : f32 to vector<32x1xf32>
    %77 = arith.divf %75, %76 : vector<32x1xf32>
    %78 = vector.broadcast %70 : vector<32x1xf32> to vector<32x256xf32>
    %79 = arith.subf %64, %78 : vector<32x256xf32>
    %cst_34 = arith.constant 9.99999974E-6 : f32
    %80 = vector.broadcast %cst_34 : f32 to vector<32x1xf32>
    %81 = arith.addf %77, %80 : vector<32x1xf32>
    %82 = math.rsqrt %81 : vector<32x1xf32>
    %83 = vector.broadcast %82 : vector<32x1xf32> to vector<32x256xf32>
    %84 = arith.mulf %79, %83 : vector<32x256xf32>
    %85 = vector.broadcast %65 : vector<32x1xf32> to vector<32x256xf32>
    %86 = arith.mulf %84, %85 : vector<32x256xf32>
    %87 = vector.broadcast %66 : vector<32x1xf32> to vector<32x256xf32>
    %88 = arith.addf %86, %87 : vector<32x256xf32>
    %89 = arith.truncf %88 : vector<32x256xf32> to vector<32x256xbf16>
    %cst_35 = arith.constant dense<0.000000e+00> : vector<8x256xf32>
    %90 = tpu.matmul %1, %89, %cst_35 {dimension_numbers = #tpu.dot_dimension_numbers<[1], [0], [0], [1], [0, 0, 1, 1], [], []>} : vector<8x32xbf16>, vector<32x256xbf16>, vector<8x256xf32> -> vector<8x256xf32>
    %91 = arith.negf %90 : vector<8x256xf32>
    %92 = math.exp %91 : vector<8x256xf32>
    %cst_36 = arith.constant 1.000000e+00 : f32
    %93 = vector.broadcast %cst_36 : f32 to vector<8x256xf32>
    %94 = arith.addf %93, %92 : vector<8x256xf32>
    %95 = arith.divf %93, %94 : vector<8x256xf32>
    %cst_37 = arith.constant dense<0.000000e+00> : vector<8xf32>
    %96 = vector.multi_reduction <add>, %95, %cst_37 [1] : vector<8x256xf32> to vector<8xf32>
    %97 = vector.shape_cast %96 : vector<8xf32> to vector<8x1xf32>
    %cst_38 = arith.constant 9.99999997E-7 : f32
    %98 = vector.broadcast %cst_38 : f32 to vector<8x1xf32>
    %99 = arith.addf %98, %97 : vector<8x1xf32>
    %cst_39 = arith.constant 1.000000e+00 : f32
    %100 = vector.broadcast %cst_39 : f32 to vector<8x1xf32>
    %101 = arith.divf %100, %99 : vector<8x1xf32>
    %102 = vector.broadcast %101 : vector<8x1xf32> to vector<8x256xf32>
    %103 = arith.mulf %95, %102 : vector<8x256xf32>
    %104 = arith.truncf %103 : vector<8x256xf32> to vector<8x256xbf16>
    %cst_40 = arith.constant dense<0.000000e+00> : vector<8x32xf32>
    %105 = tpu.matmul %104, %89, %cst_40 {dimension_numbers = #tpu.dot_dimension_numbers<[1], [1], [0], [0], [0, 0, 1, 0], [], []>} : vector<8x256xbf16>, vector<32x256xbf16>, vector<8x32xf32> -> vector<8x32xf32>
    %106 = arith.addf %0, %105 : vector<8x32xf32>
    %c0_41 = arith.constant 0 : index
    %c0_42 = arith.constant 0 : index
    %c0_43 = arith.constant 0 : index
    %107 = vector.load %arg6[%c0_41, %c0_42, %c0_43] : memref<2x128x64xf32, #tpu.memory_space<vmem>>, vector<1x32x32xf32>
    %108 = vector.shape_cast %107 : vector<1x32x32xf32> to vector<32x32xf32>
    %cst_44 = arith.constant dense<0.000000e+00> : vector<8x32xf32>
    %109 = tpu.matmul %105, %108, %cst_44 {dimension_numbers = #tpu.dot_dimension_numbers<[1], [0], [0], [1], [0, 0, 1, 1], [], []>} : vector<8x32xf32>, vector<32x32xf32>, vector<8x32xf32> -> vector<8x32xf32>
    %110 = arith.addf %106, %109 : vector<8x32xf32>
    %c0_45 = arith.constant 0 : index
    %c0_46 = arith.constant 0 : index
    %c0_47 = arith.constant 0 : index
    %111 = vector.load %arg7[%c0_45, %c0_46, %c0_47] : memref<2x15x64xf32, #tpu.memory_space<vmem>>, vector<1x1x32xf32>
    %112 = vector.shape_cast %111 : vector<1x1x32xf32> to vector<1x32xf32>
    %113 = vector.broadcast %112 : vector<1x32xf32> to vector<8x32xf32>
    %114 = arith.addf %110, %113 : vector<8x32xf32>
    %c0_48 = arith.constant 0 : index
    %c1_49 = arith.constant 1 : index
    %c0_50 = arith.constant 0 : index
    %115 = vector.load %arg7[%c0_48, %c1_49, %c0_50] : memref<2x15x64xf32, #tpu.memory_space<vmem>>, vector<1x1x32xf32>
    %116 = vector.shape_cast %115 : vector<1x1x32xf32> to vector<1x32xf32>
    %c0_51 = arith.constant 0 : index
    %c2_52 = arith.constant 2 : index
    %c0_53 = arith.constant 0 : index
    %117 = vector.load %arg7[%c0_51, %c2_52, %c0_53] : memref<2x15x64xf32, #tpu.memory_space<vmem>>, vector<1x1x32xf32>
    %118 = vector.shape_cast %117 : vector<1x1x32xf32> to vector<1x32xf32>
    %cst_54 = arith.constant dense<0.000000e+00> : vector<8xf32>
    %119 = vector.multi_reduction <add>, %114, %cst_54 [1] : vector<8x32xf32> to vector<8xf32>
    %120 = vector.shape_cast %119 : vector<8xf32> to vector<8x1xf32>
    %cst_55 = arith.constant 3.200000e+01 : f32
    %121 = vector.broadcast %cst_55 : f32 to vector<8x1xf32>
    %122 = arith.divf %120, %121 : vector<8x1xf32>
    %123 = vector.broadcast %122 : vector<8x1xf32> to vector<8x32xf32>
    %124 = arith.subf %114, %123 : vector<8x32xf32>
    %125 = arith.mulf %124, %124 : vector<8x32xf32>
    %cst_56 = arith.constant dense<0.000000e+00> : vector<8xf32>
    %126 = vector.multi_reduction <add>, %125, %cst_56 [1] : vector<8x32xf32> to vector<8xf32>
    %127 = vector.shape_cast %126 : vector<8xf32> to vector<8x1xf32>
    %cst_57 = arith.constant 3.200000e+01 : f32
    %128 = vector.broadcast %cst_57 : f32 to vector<8x1xf32>
    %129 = arith.divf %127, %128 : vector<8x1xf32>
    %130 = vector.broadcast %122 : vector<8x1xf32> to vector<8x32xf32>
    %131 = arith.subf %114, %130 : vector<8x32xf32>
    %cst_58 = arith.constant 9.99999974E-6 : f32
    %132 = vector.broadcast %cst_58 : f32 to vector<8x1xf32>
    %133 = arith.addf %129, %132 : vector<8x1xf32>
    %134 = math.rsqrt %133 : vector<8x1xf32>
    %135 = vector.broadcast %134 : vector<8x1xf32> to vector<8x32xf32>
    %136 = arith.mulf %131, %135 : vector<8x32xf32>
    %137 = vector.broadcast %116 : vector<1x32xf32> to vector<8x32xf32>
    %138 = arith.mulf %136, %137 : vector<8x32xf32>
    %139 = vector.broadcast %118 : vector<1x32xf32> to vector<8x32xf32>
    %140 = arith.addf %138, %139 : vector<8x32xf32>
    %c0_59 = arith.constant 0 : index
    %c0_60 = arith.constant 0 : index
    %c0_61 = arith.constant 0 : index
    %141 = vector.load %arg8[%c0_59, %c0_60, %c0_61] : memref<2x32x384xf32, #tpu.memory_space<vmem>>, vector<1x32x384xf32>
    %142 = vector.shape_cast %141 : vector<1x32x384xf32> to vector<32x384xf32>
    %cst_62 = arith.constant dense<0.000000e+00> : vector<8x384xf32>
    %143 = tpu.matmul %140, %142, %cst_62 {dimension_numbers = #tpu.dot_dimension_numbers<[1], [0], [0], [1], [0, 0, 1, 1], [], []>} : vector<8x32xf32>, vector<32x384xf32>, vector<8x384xf32> -> vector<8x384xf32>
    %144 = vector.extract_strided_slice %143 {offsets = [0, 0], sizes = [8, 32], strides = [1, 1]} : vector<8x384xf32> to vector<8x32xf32>
    %c0_63 = arith.constant 0 : index
    %c3_64 = arith.constant 3 : index
    %c0_65 = arith.constant 0 : index
    %145 = vector.load %arg7[%c0_63, %c3_64, %c0_65] : memref<2x15x64xf32, #tpu.memory_space<vmem>>, vector<1x1x32xf32>
    %146 = vector.shape_cast %145 : vector<1x1x32xf32> to vector<1x32xf32>
    %147 = vector.broadcast %146 : vector<1x32xf32> to vector<8x32xf32>
    %148 = arith.addf %144, %147 : vector<8x32xf32>
    %149 = vector.extract_strided_slice %143 {offsets = [0, 128], sizes = [8, 32], strides = [1, 1]} : vector<8x384xf32> to vector<8x32xf32>
    %c0_66 = arith.constant 0 : index
    %c4_67 = arith.constant 4 : index
    %c0_68 = arith.constant 0 : index
    %150 = vector.load %arg7[%c0_66, %c4_67, %c0_68] : memref<2x15x64xf32, #tpu.memory_space<vmem>>, vector<1x1x32xf32>
    %151 = vector.shape_cast %150 : vector<1x1x32xf32> to vector<1x32xf32>
    %152 = vector.broadcast %151 : vector<1x32xf32> to vector<8x32xf32>
    %153 = arith.addf %149, %152 : vector<8x32xf32>
    %154 = vector.extract_strided_slice %143 {offsets = [0, 256], sizes = [8, 32], strides = [1, 1]} : vector<8x384xf32> to vector<8x32xf32>
    %c0_69 = arith.constant 0 : index
    %c5 = arith.constant 5 : index
    %c0_70 = arith.constant 0 : index
    %155 = vector.load %arg7[%c0_69, %c5, %c0_70] : memref<2x15x64xf32, #tpu.memory_space<vmem>>, vector<1x1x32xf32>
    %156 = vector.shape_cast %155 : vector<1x1x32xf32> to vector<1x32xf32>
    %157 = vector.broadcast %156 : vector<1x32xf32> to vector<8x32xf32>
    %158 = arith.addf %154, %157 : vector<8x32xf32>
    %cst_71 = arith.constant dense<0.000000e+00> : vector<8x8xf32>
    %159 = tpu.matmul %148, %153, %cst_71 {dimension_numbers = #tpu.dot_dimension_numbers<[1], [1], [0], [0], [0, 0, 1, 0], [], []>} : vector<8x32xf32>, vector<8x32xf32>, vector<8x8xf32> -> vector<8x8xf32>
    %cst_72 = arith.constant 0.176776692 : f32
    %160 = vector.broadcast %cst_72 : f32 to vector<8x8xf32>
    %161 = arith.mulf %159, %160 : vector<8x8xf32>
    %cst_73 = arith.constant dense<0xFF800000> : vector<8xf32>
    %162 = vector.multi_reduction <maximumf>, %161, %cst_73 [1] : vector<8x8xf32> to vector<8xf32>
    %163 = vector.shape_cast %162 : vector<8xf32> to vector<8x1xf32>
    %164 = vector.broadcast %163 : vector<8x1xf32> to vector<8x8xf32>
    %165 = arith.subf %161, %164 : vector<8x8xf32>
    %166 = math.exp %165 : vector<8x8xf32>
    %cst_74 = arith.constant dense<0.000000e+00> : vector<8xf32>
    %167 = vector.multi_reduction <add>, %166, %cst_74 [1] : vector<8x8xf32> to vector<8xf32>
    %168 = vector.shape_cast %167 : vector<8xf32> to vector<8x1xf32>
    %169 = vector.broadcast %168 : vector<8x1xf32> to vector<8x8xf32>
    %170 = arith.divf %166, %169 : vector<8x8xf32>
    %cst_75 = arith.constant dense<0.000000e+00> : vector<8x32xf32>
    %171 = tpu.matmul %170, %158, %cst_75 {dimension_numbers = #tpu.dot_dimension_numbers<[1], [0], [0], [1], [0, 0, 1, 1], [], []>} : vector<8x8xf32>, vector<8x32xf32>, vector<8x32xf32> -> vector<8x32xf32>
    %c0_76 = arith.constant 0 : index
    %c32_77 = arith.constant 32 : index
    %c0_78 = arith.constant 0 : index
    %172 = vector.load %arg6[%c0_76, %c32_77, %c0_78] : memref<2x128x64xf32, #tpu.memory_space<vmem>>, vector<1x32x32xf32>
    %173 = vector.shape_cast %172 : vector<1x32x32xf32> to vector<32x32xf32>
    %cst_79 = arith.constant dense<0.000000e+00> : vector<8x32xf32>
    %174 = tpu.matmul %171, %173, %cst_79 {dimension_numbers = #tpu.dot_dimension_numbers<[1], [0], [0], [1], [0, 0, 1, 1], [], []>} : vector<8x32xf32>, vector<32x32xf32>, vector<8x32xf32> -> vector<8x32xf32>
    %175 = arith.addf %140, %174 : vector<8x32xf32>
    %c0_80 = arith.constant 0 : index
    %c6 = arith.constant 6 : index
    %c0_81 = arith.constant 0 : index
    %176 = vector.load %arg7[%c0_80, %c6, %c0_81] : memref<2x15x64xf32, #tpu.memory_space<vmem>>, vector<1x1x32xf32>
    %177 = vector.shape_cast %176 : vector<1x1x32xf32> to vector<1x32xf32>
    %178 = vector.broadcast %177 : vector<1x32xf32> to vector<8x32xf32>
    %179 = arith.addf %175, %178 : vector<8x32xf32>
    %c0_82 = arith.constant 0 : index
    %c7 = arith.constant 7 : index
    %c0_83 = arith.constant 0 : index
    %180 = vector.load %arg7[%c0_82, %c7, %c0_83] : memref<2x15x64xf32, #tpu.memory_space<vmem>>, vector<1x1x32xf32>
    %181 = vector.shape_cast %180 : vector<1x1x32xf32> to vector<1x32xf32>
    %c0_84 = arith.constant 0 : index
    %c8 = arith.constant 8 : index
    %c0_85 = arith.constant 0 : index
    %182 = vector.load %arg7[%c0_84, %c8, %c0_85] : memref<2x15x64xf32, #tpu.memory_space<vmem>>, vector<1x1x32xf32>
    %183 = vector.shape_cast %182 : vector<1x1x32xf32> to vector<1x32xf32>
    %cst_86 = arith.constant dense<0.000000e+00> : vector<8xf32>
    %184 = vector.multi_reduction <add>, %179, %cst_86 [1] : vector<8x32xf32> to vector<8xf32>
    %185 = vector.shape_cast %184 : vector<8xf32> to vector<8x1xf32>
    %cst_87 = arith.constant 3.200000e+01 : f32
    %186 = vector.broadcast %cst_87 : f32 to vector<8x1xf32>
    %187 = arith.divf %185, %186 : vector<8x1xf32>
    %188 = vector.broadcast %187 : vector<8x1xf32> to vector<8x32xf32>
    %189 = arith.subf %179, %188 : vector<8x32xf32>
    %190 = arith.mulf %189, %189 : vector<8x32xf32>
    %cst_88 = arith.constant dense<0.000000e+00> : vector<8xf32>
    %191 = vector.multi_reduction <add>, %190, %cst_88 [1] : vector<8x32xf32> to vector<8xf32>
    %192 = vector.shape_cast %191 : vector<8xf32> to vector<8x1xf32>
    %cst_89 = arith.constant 3.200000e+01 : f32
    %193 = vector.broadcast %cst_89 : f32 to vector<8x1xf32>
    %194 = arith.divf %192, %193 : vector<8x1xf32>
    %195 = vector.broadcast %187 : vector<8x1xf32> to vector<8x32xf32>
    %196 = arith.subf %179, %195 : vector<8x32xf32>
    %cst_90 = arith.constant 9.99999974E-6 : f32
    %197 = vector.broadcast %cst_90 : f32 to vector<8x1xf32>
    %198 = arith.addf %194, %197 : vector<8x1xf32>
    %199 = math.rsqrt %198 : vector<8x1xf32>
    %200 = vector.broadcast %199 : vector<8x1xf32> to vector<8x32xf32>
    %201 = arith.mulf %196, %200 : vector<8x32xf32>
    %202 = vector.broadcast %181 : vector<1x32xf32> to vector<8x32xf32>
    %203 = arith.mulf %201, %202 : vector<8x32xf32>
    %204 = vector.broadcast %183 : vector<1x32xf32> to vector<8x32xf32>
    %205 = arith.addf %203, %204 : vector<8x32xf32>
    %c0_91 = arith.constant 0 : index
    %c64 = arith.constant 64 : index
    %c0_92 = arith.constant 0 : index
    %206 = vector.load %arg6[%c0_91, %c64, %c0_92] : memref<2x128x64xf32, #tpu.memory_space<vmem>>, vector<1x32x64xf32>
    %207 = vector.shape_cast %206 : vector<1x32x64xf32> to vector<32x64xf32>
    %cst_93 = arith.constant dense<0.000000e+00> : vector<8x64xf32>
    %208 = tpu.matmul %205, %207, %cst_93 {dimension_numbers = #tpu.dot_dimension_numbers<[1], [0], [0], [1], [0, 0, 1, 1], [], []>} : vector<8x32xf32>, vector<32x64xf32>, vector<8x64xf32> -> vector<8x64xf32>
    %c0_94 = arith.constant 0 : index
    %c9 = arith.constant 9 : index
    %c0_95 = arith.constant 0 : index
    %209 = vector.load %arg7[%c0_94, %c9, %c0_95] : memref<2x15x64xf32, #tpu.memory_space<vmem>>, vector<1x1x64xf32>
    %210 = vector.shape_cast %209 : vector<1x1x64xf32> to vector<1x64xf32>
    %211 = vector.broadcast %210 : vector<1x64xf32> to vector<8x64xf32>
    %212 = arith.addf %208, %211 : vector<8x64xf32>
    %cst_96 = arith.constant 0.000000e+00 : f32
    %213 = vector.broadcast %cst_96 : f32 to vector<8x64xf32>
    %214 = arith.maximumf %212, %213 : vector<8x64xf32>
    %c0_97 = arith.constant 0 : index
    %c96 = arith.constant 96 : index
    %c0_98 = arith.constant 0 : index
    %215 = vector.load %arg6[%c0_97, %c96, %c0_98] : memref<2x128x64xf32, #tpu.memory_space<vmem>>, vector<1x32x64xf32>
    %216 = vector.shape_cast %215 : vector<1x32x64xf32> to vector<32x64xf32>
    %cst_99 = arith.constant dense<0.000000e+00> : vector<8x32xf32>
    %217 = tpu.matmul %214, %216, %cst_99 {dimension_numbers = #tpu.dot_dimension_numbers<[1], [1], [0], [0], [0, 0, 1, 0], [], []>} : vector<8x64xf32>, vector<32x64xf32>, vector<8x32xf32> -> vector<8x32xf32>
    %218 = arith.addf %205, %217 : vector<8x32xf32>
    %c0_100 = arith.constant 0 : index
    %c10 = arith.constant 10 : index
    %c0_101 = arith.constant 0 : index
    %219 = vector.load %arg7[%c0_100, %c10, %c0_101] : memref<2x15x64xf32, #tpu.memory_space<vmem>>, vector<1x1x32xf32>
    %220 = vector.shape_cast %219 : vector<1x1x32xf32> to vector<1x32xf32>
    %221 = vector.broadcast %220 : vector<1x32xf32> to vector<8x32xf32>
    %222 = arith.addf %218, %221 : vector<8x32xf32>
    %c0_102 = arith.constant 0 : index
    %c11 = arith.constant 11 : index
    %c0_103 = arith.constant 0 : index
    %223 = vector.load %arg7[%c0_102, %c11, %c0_103] : memref<2x15x64xf32, #tpu.memory_space<vmem>>, vector<1x1x32xf32>
    %224 = vector.shape_cast %223 : vector<1x1x32xf32> to vector<1x32xf32>
    %c0_104 = arith.constant 0 : index
    %c12 = arith.constant 12 : index
    %c0_105 = arith.constant 0 : index
    %225 = vector.load %arg7[%c0_104, %c12, %c0_105] : memref<2x15x64xf32, #tpu.memory_space<vmem>>, vector<1x1x32xf32>
    %226 = vector.shape_cast %225 : vector<1x1x32xf32> to vector<1x32xf32>
    %cst_106 = arith.constant dense<0.000000e+00> : vector<8xf32>
    %227 = vector.multi_reduction <add>, %222, %cst_106 [1] : vector<8x32xf32> to vector<8xf32>
    %228 = vector.shape_cast %227 : vector<8xf32> to vector<8x1xf32>
    %cst_107 = arith.constant 3.200000e+01 : f32
    %229 = vector.broadcast %cst_107 : f32 to vector<8x1xf32>
    %230 = arith.divf %228, %229 : vector<8x1xf32>
    %231 = vector.broadcast %230 : vector<8x1xf32> to vector<8x32xf32>
    %232 = arith.subf %222, %231 : vector<8x32xf32>
    %233 = arith.mulf %232, %232 : vector<8x32xf32>
    %cst_108 = arith.constant dense<0.000000e+00> : vector<8xf32>
    %234 = vector.multi_reduction <add>, %233, %cst_108 [1] : vector<8x32xf32> to vector<8xf32>
    %235 = vector.shape_cast %234 : vector<8xf32> to vector<8x1xf32>
    %cst_109 = arith.constant 3.200000e+01 : f32
    %236 = vector.broadcast %cst_109 : f32 to vector<8x1xf32>
    %237 = arith.divf %235, %236 : vector<8x1xf32>
    %238 = vector.broadcast %230 : vector<8x1xf32> to vector<8x32xf32>
    %239 = arith.subf %222, %238 : vector<8x32xf32>
    %cst_110 = arith.constant 9.99999974E-6 : f32
    %240 = vector.broadcast %cst_110 : f32 to vector<8x1xf32>
    %241 = arith.addf %237, %240 : vector<8x1xf32>
    %242 = math.rsqrt %241 : vector<8x1xf32>
    %243 = vector.broadcast %242 : vector<8x1xf32> to vector<8x32xf32>
    %244 = arith.mulf %239, %243 : vector<8x32xf32>
    %245 = vector.broadcast %224 : vector<1x32xf32> to vector<8x32xf32>
    %246 = arith.mulf %244, %245 : vector<8x32xf32>
    %247 = vector.broadcast %226 : vector<1x32xf32> to vector<8x32xf32>
    %248 = arith.addf %246, %247 : vector<8x32xf32>
    %c0_111 = arith.constant 0 : index
    %c0_112 = arith.constant 0 : index
    %c0_113 = arith.constant 0 : index
    %249 = vector.load %arg9[%c0_111, %c0_112, %c0_113] : memref<2x32x160xf32, #tpu.memory_space<vmem>>, vector<1x32x160xf32>
    %250 = vector.shape_cast %249 : vector<1x32x160xf32> to vector<32x160xf32>
    %cst_114 = arith.constant dense<0.000000e+00> : vector<8x160xf32>
    %251 = tpu.matmul %248, %250, %cst_114 {dimension_numbers = #tpu.dot_dimension_numbers<[1], [0], [0], [1], [0, 0, 1, 1], [], []>} : vector<8x32xf32>, vector<32x160xf32>, vector<8x160xf32> -> vector<8x160xf32>
    %252 = vector.extract_strided_slice %251 {offsets = [0, 128], sizes = [8, 32], strides = [1, 1]} : vector<8x160xf32> to vector<8x32xf32>
    %c0_115 = arith.constant 0 : index
    %c14 = arith.constant 14 : index
    %c0_116 = arith.constant 0 : index
    %253 = vector.load %arg7[%c0_115, %c14, %c0_116] : memref<2x15x64xf32, #tpu.memory_space<vmem>>, vector<1x1x32xf32>
    %254 = vector.shape_cast %253 : vector<1x1x32xf32> to vector<1x32xf32>
    %255 = vector.broadcast %254 : vector<1x32xf32> to vector<8x32xf32>
    %256 = arith.addf %252, %255 : vector<8x32xf32>
    %257 = arith.truncf %256 : vector<8x32xf32> to vector<8x32xbf16>
    %cst_117 = arith.constant dense<0.000000e+00> : vector<8x256xf32>
    %258 = tpu.matmul %257, %89, %cst_117 {dimension_numbers = #tpu.dot_dimension_numbers<[1], [0], [0], [1], [0, 0, 1, 1], [], []>} : vector<8x32xbf16>, vector<32x256xbf16>, vector<8x256xf32> -> vector<8x256xf32>
    %259 = arith.negf %258 : vector<8x256xf32>
    %260 = math.exp %259 : vector<8x256xf32>
    %cst_118 = arith.constant 1.000000e+00 : f32
    %261 = vector.broadcast %cst_118 : f32 to vector<8x256xf32>
    %262 = arith.addf %261, %260 : vector<8x256xf32>
    %263 = arith.divf %261, %262 : vector<8x256xf32>
    %cst_119 = arith.constant dense<0.000000e+00> : vector<8xf32>
    %264 = vector.multi_reduction <add>, %263, %cst_119 [1] : vector<8x256xf32> to vector<8xf32>
    %265 = vector.shape_cast %264 : vector<8xf32> to vector<8x1xf32>
    %cst_120 = arith.constant 9.99999997E-7 : f32
    %266 = vector.broadcast %cst_120 : f32 to vector<8x1xf32>
    %267 = arith.addf %266, %265 : vector<8x1xf32>
    %cst_121 = arith.constant 1.000000e+00 : f32
    %268 = vector.broadcast %cst_121 : f32 to vector<8x1xf32>
    %269 = arith.divf %268, %267 : vector<8x1xf32>
    %270 = vector.broadcast %269 : vector<8x1xf32> to vector<8x256xf32>
    %271 = arith.mulf %263, %270 : vector<8x256xf32>
    %272 = arith.truncf %271 : vector<8x256xf32> to vector<8x256xbf16>
    %cst_122 = arith.constant dense<0.000000e+00> : vector<8x32xf32>
    %273 = tpu.matmul %272, %89, %cst_122 {dimension_numbers = #tpu.dot_dimension_numbers<[1], [1], [0], [0], [0, 0, 1, 0], [], []>} : vector<8x256xbf16>, vector<32x256xbf16>, vector<8x32xf32> -> vector<8x32xf32>
    %c1_123 = arith.constant 1 : index
    %c0_124 = arith.constant 0 : index
    %c0_125 = arith.constant 0 : index
    %274 = vector.load %arg6[%c1_123, %c0_124, %c0_125] : memref<2x128x64xf32, #tpu.memory_space<vmem>>, vector<1x32x32xf32>
    %275 = vector.shape_cast %274 : vector<1x32x32xf32> to vector<32x32xf32>
    %cst_126 = arith.constant dense<0.000000e+00> : vector<8x32xf32>
    %276 = tpu.matmul %273, %275, %cst_126 {dimension_numbers = #tpu.dot_dimension_numbers<[1], [0], [0], [1], [0, 0, 1, 1], [], []>} : vector<8x32xf32>, vector<32x32xf32>, vector<8x32xf32> -> vector<8x32xf32>
    %277 = arith.addf %248, %276 : vector<8x32xf32>
    %c1_127 = arith.constant 1 : index
    %c0_128 = arith.constant 0 : index
    %c0_129 = arith.constant 0 : index
    %278 = vector.load %arg7[%c1_127, %c0_128, %c0_129] : memref<2x15x64xf32, #tpu.memory_space<vmem>>, vector<1x1x32xf32>
    %279 = vector.shape_cast %278 : vector<1x1x32xf32> to vector<1x32xf32>
    %280 = vector.broadcast %279 : vector<1x32xf32> to vector<8x32xf32>
    %281 = arith.addf %277, %280 : vector<8x32xf32>
    %c1_130 = arith.constant 1 : index
    %c1_131 = arith.constant 1 : index
    %c0_132 = arith.constant 0 : index
    %282 = vector.load %arg7[%c1_130, %c1_131, %c0_132] : memref<2x15x64xf32, #tpu.memory_space<vmem>>, vector<1x1x32xf32>
    %283 = vector.shape_cast %282 : vector<1x1x32xf32> to vector<1x32xf32>
    %c1_133 = arith.constant 1 : index
    %c2_134 = arith.constant 2 : index
    %c0_135 = arith.constant 0 : index
    %284 = vector.load %arg7[%c1_133, %c2_134, %c0_135] : memref<2x15x64xf32, #tpu.memory_space<vmem>>, vector<1x1x32xf32>
    %285 = vector.shape_cast %284 : vector<1x1x32xf32> to vector<1x32xf32>
    %cst_136 = arith.constant dense<0.000000e+00> : vector<8xf32>
    %286 = vector.multi_reduction <add>, %281, %cst_136 [1] : vector<8x32xf32> to vector<8xf32>
    %287 = vector.shape_cast %286 : vector<8xf32> to vector<8x1xf32>
    %cst_137 = arith.constant 3.200000e+01 : f32
    %288 = vector.broadcast %cst_137 : f32 to vector<8x1xf32>
    %289 = arith.divf %287, %288 : vector<8x1xf32>
    %290 = vector.broadcast %289 : vector<8x1xf32> to vector<8x32xf32>
    %291 = arith.subf %281, %290 : vector<8x32xf32>
    %292 = arith.mulf %291, %291 : vector<8x32xf32>
    %cst_138 = arith.constant dense<0.000000e+00> : vector<8xf32>
    %293 = vector.multi_reduction <add>, %292, %cst_138 [1] : vector<8x32xf32> to vector<8xf32>
    %294 = vector.shape_cast %293 : vector<8xf32> to vector<8x1xf32>
    %cst_139 = arith.constant 3.200000e+01 : f32
    %295 = vector.broadcast %cst_139 : f32 to vector<8x1xf32>
    %296 = arith.divf %294, %295 : vector<8x1xf32>
    %297 = vector.broadcast %289 : vector<8x1xf32> to vector<8x32xf32>
    %298 = arith.subf %281, %297 : vector<8x32xf32>
    %cst_140 = arith.constant 9.99999974E-6 : f32
    %299 = vector.broadcast %cst_140 : f32 to vector<8x1xf32>
    %300 = arith.addf %296, %299 : vector<8x1xf32>
    %301 = math.rsqrt %300 : vector<8x1xf32>
    %302 = vector.broadcast %301 : vector<8x1xf32> to vector<8x32xf32>
    %303 = arith.mulf %298, %302 : vector<8x32xf32>
    %304 = vector.broadcast %283 : vector<1x32xf32> to vector<8x32xf32>
    %305 = arith.mulf %303, %304 : vector<8x32xf32>
    %306 = vector.broadcast %285 : vector<1x32xf32> to vector<8x32xf32>
    %307 = arith.addf %305, %306 : vector<8x32xf32>
    %c1_141 = arith.constant 1 : index
    %c0_142 = arith.constant 0 : index
    %c0_143 = arith.constant 0 : index
    %308 = vector.load %arg8[%c1_141, %c0_142, %c0_143] : memref<2x32x384xf32, #tpu.memory_space<vmem>>, vector<1x32x384xf32>
    %309 = vector.shape_cast %308 : vector<1x32x384xf32> to vector<32x384xf32>
    %cst_144 = arith.constant dense<0.000000e+00> : vector<8x384xf32>
    %310 = tpu.matmul %307, %309, %cst_144 {dimension_numbers = #tpu.dot_dimension_numbers<[1], [0], [0], [1], [0, 0, 1, 1], [], []>} : vector<8x32xf32>, vector<32x384xf32>, vector<8x384xf32> -> vector<8x384xf32>
    %311 = vector.extract_strided_slice %310 {offsets = [0, 0], sizes = [8, 32], strides = [1, 1]} : vector<8x384xf32> to vector<8x32xf32>
    %c1_145 = arith.constant 1 : index
    %c3_146 = arith.constant 3 : index
    %c0_147 = arith.constant 0 : index
    %312 = vector.load %arg7[%c1_145, %c3_146, %c0_147] : memref<2x15x64xf32, #tpu.memory_space<vmem>>, vector<1x1x32xf32>
    %313 = vector.shape_cast %312 : vector<1x1x32xf32> to vector<1x32xf32>
    %314 = vector.broadcast %313 : vector<1x32xf32> to vector<8x32xf32>
    %315 = arith.addf %311, %314 : vector<8x32xf32>
    %316 = vector.extract_strided_slice %310 {offsets = [0, 128], sizes = [8, 32], strides = [1, 1]} : vector<8x384xf32> to vector<8x32xf32>
    %c1_148 = arith.constant 1 : index
    %c4_149 = arith.constant 4 : index
    %c0_150 = arith.constant 0 : index
    %317 = vector.load %arg7[%c1_148, %c4_149, %c0_150] : memref<2x15x64xf32, #tpu.memory_space<vmem>>, vector<1x1x32xf32>
    %318 = vector.shape_cast %317 : vector<1x1x32xf32> to vector<1x32xf32>
    %319 = vector.broadcast %318 : vector<1x32xf32> to vector<8x32xf32>
    %320 = arith.addf %316, %319 : vector<8x32xf32>
    %321 = vector.extract_strided_slice %310 {offsets = [0, 256], sizes = [8, 32], strides = [1, 1]} : vector<8x384xf32> to vector<8x32xf32>
    %c1_151 = arith.constant 1 : index
    %c5_152 = arith.constant 5 : index
    %c0_153 = arith.constant 0 : index
    %322 = vector.load %arg7[%c1_151, %c5_152, %c0_153] : memref<2x15x64xf32, #tpu.memory_space<vmem>>, vector<1x1x32xf32>
    %323 = vector.shape_cast %322 : vector<1x1x32xf32> to vector<1x32xf32>
    %324 = vector.broadcast %323 : vector<1x32xf32> to vector<8x32xf32>
    %325 = arith.addf %321, %324 : vector<8x32xf32>
    %cst_154 = arith.constant dense<0.000000e+00> : vector<8x8xf32>
    %326 = tpu.matmul %315, %320, %cst_154 {dimension_numbers = #tpu.dot_dimension_numbers<[1], [1], [0], [0], [0, 0, 1, 0], [], []>} : vector<8x32xf32>, vector<8x32xf32>, vector<8x8xf32> -> vector<8x8xf32>
    %cst_155 = arith.constant 0.176776692 : f32
    %327 = vector.broadcast %cst_155 : f32 to vector<8x8xf32>
    %328 = arith.mulf %326, %327 : vector<8x8xf32>
    %cst_156 = arith.constant dense<0xFF800000> : vector<8xf32>
    %329 = vector.multi_reduction <maximumf>, %328, %cst_156 [1] : vector<8x8xf32> to vector<8xf32>
    %330 = vector.shape_cast %329 : vector<8xf32> to vector<8x1xf32>
    %331 = vector.broadcast %330 : vector<8x1xf32> to vector<8x8xf32>
    %332 = arith.subf %328, %331 : vector<8x8xf32>
    %333 = math.exp %332 : vector<8x8xf32>
    %cst_157 = arith.constant dense<0.000000e+00> : vector<8xf32>
    %334 = vector.multi_reduction <add>, %333, %cst_157 [1] : vector<8x8xf32> to vector<8xf32>
    %335 = vector.shape_cast %334 : vector<8xf32> to vector<8x1xf32>
    %336 = vector.broadcast %335 : vector<8x1xf32> to vector<8x8xf32>
    %337 = arith.divf %333, %336 : vector<8x8xf32>
    %cst_158 = arith.constant dense<0.000000e+00> : vector<8x32xf32>
    %338 = tpu.matmul %337, %325, %cst_158 {dimension_numbers = #tpu.dot_dimension_numbers<[1], [0], [0], [1], [0, 0, 1, 1], [], []>} : vector<8x8xf32>, vector<8x32xf32>, vector<8x32xf32> -> vector<8x32xf32>
    %c1_159 = arith.constant 1 : index
    %c32_160 = arith.constant 32 : index
    %c0_161 = arith.constant 0 : index
    %339 = vector.load %arg6[%c1_159, %c32_160, %c0_161] : memref<2x128x64xf32, #tpu.memory_space<vmem>>, vector<1x32x32xf32>
    %340 = vector.shape_cast %339 : vector<1x32x32xf32> to vector<32x32xf32>
    %cst_162 = arith.constant dense<0.000000e+00> : vector<8x32xf32>
    %341 = tpu.matmul %338, %340, %cst_162 {dimension_numbers = #tpu.dot_dimension_numbers<[1], [0], [0], [1], [0, 0, 1, 1], [], []>} : vector<8x32xf32>, vector<32x32xf32>, vector<8x32xf32> -> vector<8x32xf32>
    %342 = arith.addf %307, %341 : vector<8x32xf32>
    %c1_163 = arith.constant 1 : index
    %c6_164 = arith.constant 6 : index
    %c0_165 = arith.constant 0 : index
    %343 = vector.load %arg7[%c1_163, %c6_164, %c0_165] : memref<2x15x64xf32, #tpu.memory_space<vmem>>, vector<1x1x32xf32>
    %344 = vector.shape_cast %343 : vector<1x1x32xf32> to vector<1x32xf32>
    %345 = vector.broadcast %344 : vector<1x32xf32> to vector<8x32xf32>
    %346 = arith.addf %342, %345 : vector<8x32xf32>
    %c1_166 = arith.constant 1 : index
    %c7_167 = arith.constant 7 : index
    %c0_168 = arith.constant 0 : index
    %347 = vector.load %arg7[%c1_166, %c7_167, %c0_168] : memref<2x15x64xf32, #tpu.memory_space<vmem>>, vector<1x1x32xf32>
    %348 = vector.shape_cast %347 : vector<1x1x32xf32> to vector<1x32xf32>
    %c1_169 = arith.constant 1 : index
    %c8_170 = arith.constant 8 : index
    %c0_171 = arith.constant 0 : index
    %349 = vector.load %arg7[%c1_169, %c8_170, %c0_171] : memref<2x15x64xf32, #tpu.memory_space<vmem>>, vector<1x1x32xf32>
    %350 = vector.shape_cast %349 : vector<1x1x32xf32> to vector<1x32xf32>
    %cst_172 = arith.constant dense<0.000000e+00> : vector<8xf32>
    %351 = vector.multi_reduction <add>, %346, %cst_172 [1] : vector<8x32xf32> to vector<8xf32>
    %352 = vector.shape_cast %351 : vector<8xf32> to vector<8x1xf32>
    %cst_173 = arith.constant 3.200000e+01 : f32
    %353 = vector.broadcast %cst_173 : f32 to vector<8x1xf32>
    %354 = arith.divf %352, %353 : vector<8x1xf32>
    %355 = vector.broadcast %354 : vector<8x1xf32> to vector<8x32xf32>
    %356 = arith.subf %346, %355 : vector<8x32xf32>
    %357 = arith.mulf %356, %356 : vector<8x32xf32>
    %cst_174 = arith.constant dense<0.000000e+00> : vector<8xf32>
    %358 = vector.multi_reduction <add>, %357, %cst_174 [1] : vector<8x32xf32> to vector<8xf32>
    %359 = vector.shape_cast %358 : vector<8xf32> to vector<8x1xf32>
    %cst_175 = arith.constant 3.200000e+01 : f32
    %360 = vector.broadcast %cst_175 : f32 to vector<8x1xf32>
    %361 = arith.divf %359, %360 : vector<8x1xf32>
    %362 = vector.broadcast %354 : vector<8x1xf32> to vector<8x32xf32>
    %363 = arith.subf %346, %362 : vector<8x32xf32>
    %cst_176 = arith.constant 9.99999974E-6 : f32
    %364 = vector.broadcast %cst_176 : f32 to vector<8x1xf32>
    %365 = arith.addf %361, %364 : vector<8x1xf32>
    %366 = math.rsqrt %365 : vector<8x1xf32>
    %367 = vector.broadcast %366 : vector<8x1xf32> to vector<8x32xf32>
    %368 = arith.mulf %363, %367 : vector<8x32xf32>
    %369 = vector.broadcast %348 : vector<1x32xf32> to vector<8x32xf32>
    %370 = arith.mulf %368, %369 : vector<8x32xf32>
    %371 = vector.broadcast %350 : vector<1x32xf32> to vector<8x32xf32>
    %372 = arith.addf %370, %371 : vector<8x32xf32>
    %c1_177 = arith.constant 1 : index
    %c64_178 = arith.constant 64 : index
    %c0_179 = arith.constant 0 : index
    %373 = vector.load %arg6[%c1_177, %c64_178, %c0_179] : memref<2x128x64xf32, #tpu.memory_space<vmem>>, vector<1x32x64xf32>
    %374 = vector.shape_cast %373 : vector<1x32x64xf32> to vector<32x64xf32>
    %cst_180 = arith.constant dense<0.000000e+00> : vector<8x64xf32>
    %375 = tpu.matmul %372, %374, %cst_180 {dimension_numbers = #tpu.dot_dimension_numbers<[1], [0], [0], [1], [0, 0, 1, 1], [], []>} : vector<8x32xf32>, vector<32x64xf32>, vector<8x64xf32> -> vector<8x64xf32>
    %c1_181 = arith.constant 1 : index
    %c9_182 = arith.constant 9 : index
    %c0_183 = arith.constant 0 : index
    %376 = vector.load %arg7[%c1_181, %c9_182, %c0_183] : memref<2x15x64xf32, #tpu.memory_space<vmem>>, vector<1x1x64xf32>
    %377 = vector.shape_cast %376 : vector<1x1x64xf32> to vector<1x64xf32>
    %378 = vector.broadcast %377 : vector<1x64xf32> to vector<8x64xf32>
    %379 = arith.addf %375, %378 : vector<8x64xf32>
    %cst_184 = arith.constant 0.000000e+00 : f32
    %380 = vector.broadcast %cst_184 : f32 to vector<8x64xf32>
    %381 = arith.maximumf %379, %380 : vector<8x64xf32>
    %c1_185 = arith.constant 1 : index
    %c96_186 = arith.constant 96 : index
    %c0_187 = arith.constant 0 : index
    %382 = vector.load %arg6[%c1_185, %c96_186, %c0_187] : memref<2x128x64xf32, #tpu.memory_space<vmem>>, vector<1x32x64xf32>
    %383 = vector.shape_cast %382 : vector<1x32x64xf32> to vector<32x64xf32>
    %cst_188 = arith.constant dense<0.000000e+00> : vector<8x32xf32>
    %384 = tpu.matmul %381, %383, %cst_188 {dimension_numbers = #tpu.dot_dimension_numbers<[1], [1], [0], [0], [0, 0, 1, 0], [], []>} : vector<8x64xf32>, vector<32x64xf32>, vector<8x32xf32> -> vector<8x32xf32>
    %385 = arith.addf %372, %384 : vector<8x32xf32>
    %c1_189 = arith.constant 1 : index
    %c10_190 = arith.constant 10 : index
    %c0_191 = arith.constant 0 : index
    %386 = vector.load %arg7[%c1_189, %c10_190, %c0_191] : memref<2x15x64xf32, #tpu.memory_space<vmem>>, vector<1x1x32xf32>
    %387 = vector.shape_cast %386 : vector<1x1x32xf32> to vector<1x32xf32>
    %388 = vector.broadcast %387 : vector<1x32xf32> to vector<8x32xf32>
    %389 = arith.addf %385, %388 : vector<8x32xf32>
    %c1_192 = arith.constant 1 : index
    %c11_193 = arith.constant 11 : index
    %c0_194 = arith.constant 0 : index
    %390 = vector.load %arg7[%c1_192, %c11_193, %c0_194] : memref<2x15x64xf32, #tpu.memory_space<vmem>>, vector<1x1x32xf32>
    %391 = vector.shape_cast %390 : vector<1x1x32xf32> to vector<1x32xf32>
    %c1_195 = arith.constant 1 : index
    %c12_196 = arith.constant 12 : index
    %c0_197 = arith.constant 0 : index
    %392 = vector.load %arg7[%c1_195, %c12_196, %c0_197] : memref<2x15x64xf32, #tpu.memory_space<vmem>>, vector<1x1x32xf32>
    %393 = vector.shape_cast %392 : vector<1x1x32xf32> to vector<1x32xf32>
    %cst_198 = arith.constant dense<0.000000e+00> : vector<8xf32>
    %394 = vector.multi_reduction <add>, %389, %cst_198 [1] : vector<8x32xf32> to vector<8xf32>
    %395 = vector.shape_cast %394 : vector<8xf32> to vector<8x1xf32>
    %cst_199 = arith.constant 3.200000e+01 : f32
    %396 = vector.broadcast %cst_199 : f32 to vector<8x1xf32>
    %397 = arith.divf %395, %396 : vector<8x1xf32>
    %398 = vector.broadcast %397 : vector<8x1xf32> to vector<8x32xf32>
    %399 = arith.subf %389, %398 : vector<8x32xf32>
    %400 = arith.mulf %399, %399 : vector<8x32xf32>
    %cst_200 = arith.constant dense<0.000000e+00> : vector<8xf32>
    %401 = vector.multi_reduction <add>, %400, %cst_200 [1] : vector<8x32xf32> to vector<8xf32>
    %402 = vector.shape_cast %401 : vector<8xf32> to vector<8x1xf32>
    %cst_201 = arith.constant 3.200000e+01 : f32
    %403 = vector.broadcast %cst_201 : f32 to vector<8x1xf32>
    %404 = arith.divf %402, %403 : vector<8x1xf32>
    %405 = vector.broadcast %397 : vector<8x1xf32> to vector<8x32xf32>
    %406 = arith.subf %389, %405 : vector<8x32xf32>
    %cst_202 = arith.constant 9.99999974E-6 : f32
    %407 = vector.broadcast %cst_202 : f32 to vector<8x1xf32>
    %408 = arith.addf %404, %407 : vector<8x1xf32>
    %409 = math.rsqrt %408 : vector<8x1xf32>
    %410 = vector.broadcast %409 : vector<8x1xf32> to vector<8x32xf32>
    %411 = arith.mulf %406, %410 : vector<8x32xf32>
    %412 = vector.broadcast %391 : vector<1x32xf32> to vector<8x32xf32>
    %413 = arith.mulf %411, %412 : vector<8x32xf32>
    %414 = vector.broadcast %393 : vector<1x32xf32> to vector<8x32xf32>
    %415 = arith.addf %413, %414 : vector<8x32xf32>
    %c1_203 = arith.constant 1 : index
    %c0_204 = arith.constant 0 : index
    %c0_205 = arith.constant 0 : index
    %416 = vector.load %arg9[%c1_203, %c0_204, %c0_205] : memref<2x32x160xf32, #tpu.memory_space<vmem>>, vector<1x32x160xf32>
    %417 = vector.shape_cast %416 : vector<1x32x160xf32> to vector<32x160xf32>
    %cst_206 = arith.constant dense<0.000000e+00> : vector<8x160xf32>
    %418 = tpu.matmul %415, %417, %cst_206 {dimension_numbers = #tpu.dot_dimension_numbers<[1], [0], [0], [1], [0, 0, 1, 1], [], []>} : vector<8x32xf32>, vector<32x160xf32>, vector<8x160xf32> -> vector<8x160xf32>
    %419 = vector.extract_strided_slice %418 {offsets = [0, 0], sizes = [8, 16], strides = [1, 1]} : vector<8x160xf32> to vector<8x16xf32>
    %c1_207 = arith.constant 1 : index
    %c13 = arith.constant 13 : index
    %c0_208 = arith.constant 0 : index
    %420 = vector.load %arg7[%c1_207, %c13, %c0_208] : memref<2x15x64xf32, #tpu.memory_space<vmem>>, vector<1x1x16xf32>
    %421 = vector.shape_cast %420 : vector<1x1x16xf32> to vector<1x16xf32>
    %422 = vector.broadcast %421 : vector<1x16xf32> to vector<8x16xf32>
    %423 = arith.addf %419, %422 : vector<8x16xf32>
    %424 = vector.extract_strided_slice %418 {offsets = [0, 128], sizes = [8, 32], strides = [1, 1]} : vector<8x160xf32> to vector<8x32xf32>
    %c1_209 = arith.constant 1 : index
    %c14_210 = arith.constant 14 : index
    %c0_211 = arith.constant 0 : index
    %425 = vector.load %arg7[%c1_209, %c14_210, %c0_211] : memref<2x15x64xf32, #tpu.memory_space<vmem>>, vector<1x1x32xf32>
    %426 = vector.shape_cast %425 : vector<1x1x32xf32> to vector<1x32xf32>
    %427 = vector.broadcast %426 : vector<1x32xf32> to vector<8x32xf32>
    %428 = arith.addf %424, %427 : vector<8x32xf32>
    %429 = arith.truncf %428 : vector<8x32xf32> to vector<8x32xbf16>
    %cst_212 = arith.constant dense<0.000000e+00> : vector<8x256xf32>
    %430 = tpu.matmul %429, %89, %cst_212 {dimension_numbers = #tpu.dot_dimension_numbers<[1], [0], [0], [1], [0, 0, 1, 1], [], []>} : vector<8x32xbf16>, vector<32x256xbf16>, vector<8x256xf32> -> vector<8x256xf32>
    %c0_213 = arith.constant 0 : index
    %c0_214 = arith.constant 0 : index
    %c0_215 = arith.constant 0 : index
    %431 = vector.load %arg10[%c0_213, %c0_214, %c0_215] : memref<2x8x16xf32, #tpu.memory_space<vmem>>, vector<1x8x16xf32>
    %432 = vector.shape_cast %431 : vector<1x8x16xf32> to vector<8x16xf32>
    %433 = vector.shape_cast %423 : vector<8x16xf32> to vector<1x8x16xf32>
    tpu.vector_store %arg10[%c0_213, %c0_214, %c0_215], %433 {strides = array<i32>} : memref<2x8x16xf32, #tpu.memory_space<vmem>>, vector<1x8x16xf32>,
    %c0_216 = arith.constant 0 : index
    %c0_217 = arith.constant 0 : index
    %c0_218 = arith.constant 0 : index
    %434 = vector.load %arg11[%c0_216, %c0_217, %c0_218] : memref<2x8x256xf32, #tpu.memory_space<vmem>>, vector<1x8x256xf32>
    %435 = vector.shape_cast %434 : vector<1x8x256xf32> to vector<8x256xf32>
    %436 = vector.shape_cast %430 : vector<8x256xf32> to vector<1x8x256xf32>
    tpu.vector_store %arg11[%c0_216, %c0_217, %c0_218], %436 {strides = array<i32>} : memref<2x8x256xf32, #tpu.memory_space<vmem>>, vector<1x8x256xf32>,
    %c1_219 = arith.constant 1 : index
    %c0_220 = arith.constant 0 : index
    %c0_221 = arith.constant 0 : index
    %437 = vector.load %arg1[%c1_219, %c0_220, %c0_221] : memref<2x32x256xf32, #tpu.memory_space<vmem>>, vector<1x32x256xf32>
    %438 = vector.shape_cast %437 : vector<1x32x256xf32> to vector<32x256xf32>
    %c0_222 = arith.constant 0 : index
    %c0_223 = arith.constant 0 : index
    %439 = vector.load %arg2[%c0_222, %c0_223] : memref<32x2xf32, #tpu.memory_space<vmem>>, vector<32x1xf32>
    %c0_224 = arith.constant 0 : index
    %c1_225 = arith.constant 1 : index
    %440 = vector.load %arg2[%c0_224, %c1_225] : memref<32x2xf32, #tpu.memory_space<vmem>>, vector<32x1xf32>
    %cst_226 = arith.constant dense<0.000000e+00> : vector<32xf32>
    %441 = vector.multi_reduction <add>, %438, %cst_226 [1] : vector<32x256xf32> to vector<32xf32>
    %442 = vector.shape_cast %441 : vector<32xf32> to vector<32x1xf32>
    %cst_227 = arith.constant 2.560000e+02 : f32
    %443 = vector.broadcast %cst_227 : f32 to vector<32x1xf32>
    %444 = arith.divf %442, %443 : vector<32x1xf32>
    %445 = vector.broadcast %444 : vector<32x1xf32> to vector<32x256xf32>
    %446 = arith.subf %438, %445 : vector<32x256xf32>
    %447 = arith.mulf %446, %446 : vector<32x256xf32>
    %cst_228 = arith.constant dense<0.000000e+00> : vector<32xf32>
    %448 = vector.multi_reduction <add>, %447, %cst_228 [1] : vector<32x256xf32> to vector<32xf32>
    %449 = vector.shape_cast %448 : vector<32xf32> to vector<32x1xf32>
    %cst_229 = arith.constant 2.560000e+02 : f32
    %450 = vector.broadcast %cst_229 : f32 to vector<32x1xf32>
    %451 = arith.divf %449, %450 : vector<32x1xf32>
    %452 = vector.broadcast %444 : vector<32x1xf32> to vector<32x256xf32>
    %453 = arith.subf %438, %452 : vector<32x256xf32>
    %cst_230 = arith.constant 9.99999974E-6 : f32
    %454 = vector.broadcast %cst_230 : f32 to vector<32x1xf32>
    %455 = arith.addf %451, %454 : vector<32x1xf32>
    %456 = math.rsqrt %455 : vector<32x1xf32>
    %457 = vector.broadcast %456 : vector<32x1xf32> to vector<32x256xf32>
    %458 = arith.mulf %453, %457 : vector<32x256xf32>
    %459 = vector.broadcast %439 : vector<32x1xf32> to vector<32x256xf32>
    %460 = arith.mulf %458, %459 : vector<32x256xf32>
    %461 = vector.broadcast %440 : vector<32x1xf32> to vector<32x256xf32>
    %462 = arith.addf %460, %461 : vector<32x256xf32>
    %cst_231 = arith.constant 0.000000e+00 : f32
    %463 = vector.broadcast %cst_231 : f32 to vector<32x256xf32>
    %464 = arith.maximumf %462, %463 : vector<32x256xf32>
    %c0_232 = arith.constant 0 : index
    %c0_233 = arith.constant 0 : index
    %465 = vector.load %arg4[%c0_232, %c0_233] : memref<64x32xbf16, #tpu.memory_space<vmem>>, vector<32x32xbf16>
    %466 = arith.truncf %464 : vector<32x256xf32> to vector<32x256xbf16>
    %cst_234 = arith.constant dense<0.000000e+00> : vector<32x256xf32>
    %467 = tpu.matmul %465, %466, %cst_234 {dimension_numbers = #tpu.dot_dimension_numbers<[1], [0], [0], [1], [0, 0, 1, 1], [], []>} : vector<32x32xbf16>, vector<32x256xbf16>, vector<32x256xf32> -> vector<32x256xf32>
    %c0_235 = arith.constant 0 : index
    %c0_236 = arith.constant 0 : index
    %468 = vector.load %arg3[%c0_235, %c0_236] : memref<32x5xf32, #tpu.memory_space<vmem>>, vector<32x1xf32>
    %c0_237 = arith.constant 0 : index
    %c1_238 = arith.constant 1 : index
    %469 = vector.load %arg3[%c0_237, %c1_238] : memref<32x5xf32, #tpu.memory_space<vmem>>, vector<32x1xf32>
    %cst_239 = arith.constant dense<0.000000e+00> : vector<32xf32>
    %470 = vector.multi_reduction <add>, %467, %cst_239 [1] : vector<32x256xf32> to vector<32xf32>
    %471 = vector.shape_cast %470 : vector<32xf32> to vector<32x1xf32>
    %cst_240 = arith.constant 2.560000e+02 : f32
    %472 = vector.broadcast %cst_240 : f32 to vector<32x1xf32>
    %473 = arith.divf %471, %472 : vector<32x1xf32>
    %474 = vector.broadcast %473 : vector<32x1xf32> to vector<32x256xf32>
    %475 = arith.subf %467, %474 : vector<32x256xf32>
    %476 = arith.mulf %475, %475 : vector<32x256xf32>
    %cst_241 = arith.constant dense<0.000000e+00> : vector<32xf32>
    %477 = vector.multi_reduction <add>, %476, %cst_241 [1] : vector<32x256xf32> to vector<32xf32>
    %478 = vector.shape_cast %477 : vector<32xf32> to vector<32x1xf32>
    %cst_242 = arith.constant 2.560000e+02 : f32
    %479 = vector.broadcast %cst_242 : f32 to vector<32x1xf32>
    %480 = arith.divf %478, %479 : vector<32x1xf32>
    %481 = vector.broadcast %473 : vector<32x1xf32> to vector<32x256xf32>
    %482 = arith.subf %467, %481 : vector<32x256xf32>
    %cst_243 = arith.constant 9.99999974E-6 : f32
    %483 = vector.broadcast %cst_243 : f32 to vector<32x1xf32>
    %484 = arith.addf %480, %483 : vector<32x1xf32>
    %485 = math.rsqrt %484 : vector<32x1xf32>
    %486 = vector.broadcast %485 : vector<32x1xf32> to vector<32x256xf32>
    %487 = arith.mulf %482, %486 : vector<32x256xf32>
    %488 = vector.broadcast %468 : vector<32x1xf32> to vector<32x256xf32>
    %489 = arith.mulf %487, %488 : vector<32x256xf32>
    %490 = vector.broadcast %469 : vector<32x1xf32> to vector<32x256xf32>
    %491 = arith.addf %489, %490 : vector<32x256xf32>
    %cst_244 = arith.constant 0.000000e+00 : f32
    %492 = vector.broadcast %cst_244 : f32 to vector<32x256xf32>
    %493 = arith.maximumf %491, %492 : vector<32x256xf32>
    %c32_245 = arith.constant 32 : index
    %c0_246 = arith.constant 0 : index
    %494 = vector.load %arg4[%c32_245, %c0_246] : memref<64x32xbf16, #tpu.memory_space<vmem>>, vector<32x32xbf16>
    %495 = arith.truncf %493 : vector<32x256xf32> to vector<32x256xbf16>
    %cst_247 = arith.constant dense<0.000000e+00> : vector<32x256xf32>
    %496 = tpu.matmul %494, %495, %cst_247 {dimension_numbers = #tpu.dot_dimension_numbers<[1], [0], [0], [1], [0, 0, 1, 1], [], []>} : vector<32x32xbf16>, vector<32x256xbf16>, vector<32x256xf32> -> vector<32x256xf32>
    %c0_248 = arith.constant 0 : index
    %c2_249 = arith.constant 2 : index
    %497 = vector.load %arg3[%c0_248, %c2_249] : memref<32x5xf32, #tpu.memory_space<vmem>>, vector<32x1xf32>
    %498 = vector.broadcast %497 : vector<32x1xf32> to vector<32x256xf32>
    %499 = arith.addf %496, %498 : vector<32x256xf32>
    %c0_250 = arith.constant 0 : index
    %c3_251 = arith.constant 3 : index
    %500 = vector.load %arg3[%c0_250, %c3_251] : memref<32x5xf32, #tpu.memory_space<vmem>>, vector<32x1xf32>
    %c0_252 = arith.constant 0 : index
    %c4_253 = arith.constant 4 : index
    %501 = vector.load %arg3[%c0_252, %c4_253] : memref<32x5xf32, #tpu.memory_space<vmem>>, vector<32x1xf32>
    %cst_254 = arith.constant dense<0.000000e+00> : vector<32xf32>
    %502 = vector.multi_reduction <add>, %499, %cst_254 [1] : vector<32x256xf32> to vector<32xf32>
    %503 = vector.shape_cast %502 : vector<32xf32> to vector<32x1xf32>
    %cst_255 = arith.constant 2.560000e+02 : f32
    %504 = vector.broadcast %cst_255 : f32 to vector<32x1xf32>
    %505 = arith.divf %503, %504 : vector<32x1xf32>
    %506 = vector.broadcast %505 : vector<32x1xf32> to vector<32x256xf32>
    %507 = arith.subf %499, %506 : vector<32x256xf32>
    %508 = arith.mulf %507, %507 : vector<32x256xf32>
    %cst_256 = arith.constant dense<0.000000e+00> : vector<32xf32>
    %509 = vector.multi_reduction <add>, %508, %cst_256 [1] : vector<32x256xf32> to vector<32xf32>
    %510 = vector.shape_cast %509 : vector<32xf32> to vector<32x1xf32>
    %cst_257 = arith.constant 2.560000e+02 : f32
    %511 = vector.broadcast %cst_257 : f32 to vector<32x1xf32>
    %512 = arith.divf %510, %511 : vector<32x1xf32>
    %513 = vector.broadcast %505 : vector<32x1xf32> to vector<32x256xf32>
    %514 = arith.subf %499, %513 : vector<32x256xf32>
    %cst_258 = arith.constant 9.99999974E-6 : f32
    %515 = vector.broadcast %cst_258 : f32 to vector<32x1xf32>
    %516 = arith.addf %512, %515 : vector<32x1xf32>
    %517 = math.rsqrt %516 : vector<32x1xf32>
    %518 = vector.broadcast %517 : vector<32x1xf32> to vector<32x256xf32>
    %519 = arith.mulf %514, %518 : vector<32x256xf32>
    %520 = vector.broadcast %500 : vector<32x1xf32> to vector<32x256xf32>
    %521 = arith.mulf %519, %520 : vector<32x256xf32>
    %522 = vector.broadcast %501 : vector<32x1xf32> to vector<32x256xf32>
    %523 = arith.addf %521, %522 : vector<32x256xf32>
    %524 = arith.truncf %523 : vector<32x256xf32> to vector<32x256xbf16>
    %cst_259 = arith.constant dense<0.000000e+00> : vector<8x256xf32>
    %525 = tpu.matmul %1, %524, %cst_259 {dimension_numbers = #tpu.dot_dimension_numbers<[1], [0], [0], [1], [0, 0, 1, 1], [], []>} : vector<8x32xbf16>, vector<32x256xbf16>, vector<8x256xf32> -> vector<8x256xf32>
    %526 = arith.negf %525 : vector<8x256xf32>
    %527 = math.exp %526 : vector<8x256xf32>
    %cst_260 = arith.constant 1.000000e+00 : f32
    %528 = vector.broadcast %cst_260 : f32 to vector<8x256xf32>
    %529 = arith.addf %528, %527 : vector<8x256xf32>
    %530 = arith.divf %528, %529 : vector<8x256xf32>
    %cst_261 = arith.constant dense<0.000000e+00> : vector<8xf32>
    %531 = vector.multi_reduction <add>, %530, %cst_261 [1] : vector<8x256xf32> to vector<8xf32>
    %532 = vector.shape_cast %531 : vector<8xf32> to vector<8x1xf32>
    %cst_262 = arith.constant 9.99999997E-7 : f32
    %533 = vector.broadcast %cst_262 : f32 to vector<8x1xf32>
    %534 = arith.addf %533, %532 : vector<8x1xf32>
    %cst_263 = arith.constant 1.000000e+00 : f32
    %535 = vector.broadcast %cst_263 : f32 to vector<8x1xf32>
    %536 = arith.divf %535, %534 : vector<8x1xf32>
    %537 = vector.broadcast %536 : vector<8x1xf32> to vector<8x256xf32>
    %538 = arith.mulf %530, %537 : vector<8x256xf32>
    %539 = arith.truncf %538 : vector<8x256xf32> to vector<8x256xbf16>
    %cst_264 = arith.constant dense<0.000000e+00> : vector<8x32xf32>
    %540 = tpu.matmul %539, %524, %cst_264 {dimension_numbers = #tpu.dot_dimension_numbers<[1], [1], [0], [0], [0, 0, 1, 0], [], []>} : vector<8x256xbf16>, vector<32x256xbf16>, vector<8x32xf32> -> vector<8x32xf32>
    %541 = arith.addf %0, %540 : vector<8x32xf32>
    %c0_265 = arith.constant 0 : index
    %c0_266 = arith.constant 0 : index
    %c0_267 = arith.constant 0 : index
    %542 = vector.load %arg6[%c0_265, %c0_266, %c0_267] : memref<2x128x64xf32, #tpu.memory_space<vmem>>, vector<1x32x32xf32>
    %543 = vector.shape_cast %542 : vector<1x32x32xf32> to vector<32x32xf32>
    %cst_268 = arith.constant dense<0.000000e+00> : vector<8x32xf32>
    %544 = tpu.matmul %540, %543, %cst_268 {dimension_numbers = #tpu.dot_dimension_numbers<[1], [0], [0], [1], [0, 0, 1, 1], [], []>} : vector<8x32xf32>, vector<32x32xf32>, vector<8x32xf32> -> vector<8x32xf32>
    %545 = arith.addf %541, %544 : vector<8x32xf32>
    %c0_269 = arith.constant 0 : index
    %c0_270 = arith.constant 0 : index
    %c0_271 = arith.constant 0 : index
    %546 = vector.load %arg7[%c0_269, %c0_270, %c0_271] : memref<2x15x64xf32, #tpu.memory_space<vmem>>, vector<1x1x32xf32>
    %547 = vector.shape_cast %546 : vector<1x1x32xf32> to vector<1x32xf32>
    %548 = vector.broadcast %547 : vector<1x32xf32> to vector<8x32xf32>
    %549 = arith.addf %545, %548 : vector<8x32xf32>
    %c0_272 = arith.constant 0 : index
    %c1_273 = arith.constant 1 : index
    %c0_274 = arith.constant 0 : index
    %550 = vector.load %arg7[%c0_272, %c1_273, %c0_274] : memref<2x15x64xf32, #tpu.memory_space<vmem>>, vector<1x1x32xf32>
    %551 = vector.shape_cast %550 : vector<1x1x32xf32> to vector<1x32xf32>
    %c0_275 = arith.constant 0 : index
    %c2_276 = arith.constant 2 : index
    %c0_277 = arith.constant 0 : index
    %552 = vector.load %arg7[%c0_275, %c2_276, %c0_277] : memref<2x15x64xf32, #tpu.memory_space<vmem>>, vector<1x1x32xf32>
    %553 = vector.shape_cast %552 : vector<1x1x32xf32> to vector<1x32xf32>
    %cst_278 = arith.constant dense<0.000000e+00> : vector<8xf32>
    %554 = vector.multi_reduction <add>, %549, %cst_278 [1] : vector<8x32xf32> to vector<8xf32>
    %555 = vector.shape_cast %554 : vector<8xf32> to vector<8x1xf32>
    %cst_279 = arith.constant 3.200000e+01 : f32
    %556 = vector.broadcast %cst_279 : f32 to vector<8x1xf32>
    %557 = arith.divf %555, %556 : vector<8x1xf32>
    %558 = vector.broadcast %557 : vector<8x1xf32> to vector<8x32xf32>
    %559 = arith.subf %549, %558 : vector<8x32xf32>
    %560 = arith.mulf %559, %559 : vector<8x32xf32>
    %cst_280 = arith.constant dense<0.000000e+00> : vector<8xf32>
    %561 = vector.multi_reduction <add>, %560, %cst_280 [1] : vector<8x32xf32> to vector<8xf32>
    %562 = vector.shape_cast %561 : vector<8xf32> to vector<8x1xf32>
    %cst_281 = arith.constant 3.200000e+01 : f32
    %563 = vector.broadcast %cst_281 : f32 to vector<8x1xf32>
    %564 = arith.divf %562, %563 : vector<8x1xf32>
    %565 = vector.broadcast %557 : vector<8x1xf32> to vector<8x32xf32>
    %566 = arith.subf %549, %565 : vector<8x32xf32>
    %cst_282 = arith.constant 9.99999974E-6 : f32
    %567 = vector.broadcast %cst_282 : f32 to vector<8x1xf32>
    %568 = arith.addf %564, %567 : vector<8x1xf32>
    %569 = math.rsqrt %568 : vector<8x1xf32>
    %570 = vector.broadcast %569 : vector<8x1xf32> to vector<8x32xf32>
    %571 = arith.mulf %566, %570 : vector<8x32xf32>
    %572 = vector.broadcast %551 : vector<1x32xf32> to vector<8x32xf32>
    %573 = arith.mulf %571, %572 : vector<8x32xf32>
    %574 = vector.broadcast %553 : vector<1x32xf32> to vector<8x32xf32>
    %575 = arith.addf %573, %574 : vector<8x32xf32>
    %c0_283 = arith.constant 0 : index
    %c0_284 = arith.constant 0 : index
    %c0_285 = arith.constant 0 : index
    %576 = vector.load %arg8[%c0_283, %c0_284, %c0_285] : memref<2x32x384xf32, #tpu.memory_space<vmem>>, vector<1x32x384xf32>
    %577 = vector.shape_cast %576 : vector<1x32x384xf32> to vector<32x384xf32>
    %cst_286 = arith.constant dense<0.000000e+00> : vector<8x384xf32>
    %578 = tpu.matmul %575, %577, %cst_286 {dimension_numbers = #tpu.dot_dimension_numbers<[1], [0], [0], [1], [0, 0, 1, 1], [], []>} : vector<8x32xf32>, vector<32x384xf32>, vector<8x384xf32> -> vector<8x384xf32>
    %579 = vector.extract_strided_slice %578 {offsets = [0, 0], sizes = [8, 32], strides = [1, 1]} : vector<8x384xf32> to vector<8x32xf32>
    %c0_287 = arith.constant 0 : index
    %c3_288 = arith.constant 3 : index
    %c0_289 = arith.constant 0 : index
    %580 = vector.load %arg7[%c0_287, %c3_288, %c0_289] : memref<2x15x64xf32, #tpu.memory_space<vmem>>, vector<1x1x32xf32>
    %581 = vector.shape_cast %580 : vector<1x1x32xf32> to vector<1x32xf32>
    %582 = vector.broadcast %581 : vector<1x32xf32> to vector<8x32xf32>
    %583 = arith.addf %579, %582 : vector<8x32xf32>
    %584 = vector.extract_strided_slice %578 {offsets = [0, 128], sizes = [8, 32], strides = [1, 1]} : vector<8x384xf32> to vector<8x32xf32>
    %c0_290 = arith.constant 0 : index
    %c4_291 = arith.constant 4 : index
    %c0_292 = arith.constant 0 : index
    %585 = vector.load %arg7[%c0_290, %c4_291, %c0_292] : memref<2x15x64xf32, #tpu.memory_space<vmem>>, vector<1x1x32xf32>
    %586 = vector.shape_cast %585 : vector<1x1x32xf32> to vector<1x32xf32>
    %587 = vector.broadcast %586 : vector<1x32xf32> to vector<8x32xf32>
    %588 = arith.addf %584, %587 : vector<8x32xf32>
    %589 = vector.extract_strided_slice %578 {offsets = [0, 256], sizes = [8, 32], strides = [1, 1]} : vector<8x384xf32> to vector<8x32xf32>
    %c0_293 = arith.constant 0 : index
    %c5_294 = arith.constant 5 : index
    %c0_295 = arith.constant 0 : index
    %590 = vector.load %arg7[%c0_293, %c5_294, %c0_295] : memref<2x15x64xf32, #tpu.memory_space<vmem>>, vector<1x1x32xf32>
    %591 = vector.shape_cast %590 : vector<1x1x32xf32> to vector<1x32xf32>
    %592 = vector.broadcast %591 : vector<1x32xf32> to vector<8x32xf32>
    %593 = arith.addf %589, %592 : vector<8x32xf32>
    %cst_296 = arith.constant dense<0.000000e+00> : vector<8x8xf32>
    %594 = tpu.matmul %583, %588, %cst_296 {dimension_numbers = #tpu.dot_dimension_numbers<[1], [1], [0], [0], [0, 0, 1, 0], [], []>} : vector<8x32xf32>, vector<8x32xf32>, vector<8x8xf32> -> vector<8x8xf32>
    %cst_297 = arith.constant 0.176776692 : f32
    %595 = vector.broadcast %cst_297 : f32 to vector<8x8xf32>
    %596 = arith.mulf %594, %595 : vector<8x8xf32>
    %cst_298 = arith.constant dense<0xFF800000> : vector<8xf32>
    %597 = vector.multi_reduction <maximumf>, %596, %cst_298 [1] : vector<8x8xf32> to vector<8xf32>
    %598 = vector.shape_cast %597 : vector<8xf32> to vector<8x1xf32>
    %599 = vector.broadcast %598 : vector<8x1xf32> to vector<8x8xf32>
    %600 = arith.subf %596, %599 : vector<8x8xf32>
    %601 = math.exp %600 : vector<8x8xf32>
    %cst_299 = arith.constant dense<0.000000e+00> : vector<8xf32>
    %602 = vector.multi_reduction <add>, %601, %cst_299 [1] : vector<8x8xf32> to vector<8xf32>
    %603 = vector.shape_cast %602 : vector<8xf32> to vector<8x1xf32>
    %604 = vector.broadcast %603 : vector<8x1xf32> to vector<8x8xf32>
    %605 = arith.divf %601, %604 : vector<8x8xf32>
    %cst_300 = arith.constant dense<0.000000e+00> : vector<8x32xf32>
    %606 = tpu.matmul %605, %593, %cst_300 {dimension_numbers = #tpu.dot_dimension_numbers<[1], [0], [0], [1], [0, 0, 1, 1], [], []>} : vector<8x8xf32>, vector<8x32xf32>, vector<8x32xf32> -> vector<8x32xf32>
    %c0_301 = arith.constant 0 : index
    %c32_302 = arith.constant 32 : index
    %c0_303 = arith.constant 0 : index
    %607 = vector.load %arg6[%c0_301, %c32_302, %c0_303] : memref<2x128x64xf32, #tpu.memory_space<vmem>>, vector<1x32x32xf32>
    %608 = vector.shape_cast %607 : vector<1x32x32xf32> to vector<32x32xf32>
    %cst_304 = arith.constant dense<0.000000e+00> : vector<8x32xf32>
    %609 = tpu.matmul %606, %608, %cst_304 {dimension_numbers = #tpu.dot_dimension_numbers<[1], [0], [0], [1], [0, 0, 1, 1], [], []>} : vector<8x32xf32>, vector<32x32xf32>, vector<8x32xf32> -> vector<8x32xf32>
    %610 = arith.addf %575, %609 : vector<8x32xf32>
    %c0_305 = arith.constant 0 : index
    %c6_306 = arith.constant 6 : index
    %c0_307 = arith.constant 0 : index
    %611 = vector.load %arg7[%c0_305, %c6_306, %c0_307] : memref<2x15x64xf32, #tpu.memory_space<vmem>>, vector<1x1x32xf32>
    %612 = vector.shape_cast %611 : vector<1x1x32xf32> to vector<1x32xf32>
    %613 = vector.broadcast %612 : vector<1x32xf32> to vector<8x32xf32>
    %614 = arith.addf %610, %613 : vector<8x32xf32>
    %c0_308 = arith.constant 0 : index
    %c7_309 = arith.constant 7 : index
    %c0_310 = arith.constant 0 : index
    %615 = vector.load %arg7[%c0_308, %c7_309, %c0_310] : memref<2x15x64xf32, #tpu.memory_space<vmem>>, vector<1x1x32xf32>
    %616 = vector.shape_cast %615 : vector<1x1x32xf32> to vector<1x32xf32>
    %c0_311 = arith.constant 0 : index
    %c8_312 = arith.constant 8 : index
    %c0_313 = arith.constant 0 : index
    %617 = vector.load %arg7[%c0_311, %c8_312, %c0_313] : memref<2x15x64xf32, #tpu.memory_space<vmem>>, vector<1x1x32xf32>
    %618 = vector.shape_cast %617 : vector<1x1x32xf32> to vector<1x32xf32>
    %cst_314 = arith.constant dense<0.000000e+00> : vector<8xf32>
    %619 = vector.multi_reduction <add>, %614, %cst_314 [1] : vector<8x32xf32> to vector<8xf32>
    %620 = vector.shape_cast %619 : vector<8xf32> to vector<8x1xf32>
    %cst_315 = arith.constant 3.200000e+01 : f32
    %621 = vector.broadcast %cst_315 : f32 to vector<8x1xf32>
    %622 = arith.divf %620, %621 : vector<8x1xf32>
    %623 = vector.broadcast %622 : vector<8x1xf32> to vector<8x32xf32>
    %624 = arith.subf %614, %623 : vector<8x32xf32>
    %625 = arith.mulf %624, %624 : vector<8x32xf32>
    %cst_316 = arith.constant dense<0.000000e+00> : vector<8xf32>
    %626 = vector.multi_reduction <add>, %625, %cst_316 [1] : vector<8x32xf32> to vector<8xf32>
    %627 = vector.shape_cast %626 : vector<8xf32> to vector<8x1xf32>
    %cst_317 = arith.constant 3.200000e+01 : f32
    %628 = vector.broadcast %cst_317 : f32 to vector<8x1xf32>
    %629 = arith.divf %627, %628 : vector<8x1xf32>
    %630 = vector.broadcast %622 : vector<8x1xf32> to vector<8x32xf32>
    %631 = arith.subf %614, %630 : vector<8x32xf32>
    %cst_318 = arith.constant 9.99999974E-6 : f32
    %632 = vector.broadcast %cst_318 : f32 to vector<8x1xf32>
    %633 = arith.addf %629, %632 : vector<8x1xf32>
    %634 = math.rsqrt %633 : vector<8x1xf32>
    %635 = vector.broadcast %634 : vector<8x1xf32> to vector<8x32xf32>
    %636 = arith.mulf %631, %635 : vector<8x32xf32>
    %637 = vector.broadcast %616 : vector<1x32xf32> to vector<8x32xf32>
    %638 = arith.mulf %636, %637 : vector<8x32xf32>
    %639 = vector.broadcast %618 : vector<1x32xf32> to vector<8x32xf32>
    %640 = arith.addf %638, %639 : vector<8x32xf32>
    %c0_319 = arith.constant 0 : index
    %c64_320 = arith.constant 64 : index
    %c0_321 = arith.constant 0 : index
    %641 = vector.load %arg6[%c0_319, %c64_320, %c0_321] : memref<2x128x64xf32, #tpu.memory_space<vmem>>, vector<1x32x64xf32>
    %642 = vector.shape_cast %641 : vector<1x32x64xf32> to vector<32x64xf32>
    %cst_322 = arith.constant dense<0.000000e+00> : vector<8x64xf32>
    %643 = tpu.matmul %640, %642, %cst_322 {dimension_numbers = #tpu.dot_dimension_numbers<[1], [0], [0], [1], [0, 0, 1, 1], [], []>} : vector<8x32xf32>, vector<32x64xf32>, vector<8x64xf32> -> vector<8x64xf32>
    %c0_323 = arith.constant 0 : index
    %c9_324 = arith.constant 9 : index
    %c0_325 = arith.constant 0 : index
    %644 = vector.load %arg7[%c0_323, %c9_324, %c0_325] : memref<2x15x64xf32, #tpu.memory_space<vmem>>, vector<1x1x64xf32>
    %645 = vector.shape_cast %644 : vector<1x1x64xf32> to vector<1x64xf32>
    %646 = vector.broadcast %645 : vector<1x64xf32> to vector<8x64xf32>
    %647 = arith.addf %643, %646 : vector<8x64xf32>
    %cst_326 = arith.constant 0.000000e+00 : f32
    %648 = vector.broadcast %cst_326 : f32 to vector<8x64xf32>
    %649 = arith.maximumf %647, %648 : vector<8x64xf32>
    %c0_327 = arith.constant 0 : index
    %c96_328 = arith.constant 96 : index
    %c0_329 = arith.constant 0 : index
    %650 = vector.load %arg6[%c0_327, %c96_328, %c0_329] : memref<2x128x64xf32, #tpu.memory_space<vmem>>, vector<1x32x64xf32>
    %651 = vector.shape_cast %650 : vector<1x32x64xf32> to vector<32x64xf32>
    %cst_330 = arith.constant dense<0.000000e+00> : vector<8x32xf32>
    %652 = tpu.matmul %649, %651, %cst_330 {dimension_numbers = #tpu.dot_dimension_numbers<[1], [1], [0], [0], [0, 0, 1, 0], [], []>} : vector<8x64xf32>, vector<32x64xf32>, vector<8x32xf32> -> vector<8x32xf32>
    %653 = arith.addf %640, %652 : vector<8x32xf32>
    %c0_331 = arith.constant 0 : index
    %c10_332 = arith.constant 10 : index
    %c0_333 = arith.constant 0 : index
    %654 = vector.load %arg7[%c0_331, %c10_332, %c0_333] : memref<2x15x64xf32, #tpu.memory_space<vmem>>, vector<1x1x32xf32>
    %655 = vector.shape_cast %654 : vector<1x1x32xf32> to vector<1x32xf32>
    %656 = vector.broadcast %655 : vector<1x32xf32> to vector<8x32xf32>
    %657 = arith.addf %653, %656 : vector<8x32xf32>
    %c0_334 = arith.constant 0 : index
    %c11_335 = arith.constant 11 : index
    %c0_336 = arith.constant 0 : index
    %658 = vector.load %arg7[%c0_334, %c11_335, %c0_336] : memref<2x15x64xf32, #tpu.memory_space<vmem>>, vector<1x1x32xf32>
    %659 = vector.shape_cast %658 : vector<1x1x32xf32> to vector<1x32xf32>
    %c0_337 = arith.constant 0 : index
    %c12_338 = arith.constant 12 : index
    %c0_339 = arith.constant 0 : index
    %660 = vector.load %arg7[%c0_337, %c12_338, %c0_339] : memref<2x15x64xf32, #tpu.memory_space<vmem>>, vector<1x1x32xf32>
    %661 = vector.shape_cast %660 : vector<1x1x32xf32> to vector<1x32xf32>
    %cst_340 = arith.constant dense<0.000000e+00> : vector<8xf32>
    %662 = vector.multi_reduction <add>, %657, %cst_340 [1] : vector<8x32xf32> to vector<8xf32>
    %663 = vector.shape_cast %662 : vector<8xf32> to vector<8x1xf32>
    %cst_341 = arith.constant 3.200000e+01 : f32
    %664 = vector.broadcast %cst_341 : f32 to vector<8x1xf32>
    %665 = arith.divf %663, %664 : vector<8x1xf32>
    %666 = vector.broadcast %665 : vector<8x1xf32> to vector<8x32xf32>
    %667 = arith.subf %657, %666 : vector<8x32xf32>
    %668 = arith.mulf %667, %667 : vector<8x32xf32>
    %cst_342 = arith.constant dense<0.000000e+00> : vector<8xf32>
    %669 = vector.multi_reduction <add>, %668, %cst_342 [1] : vector<8x32xf32> to vector<8xf32>
    %670 = vector.shape_cast %669 : vector<8xf32> to vector<8x1xf32>
    %cst_343 = arith.constant 3.200000e+01 : f32
    %671 = vector.broadcast %cst_343 : f32 to vector<8x1xf32>
    %672 = arith.divf %670, %671 : vector<8x1xf32>
    %673 = vector.broadcast %665 : vector<8x1xf32> to vector<8x32xf32>
    %674 = arith.subf %657, %673 : vector<8x32xf32>
    %cst_344 = arith.constant 9.99999974E-6 : f32
    %675 = vector.broadcast %cst_344 : f32 to vector<8x1xf32>
    %676 = arith.addf %672, %675 : vector<8x1xf32>
    %677 = math.rsqrt %676 : vector<8x1xf32>
    %678 = vector.broadcast %677 : vector<8x1xf32> to vector<8x32xf32>
    %679 = arith.mulf %674, %678 : vector<8x32xf32>
    %680 = vector.broadcast %659 : vector<1x32xf32> to vector<8x32xf32>
    %681 = arith.mulf %679, %680 : vector<8x32xf32>
    %682 = vector.broadcast %661 : vector<1x32xf32> to vector<8x32xf32>
    %683 = arith.addf %681, %682 : vector<8x32xf32>
    %c0_345 = arith.constant 0 : index
    %c0_346 = arith.constant 0 : index
    %c0_347 = arith.constant 0 : index
    %684 = vector.load %arg9[%c0_345, %c0_346, %c0_347] : memref<2x32x160xf32, #tpu.memory_space<vmem>>, vector<1x32x160xf32>
    %685 = vector.shape_cast %684 : vector<1x32x160xf32> to vector<32x160xf32>
    %cst_348 = arith.constant dense<0.000000e+00> : vector<8x160xf32>
    %686 = tpu.matmul %683, %685, %cst_348 {dimension_numbers = #tpu.dot_dimension_numbers<[1], [0], [0], [1], [0, 0, 1, 1], [], []>} : vector<8x32xf32>, vector<32x160xf32>, vector<8x160xf32> -> vector<8x160xf32>
    %687 = vector.extract_strided_slice %686 {offsets = [0, 128], sizes = [8, 32], strides = [1, 1]} : vector<8x160xf32> to vector<8x32xf32>
    %c0_349 = arith.constant 0 : index
    %c14_350 = arith.constant 14 : index
    %c0_351 = arith.constant 0 : index
    %688 = vector.load %arg7[%c0_349, %c14_350, %c0_351] : memref<2x15x64xf32, #tpu.memory_space<vmem>>, vector<1x1x32xf32>
    %689 = vector.shape_cast %688 : vector<1x1x32xf32> to vector<1x32xf32>
    %690 = vector.broadcast %689 : vector<1x32xf32> to vector<8x32xf32>
    %691 = arith.addf %687, %690 : vector<8x32xf32>
    %692 = arith.truncf %691 : vector<8x32xf32> to vector<8x32xbf16>
    %cst_352 = arith.constant dense<0.000000e+00> : vector<8x256xf32>
    %693 = tpu.matmul %692, %524, %cst_352 {dimension_numbers = #tpu.dot_dimension_numbers<[1], [0], [0], [1], [0, 0, 1, 1], [], []>} : vector<8x32xbf16>, vector<32x256xbf16>, vector<8x256xf32> -> vector<8x256xf32>
    %694 = arith.negf %693 : vector<8x256xf32>
    %695 = math.exp %694 : vector<8x256xf32>
    %cst_353 = arith.constant 1.000000e+00 : f32
    %696 = vector.broadcast %cst_353 : f32 to vector<8x256xf32>
    %697 = arith.addf %696, %695 : vector<8x256xf32>
    %698 = arith.divf %696, %697 : vector<8x256xf32>
    %cst_354 = arith.constant dense<0.000000e+00> : vector<8xf32>
    %699 = vector.multi_reduction <add>, %698, %cst_354 [1] : vector<8x256xf32> to vector<8xf32>
    %700 = vector.shape_cast %699 : vector<8xf32> to vector<8x1xf32>
    %cst_355 = arith.constant 9.99999997E-7 : f32
    %701 = vector.broadcast %cst_355 : f32 to vector<8x1xf32>
    %702 = arith.addf %701, %700 : vector<8x1xf32>
    %cst_356 = arith.constant 1.000000e+00 : f32
    %703 = vector.broadcast %cst_356 : f32 to vector<8x1xf32>
    %704 = arith.divf %703, %702 : vector<8x1xf32>
    %705 = vector.broadcast %704 : vector<8x1xf32> to vector<8x256xf32>
    %706 = arith.mulf %698, %705 : vector<8x256xf32>
    %707 = arith.truncf %706 : vector<8x256xf32> to vector<8x256xbf16>
    %cst_357 = arith.constant dense<0.000000e+00> : vector<8x32xf32>
    %708 = tpu.matmul %707, %524, %cst_357 {dimension_numbers = #tpu.dot_dimension_numbers<[1], [1], [0], [0], [0, 0, 1, 0], [], []>} : vector<8x256xbf16>, vector<32x256xbf16>, vector<8x32xf32> -> vector<8x32xf32>
    %c1_358 = arith.constant 1 : index
    %c0_359 = arith.constant 0 : index
    %c0_360 = arith.constant 0 : index
    %709 = vector.load %arg6[%c1_358, %c0_359, %c0_360] : memref<2x128x64xf32, #tpu.memory_space<vmem>>, vector<1x32x32xf32>
    %710 = vector.shape_cast %709 : vector<1x32x32xf32> to vector<32x32xf32>
    %cst_361 = arith.constant dense<0.000000e+00> : vector<8x32xf32>
    %711 = tpu.matmul %708, %710, %cst_361 {dimension_numbers = #tpu.dot_dimension_numbers<[1], [0], [0], [1], [0, 0, 1, 1], [], []>} : vector<8x32xf32>, vector<32x32xf32>, vector<8x32xf32> -> vector<8x32xf32>
    %712 = arith.addf %683, %711 : vector<8x32xf32>
    %c1_362 = arith.constant 1 : index
    %c0_363 = arith.constant 0 : index
    %c0_364 = arith.constant 0 : index
    %713 = vector.load %arg7[%c1_362, %c0_363, %c0_364] : memref<2x15x64xf32, #tpu.memory_space<vmem>>, vector<1x1x32xf32>
    %714 = vector.shape_cast %713 : vector<1x1x32xf32> to vector<1x32xf32>
    %715 = vector.broadcast %714 : vector<1x32xf32> to vector<8x32xf32>
    %716 = arith.addf %712, %715 : vector<8x32xf32>
    %c1_365 = arith.constant 1 : index
    %c1_366 = arith.constant 1 : index
    %c0_367 = arith.constant 0 : index
    %717 = vector.load %arg7[%c1_365, %c1_366, %c0_367] : memref<2x15x64xf32, #tpu.memory_space<vmem>>, vector<1x1x32xf32>
    %718 = vector.shape_cast %717 : vector<1x1x32xf32> to vector<1x32xf32>
    %c1_368 = arith.constant 1 : index
    %c2_369 = arith.constant 2 : index
    %c0_370 = arith.constant 0 : index
    %719 = vector.load %arg7[%c1_368, %c2_369, %c0_370] : memref<2x15x64xf32, #tpu.memory_space<vmem>>, vector<1x1x32xf32>
    %720 = vector.shape_cast %719 : vector<1x1x32xf32> to vector<1x32xf32>
    %cst_371 = arith.constant dense<0.000000e+00> : vector<8xf32>
    %721 = vector.multi_reduction <add>, %716, %cst_371 [1] : vector<8x32xf32> to vector<8xf32>
    %722 = vector.shape_cast %721 : vector<8xf32> to vector<8x1xf32>
    %cst_372 = arith.constant 3.200000e+01 : f32
    %723 = vector.broadcast %cst_372 : f32 to vector<8x1xf32>
    %724 = arith.divf %722, %723 : vector<8x1xf32>
    %725 = vector.broadcast %724 : vector<8x1xf32> to vector<8x32xf32>
    %726 = arith.subf %716, %725 : vector<8x32xf32>
    %727 = arith.mulf %726, %726 : vector<8x32xf32>
    %cst_373 = arith.constant dense<0.000000e+00> : vector<8xf32>
    %728 = vector.multi_reduction <add>, %727, %cst_373 [1] : vector<8x32xf32> to vector<8xf32>
    %729 = vector.shape_cast %728 : vector<8xf32> to vector<8x1xf32>
    %cst_374 = arith.constant 3.200000e+01 : f32
    %730 = vector.broadcast %cst_374 : f32 to vector<8x1xf32>
    %731 = arith.divf %729, %730 : vector<8x1xf32>
    %732 = vector.broadcast %724 : vector<8x1xf32> to vector<8x32xf32>
    %733 = arith.subf %716, %732 : vector<8x32xf32>
    %cst_375 = arith.constant 9.99999974E-6 : f32
    %734 = vector.broadcast %cst_375 : f32 to vector<8x1xf32>
    %735 = arith.addf %731, %734 : vector<8x1xf32>
    %736 = math.rsqrt %735 : vector<8x1xf32>
    %737 = vector.broadcast %736 : vector<8x1xf32> to vector<8x32xf32>
    %738 = arith.mulf %733, %737 : vector<8x32xf32>
    %739 = vector.broadcast %718 : vector<1x32xf32> to vector<8x32xf32>
    %740 = arith.mulf %738, %739 : vector<8x32xf32>
    %741 = vector.broadcast %720 : vector<1x32xf32> to vector<8x32xf32>
    %742 = arith.addf %740, %741 : vector<8x32xf32>
    %c1_376 = arith.constant 1 : index
    %c0_377 = arith.constant 0 : index
    %c0_378 = arith.constant 0 : index
    %743 = vector.load %arg8[%c1_376, %c0_377, %c0_378] : memref<2x32x384xf32, #tpu.memory_space<vmem>>, vector<1x32x384xf32>
    %744 = vector.shape_cast %743 : vector<1x32x384xf32> to vector<32x384xf32>
    %cst_379 = arith.constant dense<0.000000e+00> : vector<8x384xf32>
    %745 = tpu.matmul %742, %744, %cst_379 {dimension_numbers = #tpu.dot_dimension_numbers<[1], [0], [0], [1], [0, 0, 1, 1], [], []>} : vector<8x32xf32>, vector<32x384xf32>, vector<8x384xf32> -> vector<8x384xf32>
    %746 = vector.extract_strided_slice %745 {offsets = [0, 0], sizes = [8, 32], strides = [1, 1]} : vector<8x384xf32> to vector<8x32xf32>
    %c1_380 = arith.constant 1 : index
    %c3_381 = arith.constant 3 : index
    %c0_382 = arith.constant 0 : index
    %747 = vector.load %arg7[%c1_380, %c3_381, %c0_382] : memref<2x15x64xf32, #tpu.memory_space<vmem>>, vector<1x1x32xf32>
    %748 = vector.shape_cast %747 : vector<1x1x32xf32> to vector<1x32xf32>
    %749 = vector.broadcast %748 : vector<1x32xf32> to vector<8x32xf32>
    %750 = arith.addf %746, %749 : vector<8x32xf32>
    %751 = vector.extract_strided_slice %745 {offsets = [0, 128], sizes = [8, 32], strides = [1, 1]} : vector<8x384xf32> to vector<8x32xf32>
    %c1_383 = arith.constant 1 : index
    %c4_384 = arith.constant 4 : index
    %c0_385 = arith.constant 0 : index
    %752 = vector.load %arg7[%c1_383, %c4_384, %c0_385] : memref<2x15x64xf32, #tpu.memory_space<vmem>>, vector<1x1x32xf32>
    %753 = vector.shape_cast %752 : vector<1x1x32xf32> to vector<1x32xf32>
    %754 = vector.broadcast %753 : vector<1x32xf32> to vector<8x32xf32>
    %755 = arith.addf %751, %754 : vector<8x32xf32>
    %756 = vector.extract_strided_slice %745 {offsets = [0, 256], sizes = [8, 32], strides = [1, 1]} : vector<8x384xf32> to vector<8x32xf32>
    %c1_386 = arith.constant 1 : index
    %c5_387 = arith.constant 5 : index
    %c0_388 = arith.constant 0 : index
    %757 = vector.load %arg7[%c1_386, %c5_387, %c0_388] : memref<2x15x64xf32, #tpu.memory_space<vmem>>, vector<1x1x32xf32>
    %758 = vector.shape_cast %757 : vector<1x1x32xf32> to vector<1x32xf32>
    %759 = vector.broadcast %758 : vector<1x32xf32> to vector<8x32xf32>
    %760 = arith.addf %756, %759 : vector<8x32xf32>
    %cst_389 = arith.constant dense<0.000000e+00> : vector<8x8xf32>
    %761 = tpu.matmul %750, %755, %cst_389 {dimension_numbers = #tpu.dot_dimension_numbers<[1], [1], [0], [0], [0, 0, 1, 0], [], []>} : vector<8x32xf32>, vector<8x32xf32>, vector<8x8xf32> -> vector<8x8xf32>
    %cst_390 = arith.constant 0.176776692 : f32
    %762 = vector.broadcast %cst_390 : f32 to vector<8x8xf32>
    %763 = arith.mulf %761, %762 : vector<8x8xf32>
    %cst_391 = arith.constant dense<0xFF800000> : vector<8xf32>
    %764 = vector.multi_reduction <maximumf>, %763, %cst_391 [1] : vector<8x8xf32> to vector<8xf32>
    %765 = vector.shape_cast %764 : vector<8xf32> to vector<8x1xf32>
    %766 = vector.broadcast %765 : vector<8x1xf32> to vector<8x8xf32>
    %767 = arith.subf %763, %766 : vector<8x8xf32>
    %768 = math.exp %767 : vector<8x8xf32>
    %cst_392 = arith.constant dense<0.000000e+00> : vector<8xf32>
    %769 = vector.multi_reduction <add>, %768, %cst_392 [1] : vector<8x8xf32> to vector<8xf32>
    %770 = vector.shape_cast %769 : vector<8xf32> to vector<8x1xf32>
    %771 = vector.broadcast %770 : vector<8x1xf32> to vector<8x8xf32>
    %772 = arith.divf %768, %771 : vector<8x8xf32>
    %cst_393 = arith.constant dense<0.000000e+00> : vector<8x32xf32>
    %773 = tpu.matmul %772, %760, %cst_393 {dimension_numbers = #tpu.dot_dimension_numbers<[1], [0], [0], [1], [0, 0, 1, 1], [], []>} : vector<8x8xf32>, vector<8x32xf32>, vector<8x32xf32> -> vector<8x32xf32>
    %c1_394 = arith.constant 1 : index
    %c32_395 = arith.constant 32 : index
    %c0_396 = arith.constant 0 : index
    %774 = vector.load %arg6[%c1_394, %c32_395, %c0_396] : memref<2x128x64xf32, #tpu.memory_space<vmem>>, vector<1x32x32xf32>
    %775 = vector.shape_cast %774 : vector<1x32x32xf32> to vector<32x32xf32>
    %cst_397 = arith.constant dense<0.000000e+00> : vector<8x32xf32>
    %776 = tpu.matmul %773, %775, %cst_397 {dimension_numbers = #tpu.dot_dimension_numbers<[1], [0], [0], [1], [0, 0, 1, 1], [], []>} : vector<8x32xf32>, vector<32x32xf32>, vector<8x32xf32> -> vector<8x32xf32>
    %777 = arith.addf %742, %776 : vector<8x32xf32>
    %c1_398 = arith.constant 1 : index
    %c6_399 = arith.constant 6 : index
    %c0_400 = arith.constant 0 : index
    %778 = vector.load %arg7[%c1_398, %c6_399, %c0_400] : memref<2x15x64xf32, #tpu.memory_space<vmem>>, vector<1x1x32xf32>
    %779 = vector.shape_cast %778 : vector<1x1x32xf32> to vector<1x32xf32>
    %780 = vector.broadcast %779 : vector<1x32xf32> to vector<8x32xf32>
    %781 = arith.addf %777, %780 : vector<8x32xf32>
    %c1_401 = arith.constant 1 : index
    %c7_402 = arith.constant 7 : index
    %c0_403 = arith.constant 0 : index
    %782 = vector.load %arg7[%c1_401, %c7_402, %c0_403] : memref<2x15x64xf32, #tpu.memory_space<vmem>>, vector<1x1x32xf32>
    %783 = vector.shape_cast %782 : vector<1x1x32xf32> to vector<1x32xf32>
    %c1_404 = arith.constant 1 : index
    %c8_405 = arith.constant 8 : index
    %c0_406 = arith.constant 0 : index
    %784 = vector.load %arg7[%c1_404, %c8_405, %c0_406] : memref<2x15x64xf32, #tpu.memory_space<vmem>>, vector<1x1x32xf32>
    %785 = vector.shape_cast %784 : vector<1x1x32xf32> to vector<1x32xf32>
    %cst_407 = arith.constant dense<0.000000e+00> : vector<8xf32>
    %786 = vector.multi_reduction <add>, %781, %cst_407 [1] : vector<8x32xf32> to vector<8xf32>
    %787 = vector.shape_cast %786 : vector<8xf32> to vector<8x1xf32>
    %cst_408 = arith.constant 3.200000e+01 : f32
    %788 = vector.broadcast %cst_408 : f32 to vector<8x1xf32>
    %789 = arith.divf %787, %788 : vector<8x1xf32>
    %790 = vector.broadcast %789 : vector<8x1xf32> to vector<8x32xf32>
    %791 = arith.subf %781, %790 : vector<8x32xf32>
    %792 = arith.mulf %791, %791 : vector<8x32xf32>
    %cst_409 = arith.constant dense<0.000000e+00> : vector<8xf32>
    %793 = vector.multi_reduction <add>, %792, %cst_409 [1] : vector<8x32xf32> to vector<8xf32>
    %794 = vector.shape_cast %793 : vector<8xf32> to vector<8x1xf32>
    %cst_410 = arith.constant 3.200000e+01 : f32
    %795 = vector.broadcast %cst_410 : f32 to vector<8x1xf32>
    %796 = arith.divf %794, %795 : vector<8x1xf32>
    %797 = vector.broadcast %789 : vector<8x1xf32> to vector<8x32xf32>
    %798 = arith.subf %781, %797 : vector<8x32xf32>
    %cst_411 = arith.constant 9.99999974E-6 : f32
    %799 = vector.broadcast %cst_411 : f32 to vector<8x1xf32>
    %800 = arith.addf %796, %799 : vector<8x1xf32>
    %801 = math.rsqrt %800 : vector<8x1xf32>
    %802 = vector.broadcast %801 : vector<8x1xf32> to vector<8x32xf32>
    %803 = arith.mulf %798, %802 : vector<8x32xf32>
    %804 = vector.broadcast %783 : vector<1x32xf32> to vector<8x32xf32>
    %805 = arith.mulf %803, %804 : vector<8x32xf32>
    %806 = vector.broadcast %785 : vector<1x32xf32> to vector<8x32xf32>
    %807 = arith.addf %805, %806 : vector<8x32xf32>
    %c1_412 = arith.constant 1 : index
    %c64_413 = arith.constant 64 : index
    %c0_414 = arith.constant 0 : index
    %808 = vector.load %arg6[%c1_412, %c64_413, %c0_414] : memref<2x128x64xf32, #tpu.memory_space<vmem>>, vector<1x32x64xf32>
    %809 = vector.shape_cast %808 : vector<1x32x64xf32> to vector<32x64xf32>
    %cst_415 = arith.constant dense<0.000000e+00> : vector<8x64xf32>
    %810 = tpu.matmul %807, %809, %cst_415 {dimension_numbers = #tpu.dot_dimension_numbers<[1], [0], [0], [1], [0, 0, 1, 1], [], []>} : vector<8x32xf32>, vector<32x64xf32>, vector<8x64xf32> -> vector<8x64xf32>
    %c1_416 = arith.constant 1 : index
    %c9_417 = arith.constant 9 : index
    %c0_418 = arith.constant 0 : index
    %811 = vector.load %arg7[%c1_416, %c9_417, %c0_418] : memref<2x15x64xf32, #tpu.memory_space<vmem>>, vector<1x1x64xf32>
    %812 = vector.shape_cast %811 : vector<1x1x64xf32> to vector<1x64xf32>
    %813 = vector.broadcast %812 : vector<1x64xf32> to vector<8x64xf32>
    %814 = arith.addf %810, %813 : vector<8x64xf32>
    %cst_419 = arith.constant 0.000000e+00 : f32
    %815 = vector.broadcast %cst_419 : f32 to vector<8x64xf32>
    %816 = arith.maximumf %814, %815 : vector<8x64xf32>
    %c1_420 = arith.constant 1 : index
    %c96_421 = arith.constant 96 : index
    %c0_422 = arith.constant 0 : index
    %817 = vector.load %arg6[%c1_420, %c96_421, %c0_422] : memref<2x128x64xf32, #tpu.memory_space<vmem>>, vector<1x32x64xf32>
    %818 = vector.shape_cast %817 : vector<1x32x64xf32> to vector<32x64xf32>
    %cst_423 = arith.constant dense<0.000000e+00> : vector<8x32xf32>
    %819 = tpu.matmul %816, %818, %cst_423 {dimension_numbers = #tpu.dot_dimension_numbers<[1], [1], [0], [0], [0, 0, 1, 0], [], []>} : vector<8x64xf32>, vector<32x64xf32>, vector<8x32xf32> -> vector<8x32xf32>
    %820 = arith.addf %807, %819 : vector<8x32xf32>
    %c1_424 = arith.constant 1 : index
    %c10_425 = arith.constant 10 : index
    %c0_426 = arith.constant 0 : index
    %821 = vector.load %arg7[%c1_424, %c10_425, %c0_426] : memref<2x15x64xf32, #tpu.memory_space<vmem>>, vector<1x1x32xf32>
    %822 = vector.shape_cast %821 : vector<1x1x32xf32> to vector<1x32xf32>
    %823 = vector.broadcast %822 : vector<1x32xf32> to vector<8x32xf32>
    %824 = arith.addf %820, %823 : vector<8x32xf32>
    %c1_427 = arith.constant 1 : index
    %c11_428 = arith.constant 11 : index
    %c0_429 = arith.constant 0 : index
    %825 = vector.load %arg7[%c1_427, %c11_428, %c0_429] : memref<2x15x64xf32, #tpu.memory_space<vmem>>, vector<1x1x32xf32>
    %826 = vector.shape_cast %825 : vector<1x1x32xf32> to vector<1x32xf32>
    %c1_430 = arith.constant 1 : index
    %c12_431 = arith.constant 12 : index
    %c0_432 = arith.constant 0 : index
    %827 = vector.load %arg7[%c1_430, %c12_431, %c0_432] : memref<2x15x64xf32, #tpu.memory_space<vmem>>, vector<1x1x32xf32>
    %828 = vector.shape_cast %827 : vector<1x1x32xf32> to vector<1x32xf32>
    %cst_433 = arith.constant dense<0.000000e+00> : vector<8xf32>
    %829 = vector.multi_reduction <add>, %824, %cst_433 [1] : vector<8x32xf32> to vector<8xf32>
    %830 = vector.shape_cast %829 : vector<8xf32> to vector<8x1xf32>
    %cst_434 = arith.constant 3.200000e+01 : f32
    %831 = vector.broadcast %cst_434 : f32 to vector<8x1xf32>
    %832 = arith.divf %830, %831 : vector<8x1xf32>
    %833 = vector.broadcast %832 : vector<8x1xf32> to vector<8x32xf32>
    %834 = arith.subf %824, %833 : vector<8x32xf32>
    %835 = arith.mulf %834, %834 : vector<8x32xf32>
    %cst_435 = arith.constant dense<0.000000e+00> : vector<8xf32>
    %836 = vector.multi_reduction <add>, %835, %cst_435 [1] : vector<8x32xf32> to vector<8xf32>
    %837 = vector.shape_cast %836 : vector<8xf32> to vector<8x1xf32>
    %cst_436 = arith.constant 3.200000e+01 : f32
    %838 = vector.broadcast %cst_436 : f32 to vector<8x1xf32>
    %839 = arith.divf %837, %838 : vector<8x1xf32>
    %840 = vector.broadcast %832 : vector<8x1xf32> to vector<8x32xf32>
    %841 = arith.subf %824, %840 : vector<8x32xf32>
    %cst_437 = arith.constant 9.99999974E-6 : f32
    %842 = vector.broadcast %cst_437 : f32 to vector<8x1xf32>
    %843 = arith.addf %839, %842 : vector<8x1xf32>
    %844 = math.rsqrt %843 : vector<8x1xf32>
    %845 = vector.broadcast %844 : vector<8x1xf32> to vector<8x32xf32>
    %846 = arith.mulf %841, %845 : vector<8x32xf32>
    %847 = vector.broadcast %826 : vector<1x32xf32> to vector<8x32xf32>
    %848 = arith.mulf %846, %847 : vector<8x32xf32>
    %849 = vector.broadcast %828 : vector<1x32xf32> to vector<8x32xf32>
    %850 = arith.addf %848, %849 : vector<8x32xf32>
    %c1_438 = arith.constant 1 : index
    %c0_439 = arith.constant 0 : index
    %c0_440 = arith.constant 0 : index
    %851 = vector.load %arg9[%c1_438, %c0_439, %c0_440] : memref<2x32x160xf32, #tpu.memory_space<vmem>>, vector<1x32x160xf32>
    %852 = vector.shape_cast %851 : vector<1x32x160xf32> to vector<32x160xf32>
    %cst_441 = arith.constant dense<0.000000e+00> : vector<8x160xf32>
    %853 = tpu.matmul %850, %852, %cst_441 {dimension_numbers = #tpu.dot_dimension_numbers<[1], [0], [0], [1], [0, 0, 1, 1], [], []>} : vector<8x32xf32>, vector<32x160xf32>, vector<8x160xf32> -> vector<8x160xf32>
    %854 = vector.extract_strided_slice %853 {offsets = [0, 0], sizes = [8, 16], strides = [1, 1]} : vector<8x160xf32> to vector<8x16xf32>
    %c1_442 = arith.constant 1 : index
    %c13_443 = arith.constant 13 : index
    %c0_444 = arith.constant 0 : index
    %855 = vector.load %arg7[%c1_442, %c13_443, %c0_444] : memref<2x15x64xf32, #tpu.memory_space<vmem>>, vector<1x1x16xf32>
    %856 = vector.shape_cast %855 : vector<1x1x16xf32> to vector<1x16xf32>
    %857 = vector.broadcast %856 : vector<1x16xf32> to vector<8x16xf32>
    %858 = arith.addf %854, %857 : vector<8x16xf32>
    %859 = vector.extract_strided_slice %853 {offsets = [0, 128], sizes = [8, 32], strides = [1, 1]} : vector<8x160xf32> to vector<8x32xf32>
    %c1_445 = arith.constant 1 : index
    %c14_446 = arith.constant 14 : index
    %c0_447 = arith.constant 0 : index
    %860 = vector.load %arg7[%c1_445, %c14_446, %c0_447] : memref<2x15x64xf32, #tpu.memory_space<vmem>>, vector<1x1x32xf32>
    %861 = vector.shape_cast %860 : vector<1x1x32xf32> to vector<1x32xf32>
    %862 = vector.broadcast %861 : vector<1x32xf32> to vector<8x32xf32>
    %863 = arith.addf %859, %862 : vector<8x32xf32>
    %864 = arith.truncf %863 : vector<8x32xf32> to vector<8x32xbf16>
    %cst_448 = arith.constant dense<0.000000e+00> : vector<8x256xf32>
    %865 = tpu.matmul %864, %524, %cst_448 {dimension_numbers = #tpu.dot_dimension_numbers<[1], [0], [0], [1], [0, 0, 1, 1], [], []>} : vector<8x32xbf16>, vector<32x256xbf16>, vector<8x256xf32> -> vector<8x256xf32>
    %c1_449 = arith.constant 1 : index
    %c0_450 = arith.constant 0 : index
    %c0_451 = arith.constant 0 : index
    %866 = vector.load %arg10[%c1_449, %c0_450, %c0_451] : memref<2x8x16xf32, #tpu.memory_space<vmem>>, vector<1x8x16xf32>
    %867 = vector.shape_cast %866 : vector<1x8x16xf32> to vector<8x16xf32>
    %868 = vector.shape_cast %858 : vector<8x16xf32> to vector<1x8x16xf32>
    tpu.vector_store %arg10[%c1_449, %c0_450, %c0_451], %868 {strides = array<i32>} : memref<2x8x16xf32, #tpu.memory_space<vmem>>, vector<1x8x16xf32>,
    %c1_452 = arith.constant 1 : index
    %c0_453 = arith.constant 0 : index
    %c0_454 = arith.constant 0 : index
    %869 = vector.load %arg11[%c1_452, %c0_453, %c0_454] : memref<2x8x256xf32, #tpu.memory_space<vmem>>, vector<1x8x256xf32>
    %870 = vector.shape_cast %869 : vector<1x8x256xf32> to vector<8x256xf32>
    %871 = vector.shape_cast %865 : vector<8x256xf32> to vector<1x8x256xf32>
    tpu.vector_store %arg11[%c1_452, %c0_453, %c0_454], %871 {strides = array<i32>} : memref<2x8x256xf32, #tpu.memory_space<vmem>>, vector<1x8x256xf32>,
    return
  }
  func.func @transform_0(%arg0: i32) -> (i32, i32, i32) {
    %c0_i32 = arith.constant 0 : i32
    %c0_i32_0 = arith.constant 0 : i32
    %c0_i32_1 = arith.constant 0 : i32
    return %arg0, %c0_i32, %c0_i32_0 : i32, i32, i32
  }
  func.func @transform_1(%arg0: i32) -> (i32, i32) {
    %c0_i32 = arith.constant 0 : i32
    %c0_i32_0 = arith.constant 0 : i32
    %c0_i32_1 = arith.constant 0 : i32
    return %c0_i32, %c0_i32_0 : i32, i32
  }
  func.func @transform_2(%arg0: i32) -> (i32, i32) {
    %c0_i32 = arith.constant 0 : i32
    %c0_i32_0 = arith.constant 0 : i32
    %c0_i32_1 = arith.constant 0 : i32
    return %c0_i32, %c0_i32_0 : i32, i32
  }
  func.func @transform_3(%arg0: i32) -> (i32, i32) {
    %c0_i32 = arith.constant 0 : i32
    %c0_i32_0 = arith.constant 0 : i32
    %c0_i32_1 = arith.constant 0 : i32
    return %c0_i32, %c0_i32_0 : i32, i32
  }
  func.func @transform_4(%arg0: i32) -> (i32, i32) {
    %c0_i32 = arith.constant 0 : i32
    %c0_i32_0 = arith.constant 0 : i32
    %c0_i32_1 = arith.constant 0 : i32
    return %c0_i32, %c0_i32_0 : i32, i32
  }
  func.func @transform_5(%arg0: i32) -> (i32, i32, i32) {
    %c0_i32 = arith.constant 0 : i32
    %c0_i32_0 = arith.constant 0 : i32
    %c0_i32_1 = arith.constant 0 : i32
    %c0_i32_2 = arith.constant 0 : i32
    return %c0_i32, %c0_i32_0, %c0_i32_1 : i32, i32, i32
  }
  func.func @transform_6(%arg0: i32) -> (i32, i32, i32) {
    %c0_i32 = arith.constant 0 : i32
    %c0_i32_0 = arith.constant 0 : i32
    %c0_i32_1 = arith.constant 0 : i32
    %c0_i32_2 = arith.constant 0 : i32
    return %c0_i32, %c0_i32_0, %c0_i32_1 : i32, i32, i32
  }
  func.func @transform_7(%arg0: i32) -> (i32, i32, i32) {
    %c0_i32 = arith.constant 0 : i32
    %c0_i32_0 = arith.constant 0 : i32
    %c0_i32_1 = arith.constant 0 : i32
    %c0_i32_2 = arith.constant 0 : i32
    return %c0_i32, %c0_i32_0, %c0_i32_1 : i32, i32, i32
  }
  func.func @transform_8(%arg0: i32) -> (i32, i32, i32) {
    %c0_i32 = arith.constant 0 : i32
    %c0_i32_0 = arith.constant 0 : i32
    %c0_i32_1 = arith.constant 0 : i32
    %c0_i32_2 = arith.constant 0 : i32
    return %c0_i32, %c0_i32_0, %c0_i32_1 : i32, i32, i32
  }
  func.func @transform_9(%arg0: i32) -> (i32, i32, i32) {
    %c0_i32 = arith.constant 0 : i32
    %c0_i32_0 = arith.constant 0 : i32
    %c0_i32_1 = arith.constant 0 : i32
    return %arg0, %c0_i32, %c0_i32_0 : i32, i32, i32
  }
  func.func @transform_10(%arg0: i32) -> (i32, i32, i32) {
    %c0_i32 = arith.constant 0 : i32
    %c0_i32_0 = arith.constant 0 : i32
    %c0_i32_1 = arith.constant 0 : i32
    return %arg0, %c0_i32, %c0_i32_0 : i32, i32, i32
  }
}

</mosaic_0001>

<llo_original>
// kernel: tpu_custom_call.1
$region0: #{tpu_custom_call.1}
  #allocation0 [shape = 'u32[]', space=smem, size = 0x4, offset = 0x4, fixed_abs, tag = 'smem constant byte address 0x4 - core index']
  #allocation1 [shape = 'u32[72,128]{1,0:T(1,128)}', space=vmem, size = 0x9000, scoped, tag = 'internal scratch']
  %s0 = inlined_call_operand.vmem [shape: f32[2,32,256], index: 0, kind: input, shape index: {}]
  %s1 = inlined_call_operand.vmem [shape: f32[32,2], index: 1, kind: input, shape index: {}]
  %s2 = inlined_call_operand.vmem [shape: f32[32,5], index: 2, kind: input, shape index: {}]
  %s3 = inlined_call_operand.vmem [shape: bf16[64,32], index: 3, kind: input, shape index: {}]
  %s4 = inlined_call_operand.vmem [shape: f32[8,32], index: 4, kind: input, shape index: {}]
  %s5 = inlined_call_operand.vmem [shape: f32[2,128,64], index: 5, kind: input, shape index: {}]
  %s6 = inlined_call_operand.vmem [shape: f32[2,15,64], index: 6, kind: input, shape index: {}]
  %s7 = inlined_call_operand.vmem [shape: f32[2,32,384], index: 7, kind: input, shape index: {}]
  %s8 = inlined_call_operand.hbm [shape: f32[2,32,160], index: 8, kind: input, shape index: {}]
  %s9 = inlined_call_operand.hbm [shape: f32[2,8,16], index: 9, kind: output, shape index: {0}]
  %s10 = inlined_call_operand.hbm [shape: f32[2,8,256], index: 10, kind: output, shape index: {1}]
  %11 = xla_tuple %s9, %s10
  %s12 = sld [smem:[#allocation0]]
  $region58: #{tpu_custom_call.1} parent=0
    _
  %s14 = ssub.s32 1, %s12
  %s15 = scalar_select 0, %s14, %s12
  $region1: #{tpu_custom_call.1} parent=0
    #allocation2 [shape = 'u8[65536]{0}', space=vmem, size = 0x10000, scoped, tag = 'input window, operand 8, single buffered']
    #allocation3 [shape = 's32[1]{0}', space=sflag, size = 0x4, scoped, tag = 'scoped memory for tpu_custom_call.1']
    #allocation4 [shape = 's32[1]{0}', space=sflag, size = 0x4, scoped, tag = 'scoped memory for tpu_custom_call.1']
    #allocation5 [shape = 'u8[8192]{0}', space=vmem, size = 0x2000, scoped, tag = 'output window, operand 0, single buffered']
    #allocation6 [shape = 'u8[16384]{0}', space=vmem, size = 0x4000, scoped, tag = 'output window, operand 1, single buffered']
    #allocation7 [shape = 's32[1]{0}', space=sflag, size = 0x4, scoped, tag = 'scoped memory for tpu_custom_call.1']
    %16 = vsyncpa [#allocation3], 0
    %17 = vsyncpa [#allocation4], 0
    %18 = vsyncpa [#allocation7], 0
    // Predicated region
    $region2: #{tpu_custom_call.1} parent=1 // pred_check
      _
    $region3: #{tpu_custom_call.1} parent=1 // pred_check_branch
      %20 = sbr.rel (0) target = $region5
    $region4: #{tpu_custom_call.1} parent=1 // pred_region
      _
    $region5: #{tpu_custom_call.1} parent=1 // pred_fallthru
      _
    // Predicated region
    $region6: #{tpu_custom_call.1} parent=1 // pred_check
      _
    $region7: #{tpu_custom_call.1} parent=1 // pred_check_branch
      %22 = sbr.rel (0) target = $region9
    $region8: #{tpu_custom_call.1} parent=1 // pred_region
      _
    $region9: #{tpu_custom_call.1} parent=1 // pred_fallthru
      _
    // Predicated region
    $region10: #{tpu_custom_call.1} parent=1 // pred_check
      _
    $region11: #{tpu_custom_call.1} parent=1 // pred_check_branch
      %24 = sbr.rel (0) target = $region13
    $region12: #{tpu_custom_call.1} parent=1 // pred_region
      _
    $region13: #{tpu_custom_call.1} parent=1 // pred_fallthru
      _
    // Predicated region
    $region14: #{tpu_custom_call.1} parent=1 // pred_check
      _
    $region15: #{tpu_custom_call.1} parent=1 // pred_check_branch
      %26 = sbr.rel (0) target = $region17
    $region16: #{tpu_custom_call.1} parent=1 // pred_region
      _
    $region17: #{tpu_custom_call.1} parent=1 // pred_fallthru
      _
    // Predicated region
    $region18: #{tpu_custom_call.1} parent=1 // pred_check
      _
    $region19: #{tpu_custom_call.1} parent=1 // pred_check_branch
      %28 = sbr.rel (0) target = $region21
    $region20: #{tpu_custom_call.1} parent=1 // pred_region
      _
    $region21: #{tpu_custom_call.1} parent=1 // pred_fallthru
      _
    // Predicated region
    $region22: #{tpu_custom_call.1} parent=1 // pred_check
      _
    $region23: #{tpu_custom_call.1} parent=1 // pred_check_branch
      %30 = sbr.rel (0) target = $region25
    $region24: #{tpu_custom_call.1} parent=1 // pred_region
      _
    $region25: #{tpu_custom_call.1} parent=1 // pred_fallthru
      _
    // Predicated region
    $region26: #{tpu_custom_call.1} parent=1 // pred_check
      _
    $region27: #{tpu_custom_call.1} parent=1 // pred_check_branch
      %32 = sbr.rel (0) target = $region29
    $region28: #{tpu_custom_call.1} parent=1 // pred_region
      _
    $region29: #{tpu_custom_call.1} parent=1 // pred_fallthru
      _
    // Predicated region
    $region30: #{tpu_custom_call.1} parent=1 // pred_check
      _
    $region31: #{tpu_custom_call.1} parent=1 // pred_check_branch
      %34 = sbr.rel (0) target = $region33
    $region32: #{tpu_custom_call.1} parent=1 // pred_region
      _
    $region33: #{tpu_custom_call.1} parent=1 // pred_fallthru
      _
    // Predicated region
    $region34: #{tpu_custom_call.1} parent=1 // pred_check
      _
    $region35: #{tpu_custom_call.1} parent=1 // pred_check_branch
      %36 = sbr.rel (0) target = $region37
    $region36: #{tpu_custom_call.1} parent=1 // pred_region
      %38 = vsyncadd [#allocation3], 0
      %s39 = sshll.u32 %s8, 4
      %s40 = int_to_ptr.hbm [resolvable:$true] %s39
      %s41 = sshll.u32 [#allocation2], 4
      %s42 = int_to_ptr.vmem [resolvable:$true] %s41
      %47 = dma.hbm_to_vmem [thread:$0]  %s40, 2048, %s42, [#allocation3], 256, 256, 16
    $region37: #{tpu_custom_call.1} parent=1 // pred_fallthru
      _
    // Predicated region
    $region38: #{tpu_custom_call.1} parent=1 // pred_check
      _
    $region39: #{tpu_custom_call.1} parent=1 // pred_check_branch
      %49 = sbr.rel (0) target = $region41
    $region40: #{tpu_custom_call.1} parent=1 // pred_region
      %51 = dma.done [#allocation3], 2048
    $region41: #{tpu_custom_call.1} parent=1 // pred_fallthru
      _
    %v53 = vld [vmem:[%s4] sm:$0xff]
    %v54 = vpack.c.bf16 %v53, %v53
    %v55 = vld [vmem:[%s0] sm:$0xff]
    %v56 = vld [vmem:[%s0 + $0x8] sm:$0xff]
    %v57 = vld [vmem:[%s0 + $0x10] sm:$0xff]
    %v58 = vld [vmem:[%s0 + $0x18] sm:$0xff]
    %v59 = vld [vmem:[%s0 + $0x20] sm:$0xff]
    %v60 = vld [vmem:[%s0 + $0x28] sm:$0xff]
    %v61 = vld [vmem:[%s0 + $0x30] sm:$0xff]
    %v62 = vld [vmem:[%s0 + $0x38] sm:$0xff]
    %v63 = vld [vmem:[%s1] sm:$0xff]
    %v64 = vld [vmem:[%s1 + $0x8] sm:$0xff]
    %v65 = vld [vmem:[%s1 + $0x10] sm:$0xff]
    %v66 = vld [vmem:[%s1 + $0x18] sm:$0xff]
    %v67 = vadd.f32 %v55, %v56
    %68 = vadd.xlane.f32.xlu0 %v67
    %v69 = vpop.xlane.xlu0 %68
    %v70 = vadd.f32 %v57, %v58
    %71 = vadd.xlane.f32.xlu0 %v70
    %v72 = vpop.xlane.xlu0 %71
    %v73 = vadd.f32 %v59, %v60
    %74 = vadd.xlane.f32.xlu0 %v73
    %v75 = vpop.xlane.xlu0 %74
    %v76 = vadd.f32 %v61, %v62
    %77 = vadd.xlane.f32.xlu0 %v76
    %v78 = vpop.xlane.xlu0 %77
    %v79 = vrcp.pop 256.0
    %v80 = vmul.f32 256.0, %v79
    %v81 = vsub.f32 1.0, %v80
    %v82 = vmul.f32 %v79, %v81
    %v83 = vadd.f32 %v79, %v82
    %vm84 = vweird.f32 %v79
    %v85 = vsel %vm84, %v79, %v83
    %v86 = vmul.f32 %v69, %v85
    %v87 = vmul.f32 %v72, %v85
    %v88 = vmul.f32 %v75, %v85
    %v89 = vmul.f32 %v78, %v85
    %v90 = vsub.f32 %v55, %v86
    %v91 = vsub.f32 %v56, %v86
    %v92 = vsub.f32 %v57, %v87
    %v93 = vsub.f32 %v58, %v87
    %v94 = vsub.f32 %v59, %v88
    %v95 = vsub.f32 %v60, %v88
    %v96 = vsub.f32 %v61, %v89
    %v97 = vsub.f32 %v62, %v89
    %v98 = vmul.f32 %v90, %v90
    %v99 = vmul.f32 %v91, %v91
    %v100 = vmul.f32 %v92, %v92
    %v101 = vmul.f32 %v93, %v93
    %v102 = vmul.f32 %v94, %v94
    %v103 = vmul.f32 %v95, %v95
    %v104 = vmul.f32 %v96, %v96
    %v105 = vmul.f32 %v97, %v97
    %v106 = vadd.f32 %v98, %v99
    %107 = vadd.xlane.f32.xlu0 %v106
    %v108 = vpop.xlane.xlu0 %107
    %v109 = vadd.f32 %v100, %v101
    %110 = vadd.xlane.f32.xlu0 %v109
    %v111 = vpop.xlane.xlu0 %110
    %v112 = vadd.f32 %v102, %v103
    %113 = vadd.xlane.f32.xlu0 %v112
    %v114 = vpop.xlane.xlu0 %113
    %v115 = vadd.f32 %v104, %v105
    %116 = vadd.xlane.f32.xlu0 %v115
    %v117 = vpop.xlane.xlu0 %116
    %v118 = vmul.f32 %v108, %v85
    %v119 = vmul.f32 %v111, %v85
    %v120 = vmul.f32 %v114, %v85
    %v121 = vmul.f32 %v117, %v85
    %v122 = vadd.f32 %v118, 1e-05
    %v123 = vadd.f32 %v119, 1e-05
    %v124 = vadd.f32 %v120, 1e-05
    %v125 = vadd.f32 %v121, 1e-05
    %v126 = vrsqrt.pop %v122
    %v127 = vmul.f32 %v126, %v122
    %v128 = vmul.f32 %v127, %v126
    %v129 = vmul.f32 0.5, %v128
    %v130 = vsub.f32 1.5, %v129
    %v131 = vmul.f32 %v126, %v130
    %vm132 = vweird.f32 %v122
    %vm133 = vweird.f32 %v126
    %vm134 = vmor %vm132, %vm133
    %v135 = vsel %vm134, %v126, %v131
    %v136 = vrsqrt.pop %v123
    %v137 = vmul.f32 %v136, %v123
    %v138 = vmul.f32 %v137, %v136
    %v139 = vmul.f32 0.5, %v138
    %v140 = vsub.f32 1.5, %v139
    %v141 = vmul.f32 %v136, %v140
    %vm142 = vweird.f32 %v123
    %vm143 = vweird.f32 %v136
    %vm144 = vmor %vm142, %vm143
    %v145 = vsel %vm144, %v136, %v141
    %v146 = vrsqrt.pop %v124
    %v147 = vmul.f32 %v146, %v124
    %v148 = vmul.f32 %v147, %v146
    %v149 = vmul.f32 0.5, %v148
    %v150 = vsub.f32 1.5, %v149
    %v151 = vmul.f32 %v146, %v150
    %vm152 = vweird.f32 %v124
    %vm153 = vweird.f32 %v146
    %vm154 = vmor %vm152, %vm153
    %v155 = vsel %vm154, %v146, %v151
    %v156 = vrsqrt.pop %v125
    %v157 = vmul.f32 %v156, %v125
    %v158 = vmul.f32 %v157, %v156
    %v159 = vmul.f32 0.5, %v158
    %v160 = vsub.f32 1.5, %v159
    %v161 = vmul.f32 %v156, %v160
    %vm162 = vweird.f32 %v125
    %vm163 = vweird.f32 %v156
    %vm164 = vmor %vm162, %vm163
    %v165 = vsel %vm164, %v156, %v161
    %v166 = vmul.f32 %v90, %v135
    %v167 = vmul.f32 %v91, %v135
    %v168 = vmul.f32 %v92, %v145
    %v169 = vmul.f32 %v93, %v145
    %v170 = vmul.f32 %v94, %v155
    %v171 = vmul.f32 %v95, %v155
    %v172 = vmul.f32 %v96, %v165
    %v173 = vmul.f32 %v97, %v165
    %175 = vset.pattern.permute.xlu0 0
    %176 = vperm.xlu0 %175, %v63
    %v177 = vpop.permute.xlu0 %176
    %180 = vset.pattern.permute.xlu0 0
    %181 = vperm.xlu0 %180, %v64
    %v182 = vpop.permute.xlu0 %181
    %185 = vset.pattern.permute.xlu0 0
    %186 = vperm.xlu0 %185, %v65
    %v187 = vpop.permute.xlu0 %186
    %190 = vset.pattern.permute.xlu0 0
    %191 = vperm.xlu0 %190, %v66
    %v192 = vpop.permute.xlu0 %191
    %v194 = vmul.f32 %v166, %v177
    %v195 = vmul.f32 %v167, %v177
    %v196 = vmul.f32 %v168, %v182
    %v197 = vmul.f32 %v169, %v182
    %v198 = vmul.f32 %v170, %v187
    %v199 = vmul.f32 %v171, %v187
    %v200 = vmul.f32 %v172, %v192
    %v201 = vmul.f32 %v173, %v192
    %202 = vset.pattern.permute.xlu0 1
    %203 = vperm.xlu0 %202, %v63
    %v204 = vpop.permute.xlu0 %203
    %206 = vset.pattern.permute.xlu0 1
    %207 = vperm.xlu0 %206, %v64
    %v208 = vpop.permute.xlu0 %207
    %210 = vset.pattern.permute.xlu0 1
    %211 = vperm.xlu0 %210, %v65
    %v212 = vpop.permute.xlu0 %211
    %214 = vset.pattern.permute.xlu0 1
    %215 = vperm.xlu0 %214, %v66
    %v216 = vpop.permute.xlu0 %215
    %v218 = vadd.f32 %v194, %v204
    %v219 = vadd.f32 %v195, %v204
    %v220 = vadd.f32 %v196, %v208
    %v221 = vadd.f32 %v197, %v208
    %v222 = vadd.f32 %v198, %v212
    %v223 = vadd.f32 %v199, %v212
    %v224 = vadd.f32 %v200, %v216
    %v225 = vadd.f32 %v201, %v216
    %v226 = vmax.f32 %v218, 0.0
    %v227 = vmax.f32 %v219, 0.0
    %v228 = vmax.f32 %v220, 0.0
    %v229 = vmax.f32 %v221, 0.0
    %v230 = vmax.f32 %v222, 0.0
    %v231 = vmax.f32 %v223, 0.0
    %v232 = vmax.f32 %v224, 0.0
    %v233 = vmax.f32 %v225, 0.0
    %v234 = vld [vmem:[%s3] sm:$0xf]
    %v235 = vld [vmem:[%s3 + $0x4] sm:$0xf]
    %v236 = vld [vmem:[%s3 + $0x8] sm:$0xf]
    %v237 = vld [vmem:[%s3 + $0xc] sm:$0xf]
    %v238 = vpack.c.bf16 %v228, %v226
    %v239 = vpack.c.bf16 %v229, %v227
    %v240 = vpack.c.bf16 %v232, %v230
    %v241 = vpack.c.bf16 %v233, %v231
    %v246 = vunpack.c.l.b16 %v234
    %v247 = vunpack.c.l.b16 %v235
    %v248 = vunpack.c.l.b16 %v236
    %v249 = vunpack.c.l.b16 %v237
    %v250 = vpack.c.b16 %v247, %v246
    %v251 = vpack.c.b16 %v249, %v248
    %vm252 = vcmask 261120
    %v254 = vsel %vm252, %v250, 0
    %v257 = vsel %vm252, %v251, 0
    %259 = vmatpush.bf16.msra.mxu0 0
    %260 = vmatpush.bf16.msra.mxu0 0
    %261 = vmatpush.bf16.msra.mxu0 0
    %262 = vmatpush.bf16.msra.mxu0 0
    %263 = vmatpush.bf16.msra.mxu0 0
    %264 = vmatpush.bf16.msra.mxu0 0
    %265 = vmatpush.bf16.msra.mxu0 %v240
    %266 = vmatpush.bf16.msra.mxu0 %v238
    %267 = vmatmul.bf16.gmra.mxu0 %v254
    %v268 = vpop.f32.mrf.mxu0
    %v269 = vadd.f32 0.0, %v268
    %v270 = vpop.f32.mrf.mxu0
    %v271 = vadd.f32 0.0, %v270
    %272 = vmatmul.bf16.gmra.mxu0 %v257
    %v273 = vpop.f32.mrf.mxu0
    %v274 = vadd.f32 0.0, %v273
    %v275 = vpop.f32.mrf.mxu0
    %v276 = vadd.f32 0.0, %v275
    %277 = vdwg.mxu0
    %278 = vmatpush.bf16.msra.mxu0 0
    %279 = vmatpush.bf16.msra.mxu0 0
    %280 = vmatpush.bf16.msra.mxu0 0
    %281 = vmatpush.bf16.msra.mxu0 0
    %282 = vmatpush.bf16.msra.mxu0 0
    %283 = vmatpush.bf16.msra.mxu0 0
    %284 = vmatpush.bf16.msra.mxu0 %v241
    %285 = vmatpush.bf16.msra.mxu0 %v239
    %286 = vmatmul.bf16.gmra.mxu0 %v254
    %v287 = vpop.f32.mrf.mxu0
    %v288 = vadd.f32 0.0, %v287
    %v289 = vpop.f32.mrf.mxu0
    %v290 = vadd.f32 0.0, %v289
    %291 = vmatmul.bf16.gmra.mxu0 %v257
    %v292 = vpop.f32.mrf.mxu0
    %v293 = vadd.f32 0.0, %v292
    %v294 = vpop.f32.mrf.mxu0
    %v295 = vadd.f32 0.0, %v294
    %296 = vdwg.mxu0
    %v297 = vld [vmem:[%s2] sm:$0xff]
    %v298 = vld [vmem:[%s2 + $0x8] sm:$0xff]
    %v299 = vld [vmem:[%s2 + $0x10] sm:$0xff]
    %v300 = vld [vmem:[%s2 + $0x18] sm:$0xff]
    %v301 = vadd.f32 %v269, %v288
    %302 = vadd.xlane.f32.xlu0 %v301
    %v303 = vpop.xlane.xlu0 %302
    %v304 = vadd.f32 %v271, %v290
    %305 = vadd.xlane.f32.xlu0 %v304
    %v306 = vpop.xlane.xlu0 %305
    %v307 = vadd.f32 %v274, %v293
    %308 = vadd.xlane.f32.xlu0 %v307
    %v309 = vpop.xlane.xlu0 %308
    %v310 = vadd.f32 %v276, %v295
    %311 = vadd.xlane.f32.xlu0 %v310
    %v312 = vpop.xlane.xlu0 %311
    %v313 = vmul.f32 %v303, %v85
    %v314 = vmul.f32 %v306, %v85
    %v315 = vmul.f32 %v309, %v85
    %v316 = vmul.f32 %v312, %v85
    %v317 = vsub.f32 %v269, %v313
    %v318 = vsub.f32 %v288, %v313
    %v319 = vsub.f32 %v271, %v314
    %v320 = vsub.f32 %v290, %v314
    %v321 = vsub.f32 %v274, %v315
    %v322 = vsub.f32 %v293, %v315
    %v323 = vsub.f32 %v276, %v316
    %v324 = vsub.f32 %v295, %v316
    %v325 = vmul.f32 %v317, %v317
    %v326 = vmul.f32 %v318, %v318
    %v327 = vmul.f32 %v319, %v319
    %v328 = vmul.f32 %v320, %v320
    %v329 = vmul.f32 %v321, %v321
    %v330 = vmul.f32 %v322, %v322
    %v331 = vmul.f32 %v323, %v323
    %v332 = vmul.f32 %v324, %v324
    %v333 = vadd.f32 %v325, %v326
    %334 = vadd.xlane.f32.xlu0 %v333
    %v335 = vpop.xlane.xlu0 %334
    %v336 = vadd.f32 %v327, %v328
    %337 = vadd.xlane.f32.xlu0 %v336
    %v338 = vpop.xlane.xlu0 %337
    %v339 = vadd.f32 %v329, %v330
    %340 = vadd.xlane.f32.xlu0 %v339
    %v341 = vpop.xlane.xlu0 %340
    %v342 = vadd.f32 %v331, %v332
    %343 = vadd.xlane.f32.xlu0 %v342
    %v344 = vpop.xlane.xlu0 %343
    %v345 = vmul.f32 %v335, %v85
    %v346 = vmul.f32 %v338, %v85
    %v347 = vmul.f32 %v341, %v85
    %v348 = vmul.f32 %v344, %v85
    %v349 = vadd.f32 %v345, 1e-05
    %v350 = vadd.f32 %v346, 1e-05
    %v351 = vadd.f32 %v347, 1e-05
    %v352 = vadd.f32 %v348, 1e-05
    %v353 = vrsqrt.pop %v349
    %v354 = vmul.f32 %v353, %v349
    %v355 = vmul.f32 %v354, %v353
    %v356 = vmul.f32 0.5, %v355
    %v357 = vsub.f32 1.5, %v356
    %v358 = vmul.f32 %v353, %v357
    %vm359 = vweird.f32 %v349
    %vm360 = vweird.f32 %v353
    %vm361 = vmor %vm359, %vm360
    %v362 = vsel %vm361, %v353, %v358
    %v363 = vrsqrt.pop %v350
    %v364 = vmul.f32 %v363, %v350
    %v365 = vmul.f32 %v364, %v363
    %v366 = vmul.f32 0.5, %v365
    %v367 = vsub.f32 1.5, %v366
    %v368 = vmul.f32 %v363, %v367
    %vm369 = vweird.f32 %v350
    %vm370 = vweird.f32 %v363
    %vm371 = vmor %vm369, %vm370
    %v372 = vsel %vm371, %v363, %v368
    %v373 = vrsqrt.pop %v351
    %v374 = vmul.f32 %v373, %v351
    %v375 = vmul.f32 %v374, %v373
    %v376 = vmul.f32 0.5, %v375
    %v377 = vsub.f32 1.5, %v376
    %v378 = vmul.f32 %v373, %v377
    %vm379 = vweird.f32 %v351
    %vm380 = vweird.f32 %v373
    %vm381 = vmor %vm379, %vm380
    %v382 = vsel %vm381, %v373, %v378
    %v383 = vrsqrt.pop %v352
    %v384 = vmul.f32 %v383, %v352
    %v385 = vmul.f32 %v384, %v383
    %v386 = vmul.f32 0.5, %v385
    %v387 = vsub.f32 1.5, %v386
    %v388 = vmul.f32 %v383, %v387
    %vm389 = vweird.f32 %v352
    %vm390 = vweird.f32 %v383
    %vm391 = vmor %vm389, %vm390
    %v392 = vsel %vm391, %v383, %v388
    %v393 = vmul.f32 %v317, %v362
    %v394 = vmul.f32 %v318, %v362
    %v395 = vmul.f32 %v319, %v372
    %v396 = vmul.f32 %v320, %v372
    %v397 = vmul.f32 %v321, %v382
    %v398 = vmul.f32 %v322, %v382
    %v399 = vmul.f32 %v323, %v392
    %v400 = vmul.f32 %v324, %v392
    %402 = vset.pattern.permute.xlu0 0
    %403 = vperm.xlu0 %402, %v297
    %v404 = vpop.permute.xlu0 %403
    %407 = vset.pattern.permute.xlu0 0
    %408 = vperm.xlu0 %407, %v298
    %v409 = vpop.permute.xlu0 %408
    %412 = vset.pattern.permute.xlu0 0
    %413 = vperm.xlu0 %412, %v299
    %v414 = vpop.permute.xlu0 %413
    %417 = vset.pattern.permute.xlu0 0
    %418 = vperm.xlu0 %417, %v300
    %v419 = vpop.permute.xlu0 %418
    %v421 = vmul.f32 %v393, %v404
    %v422 = vmul.f32 %v394, %v404
    %v423 = vmul.f32 %v395, %v409
    %v424 = vmul.f32 %v396, %v409
    %v425 = vmul.f32 %v397, %v414
    %v426 = vmul.f32 %v398, %v414
    %v427 = vmul.f32 %v399, %v419
    %v428 = vmul.f32 %v400, %v419
    %429 = vset.pattern.permute.xlu0 1
    %430 = vperm.xlu0 %429, %v297
    %v431 = vpop.permute.xlu0 %430
    %433 = vset.pattern.permute.xlu0 1
    %434 = vperm.xlu0 %433, %v298
    %v435 = vpop.permute.xlu0 %434
    %437 = vset.pattern.permute.xlu0 1
    %438 = vperm.xlu0 %437, %v299
    %v439 = vpop.permute.xlu0 %438
    %441 = vset.pattern.permute.xlu0 1
    %442 = vperm.xlu0 %441, %v300
    %v443 = vpop.permute.xlu0 %442
    %v445 = vadd.f32 %v421, %v431
    %v446 = vadd.f32 %v422, %v431
    %v447 = vadd.f32 %v423, %v435
    %v448 = vadd.f32 %v424, %v435
    %v449 = vadd.f32 %v425, %v439
    %v450 = vadd.f32 %v426, %v439
    %v451 = vadd.f32 %v427, %v443
    %v452 = vadd.f32 %v428, %v443
    %v453 = vmax.f32 %v445, 0.0
    %v454 = vmax.f32 %v446, 0.0
    %v455 = vmax.f32 %v447, 0.0
    %v456 = vmax.f32 %v448, 0.0
    %v457 = vmax.f32 %v449, 0.0
    %v458 = vmax.f32 %v450, 0.0
    %v459 = vmax.f32 %v451, 0.0
    %v460 = vmax.f32 %v452, 0.0
    %v461 = vld [vmem:[%s3 + $0x10] sm:$0xf]
    %v462 = vld [vmem:[%s3 + $0x14] sm:$0xf]
    %v463 = vld [vmem:[%s3 + $0x18] sm:$0xf]
    %v464 = vld [vmem:[%s3 + $0x1c] sm:$0xf]
    %v465 = vpack.c.bf16 %v455, %v453
    %v466 = vpack.c.bf16 %v456, %v454
    %v467 = vpack.c.bf16 %v459, %v457
    %v468 = vpack.c.bf16 %v460, %v458
    %469 = vset.pattern.permute.xlu0 2
    %470 = vperm.xlu0 %469, %v297
    %v471 = vpop.permute.xlu0 %470
    %473 = vset.pattern.permute.xlu0 2
    %474 = vperm.xlu0 %473, %v298
    %v475 = vpop.permute.xlu0 %474
    %477 = vset.pattern.permute.xlu0 2
    %478 = vperm.xlu0 %477, %v299
    %v479 = vpop.permute.xlu0 %478
    %481 = vset.pattern.permute.xlu0 2
    %482 = vperm.xlu0 %481, %v300
    %v483 = vpop.permute.xlu0 %482
    %v489 = vunpack.c.l.b16 %v461
    %v490 = vunpack.c.l.b16 %v462
    %v491 = vunpack.c.l.b16 %v463
    %v492 = vunpack.c.l.b16 %v464
    %v493 = vpack.c.b16 %v490, %v489
    %v494 = vpack.c.b16 %v492, %v491
    %v496 = vsel %vm252, %v493, 0
    %v499 = vsel %vm252, %v494, 0
    %501 = vmatpush.bf16.msra.mxu0 0
    %502 = vmatpush.bf16.msra.mxu0 0
    %503 = vmatpush.bf16.msra.mxu0 0
    %504 = vmatpush.bf16.msra.mxu0 0
    %505 = vmatpush.bf16.msra.mxu0 0
    %506 = vmatpush.bf16.msra.mxu0 0
    %507 = vmatpush.bf16.msra.mxu0 %v467
    %508 = vmatpush.bf16.msra.mxu0 %v465
    %509 = vmatmul.bf16.gmra.mxu0 %v496
    %v510 = vpop.f32.mrf.mxu0
    %v511 = vadd.f32 %v471, %v510
    %v512 = vpop.f32.mrf.mxu0
    %v513 = vadd.f32 %v475, %v512
    %514 = vmatmul.bf16.gmra.mxu0 %v499
    %v515 = vpop.f32.mrf.mxu0
    %v516 = vadd.f32 %v479, %v515
    %v517 = vpop.f32.mrf.mxu0
    %v518 = vadd.f32 %v483, %v517
    %519 = vdwg.mxu0
    %520 = vmatpush.bf16.msra.mxu0 0
    %521 = vmatpush.bf16.msra.mxu0 0
    %522 = vmatpush.bf16.msra.mxu0 0
    %523 = vmatpush.bf16.msra.mxu0 0
    %524 = vmatpush.bf16.msra.mxu0 0
    %525 = vmatpush.bf16.msra.mxu0 0
    %526 = vmatpush.bf16.msra.mxu0 %v468
    %527 = vmatpush.bf16.msra.mxu0 %v466
    %528 = vmatmul.bf16.gmra.mxu0 %v496
    %v529 = vpop.f32.mrf.mxu0
    %v530 = vadd.f32 %v471, %v529
    %v531 = vpop.f32.mrf.mxu0
    %v532 = vadd.f32 %v475, %v531
    %533 = vmatmul.bf16.gmra.mxu0 %v499
    %v534 = vpop.f32.mrf.mxu0
    %v535 = vadd.f32 %v479, %v534
    %v536 = vpop.f32.mrf.mxu0
    %v537 = vadd.f32 %v483, %v536
    %538 = vdwg.mxu0
    %v539 = vadd.f32 %v511, %v530
    %540 = vadd.xlane.f32.xlu0 %v539
    %v541 = vpop.xlane.xlu0 %540
    %v542 = vadd.f32 %v513, %v532
    %543 = vadd.xlane.f32.xlu0 %v542
    %v544 = vpop.xlane.xlu0 %543
    %v545 = vadd.f32 %v516, %v535
    %546 = vadd.xlane.f32.xlu0 %v545
    %v547 = vpop.xlane.xlu0 %546
    %v548 = vadd.f32 %v518, %v537
    %549 = vadd.xlane.f32.xlu0 %v548
    %v550 = vpop.xlane.xlu0 %549
    %v551 = vmul.f32 %v541, %v85
    %v552 = vmul.f32 %v544, %v85
    %v553 = vmul.f32 %v547, %v85
    %v554 = vmul.f32 %v550, %v85
    %v555 = vsub.f32 %v511, %v551
    %v556 = vsub.f32 %v530, %v551
    %v557 = vsub.f32 %v513, %v552
    %v558 = vsub.f32 %v532, %v552
    %v559 = vsub.f32 %v516, %v553
    %v560 = vsub.f32 %v535, %v553
    %v561 = vsub.f32 %v518, %v554
    %v562 = vsub.f32 %v537, %v554
    %v563 = vmul.f32 %v555, %v555
    %v564 = vmul.f32 %v556, %v556
    %v565 = vmul.f32 %v557, %v557
    %v566 = vmul.f32 %v558, %v558
    %v567 = vmul.f32 %v559, %v559
    %v568 = vmul.f32 %v560, %v560
    %v569 = vmul.f32 %v561, %v561
    %v570 = vmul.f32 %v562, %v562
    %v571 = vadd.f32 %v563, %v564
    %572 = vadd.xlane.f32.xlu0 %v571
    %v573 = vpop.xlane.xlu0 %572
    %v574 = vadd.f32 %v565, %v566
    %575 = vadd.xlane.f32.xlu0 %v574
    %v576 = vpop.xlane.xlu0 %575
    %v577 = vadd.f32 %v567, %v568
    %578 = vadd.xlane.f32.xlu0 %v577
    %v579 = vpop.xlane.xlu0 %578
    %v580 = vadd.f32 %v569, %v570
    %581 = vadd.xlane.f32.xlu0 %v580
    %v582 = vpop.xlane.xlu0 %581
    %v583 = vmul.f32 %v573, %v85
    %v584 = vmul.f32 %v576, %v85
    %v585 = vmul.f32 %v579, %v85
    %v586 = vmul.f32 %v582, %v85
    %v587 = vadd.f32 %v583, 1e-05
    %v588 = vadd.f32 %v584, 1e-05
    %v589 = vadd.f32 %v585, 1e-05
    %v590 = vadd.f32 %v586, 1e-05
    %v591 = vrsqrt.pop %v587
    %v592 = vmul.f32 %v591, %v587
    %v593 = vmul.f32 %v592, %v591
    %v594 = vmul.f32 0.5, %v593
    %v595 = vsub.f32 1.5, %v594
    %v596 = vmul.f32 %v591, %v595
    %vm597 = vweird.f32 %v587
    %vm598 = vweird.f32 %v591
    %vm599 = vmor %vm597, %vm598
    %v600 = vsel %vm599, %v591, %v596
    %v601 = vrsqrt.pop %v588
    %v602 = vmul.f32 %v601, %v588
    %v603 = vmul.f32 %v602, %v601
    %v604 = vmul.f32 0.5, %v603
    %v605 = vsub.f32 1.5, %v604
    %v606 = vmul.f32 %v601, %v605
    %vm607 = vweird.f32 %v588
    %vm608 = vweird.f32 %v601
    %vm609 = vmor %vm607, %vm608
    %v610 = vsel %vm609, %v601, %v606
    %v611 = vrsqrt.pop %v589
    %v612 = vmul.f32 %v611, %v589
    %v613 = vmul.f32 %v612, %v611
    %v614 = vmul.f32 0.5, %v613
    %v615 = vsub.f32 1.5, %v614
    %v616 = vmul.f32 %v611, %v615
    %vm617 = vweird.f32 %v589
    %vm618 = vweird.f32 %v611
    %vm619 = vmor %vm617, %vm618
    %v620 = vsel %vm619, %v611, %v616
    %v621 = vrsqrt.pop %v590
    %v622 = vmul.f32 %v621, %v590
    %v623 = vmul.f32 %v622, %v621
    %v624 = vmul.f32 0.5, %v623
    %v625 = vsub.f32 1.5, %v624
    %v626 = vmul.f32 %v621, %v625
    %vm627 = vweird.f32 %v590
    %vm628 = vweird.f32 %v621
    %vm629 = vmor %vm627, %vm628
    %v630 = vsel %vm629, %v621, %v626
    %v631 = vmul.f32 %v555, %v600
    %v632 = vmul.f32 %v556, %v600
    %v633 = vmul.f32 %v557, %v610
    %v634 = vmul.f32 %v558, %v610
    %v635 = vmul.f32 %v559, %v620
    %v636 = vmul.f32 %v560, %v620
    %v637 = vmul.f32 %v561, %v630
    %v638 = vmul.f32 %v562, %v630
    %639 = vset.pattern.permute.xlu0 3
    %640 = vperm.xlu0 %639, %v297
    %v641 = vpop.permute.xlu0 %640
    %643 = vset.pattern.permute.xlu0 3
    %644 = vperm.xlu0 %643, %v298
    %v645 = vpop.permute.xlu0 %644
    %647 = vset.pattern.permute.xlu0 3
    %648 = vperm.xlu0 %647, %v299
    %v649 = vpop.permute.xlu0 %648
    %651 = vset.pattern.permute.xlu0 3
    %652 = vperm.xlu0 %651, %v300
    %v653 = vpop.permute.xlu0 %652
    %v655 = vmul.f32 %v631, %v641
    %v656 = vmul.f32 %v632, %v641
    %v657 = vmul.f32 %v633, %v645
    %v658 = vmul.f32 %v634, %v645
    %v659 = vmul.f32 %v635, %v649
    %v660 = vmul.f32 %v636, %v649
    %v661 = vmul.f32 %v637, %v653
    %v662 = vmul.f32 %v638, %v653
    %663 = vset.pattern.permute.xlu0 4
    %664 = vperm.xlu0 %663, %v297
    %v665 = vpop.permute.xlu0 %664
    %667 = vset.pattern.permute.xlu0 4
    %668 = vperm.xlu0 %667, %v298
    %v669 = vpop.permute.xlu0 %668
    %671 = vset.pattern.permute.xlu0 4
    %672 = vperm.xlu0 %671, %v299
    %v673 = vpop.permute.xlu0 %672
    %675 = vset.pattern.permute.xlu0 4
    %676 = vperm.xlu0 %675, %v300
    %v677 = vpop.permute.xlu0 %676
    %v679 = vadd.f32 %v655, %v665
    %v680 = vadd.f32 %v656, %v665
    %v681 = vadd.f32 %v657, %v669
    %v682 = vadd.f32 %v658, %v669
    %v683 = vadd.f32 %v659, %v673
    %v684 = vadd.f32 %v660, %v673
    %v685 = vadd.f32 %v661, %v677
    %v686 = vadd.f32 %v662, %v677
    %v687 = vpack.c.bf16 %v681, %v679
    %v688 = vpack.c.bf16 %v682, %v680
    %v689 = vpack.c.bf16 %v685, %v683
    %v690 = vpack.c.bf16 %v686, %v684
    %v692 = vsel %vm252, %v54, 0
    %694 = vmatpush.bf16.msra.mxu0 0
    %695 = vmatpush.bf16.msra.mxu0 0
    %696 = vmatpush.bf16.msra.mxu0 0
    %697 = vmatpush.bf16.msra.mxu0 0
    %698 = vmatpush.bf16.msra.mxu0 0
    %699 = vmatpush.bf16.msra.mxu0 0
    %700 = vmatpush.bf16.msra.mxu0 %v689
    %701 = vmatpush.bf16.msra.mxu0 %v687
    %702 = vmatmul.bf16.gmra.mxu0 %v692
    %v703 = vpop.f32.mrf.mxu0
    %v704 = vadd.f32 0.0, %v703
    %v705 = vpop.f32.mrf.mxu0
    %706 = vdwg.mxu0
    %707 = vmatpush.bf16.msra.mxu0 0
    %708 = vmatpush.bf16.msra.mxu0 0
    %709 = vmatpush.bf16.msra.mxu0 0
    %710 = vmatpush.bf16.msra.mxu0 0
    %711 = vmatpush.bf16.msra.mxu0 0
    %712 = vmatpush.bf16.msra.mxu0 0
    %713 = vmatpush.bf16.msra.mxu0 %v690
    %714 = vmatpush.bf16.msra.mxu0 %v688
    %715 = vmatmul.bf16.gmra.mxu0 %v692
    %v716 = vpop.f32.mrf.mxu0
    %v717 = vadd.f32 0.0, %v716
    %v718 = vpop.f32.mrf.mxu0
    %719 = vdwg.mxu0
    %v720 = vxor.u32 %v704, 2147483648
    %v721 = vxor.u32 %v717, 2147483648
    %v722 = vmul.f32 %v720, 1.442695
    %v723 = vpow.pop %v722
    %v724 = vmul.f32 %v721, 1.442695
    %v725 = vpow.pop %v724
    %v726 = vadd.f32 %v723, 1.0
    %v727 = vadd.f32 %v725, 1.0
    %v728 = vrcp.pop %v726
    %v729 = vmul.f32 %v726, %v728
    %v730 = vsub.f32 1.0, %v729
    %v731 = vmul.f32 %v728, %v730
    %v732 = vadd.f32 %v728, %v731
    %vm733 = vweird.f32 %v726
    %vm734 = vweird.f32 %v728
    %vm735 = vmor %vm733, %vm734
    %v736 = vsel %vm735, %v728, %v732
    %v737 = vand.u32 2147483647, %v726
    %vm738 = vcmp.eq.f32.partialorder %v737, 8.507059e+37
    %v739 = vand.u32 %v726, 2147483648
    %v740 = vor.u32 1.1754944e-38, %v739
    %v741 = vsel %vm738, %v740, %v736
    %v742 = vmul.f32 1.0, %v741
    %v743 = vrcp.pop %v727
    %v744 = vmul.f32 %v727, %v743
    %v745 = vsub.f32 1.0, %v744
    %v746 = vmul.f32 %v743, %v745
    %v747 = vadd.f32 %v743, %v746
    %vm748 = vweird.f32 %v727
    %vm749 = vweird.f32 %v743
    %vm750 = vmor %vm748, %vm749
    %v751 = vsel %vm750, %v743, %v747
    %v752 = vand.u32 2147483647, %v727
    %vm753 = vcmp.eq.f32.partialorder %v752, 8.507059e+37
    %v754 = vand.u32 %v727, 2147483648
    %v755 = vor.u32 1.1754944e-38, %v754
    %v756 = vsel %vm753, %v755, %v751
    %v757 = vmul.f32 1.0, %v756
    %v758 = vadd.f32 %v742, %v757
    %759 = vadd.xlane.f32.xlu0 %v758
    %v760 = vpop.xlane.xlu0 %759
    %v761 = vadd.f32 %v760, 1e-06
    %v762 = vrcp.pop %v761
    %v763 = vmul.f32 %v761, %v762
    %v764 = vsub.f32 1.0, %v763
    %v765 = vmul.f32 %v762, %v764
    %v766 = vadd.f32 %v762, %v765
    %vm767 = vweird.f32 %v761
    %vm768 = vweird.f32 %v762
    %vm769 = vmor %vm767, %vm768
    %v770 = vsel %vm769, %v762, %v766
    %v771 = vand.u32 2147483647, %v761
    %vm772 = vcmp.eq.f32.partialorder %v771, 8.507059e+37
    %v773 = vand.u32 %v761, 2147483648
    %v774 = vor.u32 1.1754944e-38, %v773
    %v775 = vsel %vm772, %v774, %v770
    %v776 = vmul.f32 1.0, %v775
    %v777 = vmul.f32 %v742, %v776
    %v778 = vmul.f32 %v757, %v776
    %v779 = vpack.c.bf16 %v777, %v777
    %v780 = vpack.c.bf16 %v778, %v778
    %781 = vmatpush.bf16.xpose.msra.mxu0 0
    %782 = vmatpush.bf16.xpose.msra.mxu0 0
    %783 = vmatpush.bf16.xpose.msra.mxu0 0
    %784 = vmatpush.bf16.xpose.msra.mxu0 0
    %785 = vmatpush.bf16.xpose.msra.mxu0 0
    %786 = vmatpush.bf16.xpose.msra.mxu0 0
    %787 = vmatpush.bf16.xpose.msra.mxu0 %v689
    %788 = vmatpush.bf16.xpose.msra.mxu0 %v687
    %789 = vmatmul.bf16.gmra.mxu0 %v779
    %v790 = vpop.f32.mrf.mxu0
    %v791 = vadd.f32 0.0, %v790
    %v792 = vpop.f32.mrf.mxu0
    %793 = vdwg.mxu0
    %794 = vmatpush.bf16.xpose.msra.mxu0 0
    %795 = vmatpush.bf16.xpose.msra.mxu0 0
    %796 = vmatpush.bf16.xpose.msra.mxu0 0
    %797 = vmatpush.bf16.xpose.msra.mxu0 0
    %798 = vmatpush.bf16.xpose.msra.mxu0 0
    %799 = vmatpush.bf16.xpose.msra.mxu0 0
    %800 = vmatpush.bf16.xpose.msra.mxu0 %v690
    %801 = vmatpush.bf16.xpose.msra.mxu0 %v688
    %802 = vmatmul.bf16.gmra.mxu0 %v780
    %v803 = vpop.f32.mrf.mxu0
    %v804 = vadd.f32 %v791, %v803
    %v805 = vpop.f32.mrf.mxu0
    %806 = vdwg.mxu0
    %v807 = vadd.f32 %v53, %v804
    %v808 = vld [vmem:[%s5] sm:$0xff]
    %v809 = vld [vmem:[%s5 + $0x8] sm:$0xff]
    %v810 = vld [vmem:[%s5 + $0x10] sm:$0xff]
    %v811 = vld [vmem:[%s5 + $0x18] sm:$0xff]
    %v813 = vsel %vm252, %v804, 0
    %815 = vmatpush.msra.mxu0 0.0
    %816 = vmatpush.msra.mxu0 0.0
    %817 = vmatpush.msra.mxu0 0.0
    %818 = vmatpush.msra.mxu0 0.0
    %819 = vmatpush.msra.mxu0 0.0
    %820 = vmatpush.msra.mxu0 0.0
    %821 = vmatpush.msra.mxu0 0.0
    %822 = vmatpush.msra.mxu0 0.0
    %823 = vmatpush.msra.mxu0 0.0
    %824 = vmatpush.msra.mxu0 0.0
    %825 = vmatpush.msra.mxu0 0.0
    %826 = vmatpush.msra.mxu0 0.0
    %827 = vmatpush.msra.mxu0 %v811
    %828 = vmatpush.msra.mxu0 %v810
    %829 = vmatpush.msra.mxu0 %v809
    %830 = vmatpush.msra.mxu0 %v808
    %831 = vmatmul.f32.gmra.mxu0 %v813
    %v832 = vpop.f32.mrf.mxu0
    %v833 = vadd.f32 0.0, %v832
    %834 = vdwg.mxu0
    %v835 = vadd.f32 %v807, %v833
    %v836 = vld [vmem:[%s6] sm:$0x1]
    %v837 = vperm.slane %v836, 0
    %v838 = vadd.f32 %v835, %v837
    %v839 = vld [vmem:[%s6 + $0x1] sm:$0x1]
    %v840 = vld [vmem:[%s6 + $0x2] sm:$0x1]
    %v841 = vsel %vm252, %v838, 0.0
    %842 = vadd.xlane.f32.xlu0 %v841
    %v843 = vpop.xlane.xlu0 %842
    %v844 = vrcp.pop 32.0
    %v845 = vmul.f32 32.0, %v844
    %v846 = vsub.f32 1.0, %v845
    %v847 = vmul.f32 %v844, %v846
    %v848 = vadd.f32 %v844, %v847
    %vm849 = vweird.f32 %v844
    %v850 = vsel %vm849, %v844, %v848
    %v851 = vmul.f32 %v843, %v850
    %v852 = vsub.f32 %v838, %v851
    %v853 = vmul.f32 %v852, %v852
    %v854 = vsel %vm252, %v853, 0.0
    %855 = vadd.xlane.f32.xlu0 %v854
    %v856 = vpop.xlane.xlu0 %855
    %v857 = vmul.f32 %v856, %v850
    %v858 = vadd.f32 %v857, 1e-05
    %v859 = vrsqrt.pop %v858
    %v860 = vmul.f32 %v859, %v858
    %v861 = vmul.f32 %v860, %v859
    %v862 = vmul.f32 0.5, %v861
    %v863 = vsub.f32 1.5, %v862
    %v864 = vmul.f32 %v859, %v863
    %vm865 = vweird.f32 %v858
    %vm866 = vweird.f32 %v859
    %vm867 = vmor %vm865, %vm866
    %v868 = vsel %vm867, %v859, %v864
    %v869 = vmul.f32 %v852, %v868
    %v870 = vperm.slane %v839, 0
    %v871 = vmul.f32 %v869, %v870
    %v872 = vperm.slane %v840, 0
    %v873 = vadd.f32 %v871, %v872
    %v874 = vld [vmem:[%s7] sm:$0xff]
    %v875 = vld [vmem:[%s7 + $0x8] sm:$0xff]
    %v876 = vld [vmem:[%s7 + $0x10] sm:$0xff]
    %v877 = vld [vmem:[%s7 + $0x18] sm:$0xff]
    %v878 = vld [vmem:[%s7 + $0x20] sm:$0xff]
    %v879 = vld [vmem:[%s7 + $0x28] sm:$0xff]
    %v880 = vld [vmem:[%s7 + $0x30] sm:$0xff]
    %v881 = vld [vmem:[%s7 + $0x38] sm:$0xff]
    %v882 = vld [vmem:[%s7 + $0x40] sm:$0xff]
    %v883 = vld [vmem:[%s7 + $0x48] sm:$0xff]
    %v884 = vld [vmem:[%s7 + $0x50] sm:$0xff]
    %v885 = vld [vmem:[%s7 + $0x58] sm:$0xff]
    %v887 = vsel %vm252, %v873, 0
    %889 = vmatpush.msra.mxu0 0.0
    %890 = vmatpush.msra.mxu0 0.0
    %891 = vmatpush.msra.mxu0 0.0
    %892 = vmatpush.msra.mxu0 0.0
    %893 = vmatpush.msra.mxu0 0.0
    %894 = vmatpush.msra.mxu0 0.0
    %895 = vmatpush.msra.mxu0 0.0
    %896 = vmatpush.msra.mxu0 0.0
    %897 = vmatpush.msra.mxu0 0.0
    %898 = vmatpush.msra.mxu0 0.0
    %899 = vmatpush.msra.mxu0 0.0
    %900 = vmatpush.msra.mxu0 0.0
    %901 = vmatpush.msra.mxu0 %v883
    %902 = vmatpush.msra.mxu0 %v880
    %903 = vmatpush.msra.mxu0 %v877
    %904 = vmatpush.msra.mxu0 %v874
    %905 = vmatmul.f32.gmra.mxu0 %v887
    %v906 = vpop.f32.mrf.mxu0
    %v907 = vadd.f32 0.0, %v906
    %908 = vdwg.mxu0
    %909 = vmatpush.msra.mxu0 0.0
    %910 = vmatpush.msra.mxu0 0.0
    %911 = vmatpush.msra.mxu0 0.0
    %912 = vmatpush.msra.mxu0 0.0
    %913 = vmatpush.msra.mxu0 0.0
    %914 = vmatpush.msra.mxu0 0.0
    %915 = vmatpush.msra.mxu0 0.0
    %916 = vmatpush.msra.mxu0 0.0
    %917 = vmatpush.msra.mxu0 0.0
    %918 = vmatpush.msra.mxu0 0.0
    %919 = vmatpush.msra.mxu0 0.0
    %920 = vmatpush.msra.mxu0 0.0
    %921 = vmatpush.msra.mxu0 %v884
    %922 = vmatpush.msra.mxu0 %v881
    %923 = vmatpush.msra.mxu0 %v878
    %924 = vmatpush.msra.mxu0 %v875
    %925 = vmatmul.f32.gmra.mxu0 %v887
    %v926 = vpop.f32.mrf.mxu0
    %v927 = vadd.f32 0.0, %v926
    %928 = vdwg.mxu0
    %929 = vmatpush.msra.mxu0 0.0
    %930 = vmatpush.msra.mxu0 0.0
    %931 = vmatpush.msra.mxu0 0.0
    %932 = vmatpush.msra.mxu0 0.0
    %933 = vmatpush.msra.mxu0 0.0
    %934 = vmatpush.msra.mxu0 0.0
    %935 = vmatpush.msra.mxu0 0.0
    %936 = vmatpush.msra.mxu0 0.0
    %937 = vmatpush.msra.mxu0 0.0
    %938 = vmatpush.msra.mxu0 0.0
    %939 = vmatpush.msra.mxu0 0.0
    %940 = vmatpush.msra.mxu0 0.0
    %941 = vmatpush.msra.mxu0 %v885
    %942 = vmatpush.msra.mxu0 %v882
    %943 = vmatpush.msra.mxu0 %v879
    %944 = vmatpush.msra.mxu0 %v876
    %945 = vmatmul.f32.gmra.mxu0 %v887
    %v946 = vpop.f32.mrf.mxu0
    %v947 = vadd.f32 0.0, %v946
    %948 = vdwg.mxu0
    %v949 = vld [vmem:[%s6 + $0x3] sm:$0x1]
    %v950 = vperm.slane %v949, 0
    %v951 = vadd.f32 %v907, %v950
    %v952 = vld [vmem:[%s6 + $0x4] sm:$0x1]
    %v953 = vperm.slane %v952, 0
    %v954 = vadd.f32 %v927, %v953
    %v955 = vld [vmem:[%s6 + $0x5] sm:$0x1]
    %v956 = vperm.slane %v955, 0
    %v957 = vadd.f32 %v947, %v956
    %v959 = vsel %vm252, %v951, 0
    %v962 = vsel %vm252, %v954, 0
    %964 = vmatpush.xpose.msra.mxu0 0.0
    %965 = vmatpush.xpose.msra.mxu0 0.0
    %966 = vmatpush.xpose.msra.mxu0 0.0
    %967 = vmatpush.xpose.msra.mxu0 0.0
    %968 = vmatpush.xpose.msra.mxu0 0.0
    %969 = vmatpush.xpose.msra.mxu0 0.0
    %970 = vmatpush.xpose.msra.mxu0 0.0
    %971 = vmatpush.xpose.msra.mxu0 0.0
    %972 = vmatpush.xpose.msra.mxu0 0.0
    %973 = vmatpush.xpose.msra.mxu0 0.0
    %974 = vmatpush.xpose.msra.mxu0 0.0
    %975 = vmatpush.xpose.msra.mxu0 0.0
    %976 = vmatpush.xpose.msra.mxu0 0.0
    %977 = vmatpush.xpose.msra.mxu0 0.0
    %978 = vmatpush.xpose.msra.mxu0 0.0
    %979 = vmatpush.xpose.msra.mxu0 %v962
    %980 = vmatmul.f32.gmra.mxu0 %v959
    %v981 = vpop.f32.mrf.mxu0
    %v982 = vadd.f32 0.0, %v981
    %983 = vdwg.mxu0
    %v984 = vmul.f32 %v982, 0.17677669
    %vm985 = vcmask 64512
    %v986 = vsel %vm985, %v984, -inf
    %987 = vmax.xlane.f32.xlu0 %v986
    %v988 = vpop.xlane.xlu0 %987
    %v989 = vsub.f32 %v984, %v988
    %v990 = vmul.f32 %v989, 1.442695
    %v991 = vpow.pop %v990
    %v992 = vsel %vm985, %v991, 0.0
    %993 = vadd.xlane.f32.xlu0 %v992
    %v994 = vpop.xlane.xlu0 %993
    %v995 = vrcp.pop %v994
    %v996 = vmul.f32 %v994, %v995
    %v997 = vsub.f32 1.0, %v996
    %v998 = vmul.f32 %v995, %v997
    %v999 = vadd.f32 %v995, %v998
    %vm1000 = vweird.f32 %v994
    %vm1001 = vweird.f32 %v995
    %vm1002 = vmor %vm1000, %vm1001
    %v1003 = vsel %vm1002, %v995, %v999
    %v1004 = vand.u32 2147483647, %v994
    %vm1005 = vcmp.eq.f32.partialorder %v1004, 8.507059e+37
    %v1006 = vand.u32 %v994, 2147483648
    %v1007 = vor.u32 1.1754944e-38, %v1006
    %v1008 = vsel %vm1005, %v1007, %v1003
    %v1009 = vmul.f32 %v991, %v1008
    %v1011 = vsel %vm985, %v1009, 0
    %1013 = vmatpush.msra.mxu0 0.0
    %1014 = vmatpush.msra.mxu0 0.0
    %1015 = vmatpush.msra.mxu0 0.0
    %1016 = vmatpush.msra.mxu0 0.0
    %1017 = vmatpush.msra.mxu0 0.0
    %1018 = vmatpush.msra.mxu0 0.0
    %1019 = vmatpush.msra.mxu0 0.0
    %1020 = vmatpush.msra.mxu0 0.0
    %1021 = vmatpush.msra.mxu0 0.0
    %1022 = vmatpush.msra.mxu0 0.0
    %1023 = vmatpush.msra.mxu0 0.0
    %1024 = vmatpush.msra.mxu0 0.0
    %1025 = vmatpush.msra.mxu0 0.0
    %1026 = vmatpush.msra.mxu0 0.0
    %1027 = vmatpush.msra.mxu0 0.0
    %1028 = vmatpush.msra.mxu0 %v957
    %1029 = vmatmul.f32.gmra.mxu0 %v1011
    %v1030 = vpop.f32.mrf.mxu0
    %v1031 = vadd.f32 0.0, %v1030
    %1032 = vdwg.mxu0
    %v1033 = vld [vmem:[%s5 + $0x20] sm:$0xff]
    %v1034 = vld [vmem:[%s5 + $0x28] sm:$0xff]
    %v1035 = vld [vmem:[%s5 + $0x30] sm:$0xff]
    %v1036 = vld [vmem:[%s5 + $0x38] sm:$0xff]
    %v1038 = vsel %vm252, %v1031, 0
    %1040 = vmatpush.msra.mxu0 0.0
    %1041 = vmatpush.msra.mxu0 0.0
    %1042 = vmatpush.msra.mxu0 0.0
    %1043 = vmatpush.msra.mxu0 0.0
    %1044 = vmatpush.msra.mxu0 0.0
    %1045 = vmatpush.msra.mxu0 0.0
    %1046 = vmatpush.msra.mxu0 0.0
    %1047 = vmatpush.msra.mxu0 0.0
    %1048 = vmatpush.msra.mxu0 0.0
    %1049 = vmatpush.msra.mxu0 0.0
    %1050 = vmatpush.msra.mxu0 0.0
    %1051 = vmatpush.msra.mxu0 0.0
    %1052 = vmatpush.msra.mxu0 %v1036
    %1053 = vmatpush.msra.mxu0 %v1035
    %1054 = vmatpush.msra.mxu0 %v1034
    %1055 = vmatpush.msra.mxu0 %v1033
    %1056 = vmatmul.f32.gmra.mxu0 %v1038
    %v1057 = vpop.f32.mrf.mxu0
    %v1058 = vadd.f32 0.0, %v1057
    %1059 = vdwg.mxu0
    %v1060 = vadd.f32 %v873, %v1058
    %v1061 = vld [vmem:[%s6 + $0x6] sm:$0x1]
    %v1062 = vperm.slane %v1061, 0
    %v1063 = vadd.f32 %v1060, %v1062
    %v1064 = vld [vmem:[%s6 + $0x7] sm:$0x1]
    %v1065 = vld [vmem:[%s6 + $0x8] sm:$0x1]
    %v1066 = vsel %vm252, %v1063, 0.0
    %1067 = vadd.xlane.f32.xlu0 %v1066
    %v1068 = vpop.xlane.xlu0 %1067
    %v1069 = vmul.f32 %v1068, %v850
    %v1070 = vsub.f32 %v1063, %v1069
    %v1071 = vmul.f32 %v1070, %v1070
    %v1072 = vsel %vm252, %v1071, 0.0
    %1073 = vadd.xlane.f32.xlu0 %v1072
    %v1074 = vpop.xlane.xlu0 %1073
    %v1075 = vmul.f32 %v1074, %v850
    %v1076 = vadd.f32 %v1075, 1e-05
    %v1077 = vrsqrt.pop %v1076
    %v1078 = vmul.f32 %v1077, %v1076
    %v1079 = vmul.f32 %v1078, %v1077
    %v1080 = vmul.f32 0.5, %v1079
    %v1081 = vsub.f32 1.5, %v1080
    %v1082 = vmul.f32 %v1077, %v1081
    %vm1083 = vweird.f32 %v1076
    %vm1084 = vweird.f32 %v1077
    %vm1085 = vmor %vm1083, %vm1084
    %v1086 = vsel %vm1085, %v1077, %v1082
    %v1087 = vmul.f32 %v1070, %v1086
    %v1088 = vperm.slane %v1064, 0
    %v1089 = vmul.f32 %v1087, %v1088
    %v1090 = vperm.slane %v1065, 0
    %v1091 = vadd.f32 %v1089, %v1090
    %v1092 = vld [vmem:[%s5 + $0x40] sm:$0xff]
    %v1093 = vld [vmem:[%s5 + $0x48] sm:$0xff]
    %v1094 = vld [vmem:[%s5 + $0x50] sm:$0xff]
    %v1095 = vld [vmem:[%s5 + $0x58] sm:$0xff]
    %v1096 = vld [vmem:[%s6 + $0x9] sm:$0x1]
    %v1097 = vperm.slane %v1096, 0
    %v1099 = vsel %vm252, %v1091, 0
    %1101 = vmatpush.msra.mxu0 0.0
    %1102 = vmatpush.msra.mxu0 0.0
    %1103 = vmatpush.msra.mxu0 0.0
    %1104 = vmatpush.msra.mxu0 0.0
    %1105 = vmatpush.msra.mxu0 0.0
    %1106 = vmatpush.msra.mxu0 0.0
    %1107 = vmatpush.msra.mxu0 0.0
    %1108 = vmatpush.msra.mxu0 0.0
    %1109 = vmatpush.msra.mxu0 0.0
    %1110 = vmatpush.msra.mxu0 0.0
    %1111 = vmatpush.msra.mxu0 0.0
    %1112 = vmatpush.msra.mxu0 0.0
    %1113 = vmatpush.msra.mxu0 %v1095
    %1114 = vmatpush.msra.mxu0 %v1094
    %1115 = vmatpush.msra.mxu0 %v1093
    %1116 = vmatpush.msra.mxu0 %v1092
    %1117 = vmatmul.f32.gmra.mxu0 %v1099
    %v1118 = vpop.f32.mrf.mxu0
    %v1119 = vadd.f32 %v1097, %v1118
    %1120 = vdwg.mxu0
    %v1121 = vmax.f32 %v1119, 0.0
    %v1122 = vld [vmem:[%s5 + $0x60] sm:$0xff]
    %v1123 = vld [vmem:[%s5 + $0x68] sm:$0xff]
    %v1124 = vld [vmem:[%s5 + $0x70] sm:$0xff]
    %v1125 = vld [vmem:[%s5 + $0x78] sm:$0xff]
    %vm1126 = vcmask 523264
    %v1128 = vsel %vm1126, %v1121, 0
    %v1131 = vsel %vm1126, %v1122, 0
    %v1134 = vsel %vm1126, %v1123, 0
    %v1137 = vsel %vm1126, %v1124, 0
    %v1140 = vsel %vm1126, %v1125, 0
    %1142 = vmatpush.xpose.msra.mxu0 0.0
    %1143 = vmatpush.xpose.msra.mxu0 0.0
    %1144 = vmatpush.xpose.msra.mxu0 0.0
    %1145 = vmatpush.xpose.msra.mxu0 0.0
    %1146 = vmatpush.xpose.msra.mxu0 0.0
    %1147 = vmatpush.xpose.msra.mxu0 0.0
    %1148 = vmatpush.xpose.msra.mxu0 0.0
    %1149 = vmatpush.xpose.msra.mxu0 0.0
    %1150 = vmatpush.xpose.msra.mxu0 0.0
    %1151 = vmatpush.xpose.msra.mxu0 0.0
    %1152 = vmatpush.xpose.msra.mxu0 0.0
    %1153 = vmatpush.xpose.msra.mxu0 0.0
    %1154 = vmatpush.xpose.msra.mxu0 %v1140
    %1155 = vmatpush.xpose.msra.mxu0 %v1137
    %1156 = vmatpush.xpose.msra.mxu0 %v1134
    %1157 = vmatpush.xpose.msra.mxu0 %v1131
    %1158 = vmatmul.f32.gmra.mxu0 %v1128
    %v1159 = vpop.f32.mrf.mxu0
    %v1160 = vadd.f32 0.0, %v1159
    %1161 = vdwg.mxu0
    %v1162 = vadd.f32 %v1091, %v1160
    %v1163 = vld [vmem:[%s6 + $0xa] sm:$0x1]
    %v1164 = vperm.slane %v1163, 0
    %v1165 = vadd.f32 %v1162, %v1164
    %v1166 = vld [vmem:[%s6 + $0xb] sm:$0x1]
    %v1167 = vld [vmem:[%s6 + $0xc] sm:$0x1]
    %v1168 = vsel %vm252, %v1165, 0.0
    %1169 = vadd.xlane.f32.xlu0 %v1168
    %v1170 = vpop.xlane.xlu0 %1169
    %v1171 = vmul.f32 %v1170, %v850
    %v1172 = vsub.f32 %v1165, %v1171
    %v1173 = vmul.f32 %v1172, %v1172
    %v1174 = vsel %vm252, %v1173, 0.0
    %1175 = vadd.xlane.f32.xlu0 %v1174
    %v1176 = vpop.xlane.xlu0 %1175
    %v1177 = vmul.f32 %v1176, %v850
    %v1178 = vadd.f32 %v1177, 1e-05
    %v1179 = vrsqrt.pop %v1178
    %v1180 = vmul.f32 %v1179, %v1178
    %v1181 = vmul.f32 %v1180, %v1179
    %v1182 = vmul.f32 0.5, %v1181
    %v1183 = vsub.f32 1.5, %v1182
    %v1184 = vmul.f32 %v1179, %v1183
    %vm1185 = vweird.f32 %v1178
    %vm1186 = vweird.f32 %v1179
    %vm1187 = vmor %vm1185, %vm1186
    %v1188 = vsel %vm1187, %v1179, %v1184
    %v1189 = vmul.f32 %v1172, %v1188
    %v1190 = vperm.slane %v1166, 0
    %v1191 = vmul.f32 %v1189, %v1190
    %v1192 = vperm.slane %v1167, 0
    %v1193 = vadd.f32 %v1191, %v1192
    %v1194 = vld [vmem:[#allocation2 + $0x8] sm:$0xff]
    %v1195 = vld [vmem:[#allocation2 + $0x18] sm:$0xff]
    %v1196 = vld [vmem:[#allocation2 + $0x28] sm:$0xff]
    %v1197 = vld [vmem:[#allocation2 + $0x38] sm:$0xff]
    %v1199 = vsel %vm252, %v1193, 0
    %1201 = vmatpush.msra.mxu0 0.0
    %1202 = vmatpush.msra.mxu0 0.0
    %1203 = vmatpush.msra.mxu0 0.0
    %1204 = vmatpush.msra.mxu0 0.0
    %1205 = vmatpush.msra.mxu0 0.0
    %1206 = vmatpush.msra.mxu0 0.0
    %1207 = vmatpush.msra.mxu0 0.0
    %1208 = vmatpush.msra.mxu0 0.0
    %1209 = vmatpush.msra.mxu0 0.0
    %1210 = vmatpush.msra.mxu0 0.0
    %1211 = vmatpush.msra.mxu0 0.0
    %1212 = vmatpush.msra.mxu0 0.0
    %1213 = vmatpush.msra.mxu0 %v1197
    %1214 = vmatpush.msra.mxu0 %v1196
    %1215 = vmatpush.msra.mxu0 %v1195
    %1216 = vmatpush.msra.mxu0 %v1194
    %1217 = vmatmul.f32.gmra.mxu0 %v1199
    %v1218 = vpop.f32.mrf.mxu0
    %v1219 = vadd.f32 0.0, %v1218
    %1220 = vdwg.mxu0
    %v1221 = vld [vmem:[%s6 + $0xe] sm:$0x1]
    %v1222 = vperm.slane %v1221, 0
    %v1223 = vadd.f32 %v1219, %v1222
    %v1224 = vpack.c.bf16 %v1223, %v1223
    %v1226 = vsel %vm252, %v1224, 0
    %1228 = vmatpush.bf16.msra.mxu0 0
    %1229 = vmatpush.bf16.msra.mxu0 0
    %1230 = vmatpush.bf16.msra.mxu0 0
    %1231 = vmatpush.bf16.msra.mxu0 0
    %1232 = vmatpush.bf16.msra.mxu0 0
    %1233 = vmatpush.bf16.msra.mxu0 0
    %1234 = vmatpush.bf16.msra.mxu0 %v689
    %1235 = vmatpush.bf16.msra.mxu0 %v687
    %1236 = vmatmul.bf16.gmra.mxu0 %v1226
    %v1237 = vpop.f32.mrf.mxu0
    %v1238 = vadd.f32 0.0, %v1237
    %v1239 = vpop.f32.mrf.mxu0
    %1240 = vdwg.mxu0
    %1241 = vmatpush.bf16.msra.mxu0 0
    %1242 = vmatpush.bf16.msra.mxu0 0
    %1243 = vmatpush.bf16.msra.mxu0 0
    %1244 = vmatpush.bf16.msra.mxu0 0
    %1245 = vmatpush.bf16.msra.mxu0 0
    %1246 = vmatpush.bf16.msra.mxu0 0
    %1247 = vmatpush.bf16.msra.mxu0 %v690
    %1248 = vmatpush.bf16.msra.mxu0 %v688
    %1249 = vmatmul.bf16.gmra.mxu0 %v1226
    %v1250 = vpop.f32.mrf.mxu0
    %v1251 = vadd.f32 0.0, %v1250
    %v1252 = vpop.f32.mrf.mxu0
    %1253 = vdwg.mxu0
    %v1254 = vxor.u32 %v1238, 2147483648
    %v1255 = vxor.u32 %v1251, 2147483648
    %v1256 = vmul.f32 %v1254, 1.442695
    %v1257 = vpow.pop %v1256
    %v1258 = vmul.f32 %v1255, 1.442695
    %v1259 = vpow.pop %v1258
    %v1260 = vadd.f32 %v1257, 1.0
    %v1261 = vadd.f32 %v1259, 1.0
    %v1262 = vrcp.pop %v1260
    %v1263 = vmul.f32 %v1260, %v1262
    %v1264 = vsub.f32 1.0, %v1263
    %v1265 = vmul.f32 %v1262, %v1264
    %v1266 = vadd.f32 %v1262, %v1265
    %vm1267 = vweird.f32 %v1260
    %vm1268 = vweird.f32 %v1262
    %vm1269 = vmor %vm1267, %vm1268
    %v1270 = vsel %vm1269, %v1262, %v1266
    %v1271 = vand.u32 2147483647, %v1260
    %vm1272 = vcmp.eq.f32.partialorder %v1271, 8.507059e+37
    %v1273 = vand.u32 %v1260, 2147483648
    %v1274 = vor.u32 1.1754944e-38, %v1273
    %v1275 = vsel %vm1272, %v1274, %v1270
    %v1276 = vmul.f32 1.0, %v1275
    %v1277 = vrcp.pop %v1261
    %v1278 = vmul.f32 %v1261, %v1277
    %v1279 = vsub.f32 1.0, %v1278
    %v1280 = vmul.f32 %v1277, %v1279
    %v1281 = vadd.f32 %v1277, %v1280
    %vm1282 = vweird.f32 %v1261
    %vm1283 = vweird.f32 %v1277
    %vm1284 = vmor %vm1282, %vm1283
    %v1285 = vsel %vm1284, %v1277, %v1281
    %v1286 = vand.u32 2147483647, %v1261
    %vm1287 = vcmp.eq.f32.partialorder %v1286, 8.507059e+37
    %v1288 = vand.u32 %v1261, 2147483648
    %v1289 = vor.u32 1.1754944e-38, %v1288
    %v1290 = vsel %vm1287, %v1289, %v1285
    %v1291 = vmul.f32 1.0, %v1290
    %v1292 = vadd.f32 %v1276, %v1291
    %1293 = vadd.xlane.f32.xlu0 %v1292
    %v1294 = vpop.xlane.xlu0 %1293
    %v1295 = vadd.f32 %v1294, 1e-06
    %v1296 = vrcp.pop %v1295
    %v1297 = vmul.f32 %v1295, %v1296
    %v1298 = vsub.f32 1.0, %v1297
    %v1299 = vmul.f32 %v1296, %v1298
    %v1300 = vadd.f32 %v1296, %v1299
    %vm1301 = vweird.f32 %v1295
    %vm1302 = vweird.f32 %v1296
    %vm1303 = vmor %vm1301, %vm1302
    %v1304 = vsel %vm1303, %v1296, %v1300
    %v1305 = vand.u32 2147483647, %v1295
    %vm1306 = vcmp.eq.f32.partialorder %v1305, 8.507059e+37
    %v1307 = vand.u32 %v1295, 2147483648
    %v1308 = vor.u32 1.1754944e-38, %v1307
    %v1309 = vsel %vm1306, %v1308, %v1304
    %v1310 = vmul.f32 1.0, %v1309
    %v1311 = vmul.f32 %v1276, %v1310
    %v1312 = vmul.f32 %v1291, %v1310
    %v1313 = vpack.c.bf16 %v1311, %v1311
    %v1314 = vpack.c.bf16 %v1312, %v1312
    %1315 = vmatpush.bf16.xpose.msra.mxu0 0
    %1316 = vmatpush.bf16.xpose.msra.mxu0 0
    %1317 = vmatpush.bf16.xpose.msra.mxu0 0
    %1318 = vmatpush.bf16.xpose.msra.mxu0 0
    %1319 = vmatpush.bf16.xpose.msra.mxu0 0
    %1320 = vmatpush.bf16.xpose.msra.mxu0 0
    %1321 = vmatpush.bf16.xpose.msra.mxu0 %v689
    %1322 = vmatpush.bf16.xpose.msra.mxu0 %v687
    %1323 = vmatmul.bf16.gmra.mxu0 %v1313
    %v1324 = vpop.f32.mrf.mxu0
    %v1325 = vadd.f32 0.0, %v1324
    %v1326 = vpop.f32.mrf.mxu0
    %1327 = vdwg.mxu0
    %1328 = vmatpush.bf16.xpose.msra.mxu0 0
    %1329 = vmatpush.bf16.xpose.msra.mxu0 0
    %1330 = vmatpush.bf16.xpose.msra.mxu0 0
    %1331 = vmatpush.bf16.xpose.msra.mxu0 0
    %1332 = vmatpush.bf16.xpose.msra.mxu0 0
    %1333 = vmatpush.bf16.xpose.msra.mxu0 0
    %1334 = vmatpush.bf16.xpose.msra.mxu0 %v690
    %1335 = vmatpush.bf16.xpose.msra.mxu0 %v688
    %1336 = vmatmul.bf16.gmra.mxu0 %v1314
    %v1337 = vpop.f32.mrf.mxu0
    %v1338 = vadd.f32 %v1325, %v1337
    %v1339 = vpop.f32.mrf.mxu0
    %1340 = vdwg.mxu0
    %s1341 = scalar_lea.vmem %s5, 128
    %v1342 = vld [vmem:[%s1341] sm:$0xff]
    %v1343 = vld [vmem:[%s1341 + $0x8] sm:$0xff]
    %v1344 = vld [vmem:[%s1341 + $0x10] sm:$0xff]
    %v1345 = vld [vmem:[%s1341 + $0x18] sm:$0xff]
    %v1347 = vsel %vm252, %v1338, 0
    %1349 = vmatpush.msra.mxu0 0.0
    %1350 = vmatpush.msra.mxu0 0.0
    %1351 = vmatpush.msra.mxu0 0.0
    %1352 = vmatpush.msra.mxu0 0.0
    %1353 = vmatpush.msra.mxu0 0.0
    %1354 = vmatpush.msra.mxu0 0.0
    %1355 = vmatpush.msra.mxu0 0.0
    %1356 = vmatpush.msra.mxu0 0.0
    %1357 = vmatpush.msra.mxu0 0.0
    %1358 = vmatpush.msra.mxu0 0.0
    %1359 = vmatpush.msra.mxu0 0.0
    %1360 = vmatpush.msra.mxu0 0.0
    %1361 = vmatpush.msra.mxu0 %v1345
    %1362 = vmatpush.msra.mxu0 %v1344
    %1363 = vmatpush.msra.mxu0 %v1343
    %1364 = vmatpush.msra.mxu0 %v1342
    %1365 = vmatmul.f32.gmra.mxu0 %v1347
    %v1366 = vpop.f32.mrf.mxu0
    %v1367 = vadd.f32 0.0, %v1366
    %1368 = vdwg.mxu0
    %v1369 = vadd.f32 %v1193, %v1367
    %s1370 = scalar_lea.vmem %s6, 16
    %v1371 = vld [vmem:[%s1370] sm:$0x1]
    %v1372 = vperm.slane %v1371, 0
    %v1373 = vadd.f32 %v1369, %v1372
    %v1374 = vld [vmem:[%s1370 + $0x1] sm:$0x1]
    %v1375 = vld [vmem:[%s1370 + $0x2] sm:$0x1]
    %v1376 = vsel %vm252, %v1373, 0.0
    %1377 = vadd.xlane.f32.xlu0 %v1376
    %v1378 = vpop.xlane.xlu0 %1377
    %v1379 = vmul.f32 %v1378, %v850
    %v1380 = vsub.f32 %v1373, %v1379
    %v1381 = vmul.f32 %v1380, %v1380
    %v1382 = vsel %vm252, %v1381, 0.0
    %1383 = vadd.xlane.f32.xlu0 %v1382
    %v1384 = vpop.xlane.xlu0 %1383
    %v1385 = vmul.f32 %v1384, %v850
    %v1386 = vadd.f32 %v1385, 1e-05
    %v1387 = vrsqrt.pop %v1386
    %v1388 = vmul.f32 %v1387, %v1386
    %v1389 = vmul.f32 %v1388, %v1387
    %v1390 = vmul.f32 0.5, %v1389
    %v1391 = vsub.f32 1.5, %v1390
    %v1392 = vmul.f32 %v1387, %v1391
    %vm1393 = vweird.f32 %v1386
    %vm1394 = vweird.f32 %v1387
    %vm1395 = vmor %vm1393, %vm1394
    %v1396 = vsel %vm1395, %v1387, %v1392
    %v1397 = vmul.f32 %v1380, %v1396
    %v1398 = vperm.slane %v1374, 0
    %v1399 = vmul.f32 %v1397, %v1398
    %v1400 = vperm.slane %v1375, 0
    %v1401 = vadd.f32 %v1399, %v1400
    %s1402 = scalar_lea.vmem %s7, 96
    %v1403 = vld [vmem:[%s1402] sm:$0xff]
    %v1404 = vld [vmem:[%s1402 + $0x8] sm:$0xff]
    %v1405 = vld [vmem:[%s1402 + $0x10] sm:$0xff]
    %v1406 = vld [vmem:[%s1402 + $0x18] sm:$0xff]
    %v1407 = vld [vmem:[%s1402 + $0x20] sm:$0xff]
    %v1408 = vld [vmem:[%s1402 + $0x28] sm:$0xff]
    %v1409 = vld [vmem:[%s1402 + $0x30] sm:$0xff]
    %v1410 = vld [vmem:[%s1402 + $0x38] sm:$0xff]
    %v1411 = vld [vmem:[%s1402 + $0x40] sm:$0xff]
    %v1412 = vld [vmem:[%s1402 + $0x48] sm:$0xff]
    %v1413 = vld [vmem:[%s1402 + $0x50] sm:$0xff]
    %v1414 = vld [vmem:[%s1402 + $0x58] sm:$0xff]
    %v1416 = vsel %vm252, %v1401, 0
    %1418 = vmatpush.msra.mxu0 0.0
    %1419 = vmatpush.msra.mxu0 0.0
    %1420 = vmatpush.msra.mxu0 0.0
    %1421 = vmatpush.msra.mxu0 0.0
    %1422 = vmatpush.msra.mxu0 0.0
    %1423 = vmatpush.msra.mxu0 0.0
    %1424 = vmatpush.msra.mxu0 0.0
    %1425 = vmatpush.msra.mxu0 0.0
    %1426 = vmatpush.msra.mxu0 0.0
    %1427 = vmatpush.msra.mxu0 0.0
    %1428 = vmatpush.msra.mxu0 0.0
    %1429 = vmatpush.msra.mxu0 0.0
    %1430 = vmatpush.msra.mxu0 %v1412
    %1431 = vmatpush.msra.mxu0 %v1409
    %1432 = vmatpush.msra.mxu0 %v1406
    %1433 = vmatpush.msra.mxu0 %v1403
    %1434 = vmatmul.f32.gmra.mxu0 %v1416
    %v1435 = vpop.f32.mrf.mxu0
    %v1436 = vadd.f32 0.0, %v1435
    %1437 = vdwg.mxu0
    %1438 = vmatpush.msra.mxu0 0.0
    %1439 = vmatpush.msra.mxu0 0.0
    %1440 = vmatpush.msra.mxu0 0.0
    %1441 = vmatpush.msra.mxu0 0.0
    %1442 = vmatpush.msra.mxu0 0.0
    %1443 = vmatpush.msra.mxu0 0.0
    %1444 = vmatpush.msra.mxu0 0.0
    %1445 = vmatpush.msra.mxu0 0.0
    %1446 = vmatpush.msra.mxu0 0.0
    %1447 = vmatpush.msra.mxu0 0.0
    %1448 = vmatpush.msra.mxu0 0.0
    %1449 = vmatpush.msra.mxu0 0.0
    %1450 = vmatpush.msra.mxu0 %v1413
    %1451 = vmatpush.msra.mxu0 %v1410
    %1452 = vmatpush.msra.mxu0 %v1407
    %1453 = vmatpush.msra.mxu0 %v1404
    %1454 = vmatmul.f32.gmra.mxu0 %v1416
    %v1455 = vpop.f32.mrf.mxu0
    %v1456 = vadd.f32 0.0, %v1455
    %1457 = vdwg.mxu0
    %1458 = vmatpush.msra.mxu0 0.0
    %1459 = vmatpush.msra.mxu0 0.0
    %1460 = vmatpush.msra.mxu0 0.0
    %1461 = vmatpush.msra.mxu0 0.0
    %1462 = vmatpush.msra.mxu0 0.0
    %1463 = vmatpush.msra.mxu0 0.0
    %1464 = vmatpush.msra.mxu0 0.0
    %1465 = vmatpush.msra.mxu0 0.0
    %1466 = vmatpush.msra.mxu0 0.0
    %1467 = vmatpush.msra.mxu0 0.0
    %1468 = vmatpush.msra.mxu0 0.0
    %1469 = vmatpush.msra.mxu0 0.0
    %1470 = vmatpush.msra.mxu0 %v1414
    %1471 = vmatpush.msra.mxu0 %v1411
    %1472 = vmatpush.msra.mxu0 %v1408
    %1473 = vmatpush.msra.mxu0 %v1405
    %1474 = vmatmul.f32.gmra.mxu0 %v1416
    %v1475 = vpop.f32.mrf.mxu0
    %v1476 = vadd.f32 0.0, %v1475
    %1477 = vdwg.mxu0
    %v1478 = vld [vmem:[%s1370 + $0x3] sm:$0x1]
    %v1479 = vperm.slane %v1478, 0
    %v1480 = vadd.f32 %v1436, %v1479
    %v1481 = vld [vmem:[%s1370 + $0x4] sm:$0x1]
    %v1482 = vperm.slane %v1481, 0
    %v1483 = vadd.f32 %v1456, %v1482
    %v1484 = vld [vmem:[%s1370 + $0x5] sm:$0x1]
    %v1485 = vperm.slane %v1484, 0
    %v1486 = vadd.f32 %v1476, %v1485
    %v1488 = vsel %vm252, %v1480, 0
    %v1491 = vsel %vm252, %v1483, 0
    %1493 = vmatpush.xpose.msra.mxu0 0.0
    %1494 = vmatpush.xpose.msra.mxu0 0.0
    %1495 = vmatpush.xpose.msra.mxu0 0.0
    %1496 = vmatpush.xpose.msra.mxu0 0.0
    %1497 = vmatpush.xpose.msra.mxu0 0.0
    %1498 = vmatpush.xpose.msra.mxu0 0.0
    %1499 = vmatpush.xpose.msra.mxu0 0.0
    %1500 = vmatpush.xpose.msra.mxu0 0.0
    %1501 = vmatpush.xpose.msra.mxu0 0.0
    %1502 = vmatpush.xpose.msra.mxu0 0.0
    %1503 = vmatpush.xpose.msra.mxu0 0.0
    %1504 = vmatpush.xpose.msra.mxu0 0.0
    %1505 = vmatpush.xpose.msra.mxu0 0.0
    %1506 = vmatpush.xpose.msra.mxu0 0.0
    %1507 = vmatpush.xpose.msra.mxu0 0.0
    %1508 = vmatpush.xpose.msra.mxu0 %v1491
    %1509 = vmatmul.f32.gmra.mxu0 %v1488
    %v1510 = vpop.f32.mrf.mxu0
    %v1511 = vadd.f32 0.0, %v1510
    %1512 = vdwg.mxu0
    %v1513 = vmul.f32 %v1511, 0.17677669
    %v1514 = vsel %vm985, %v1513, -inf
    %1515 = vmax.xlane.f32.xlu0 %v1514
    %v1516 = vpop.xlane.xlu0 %1515
    %v1517 = vsub.f32 %v1513, %v1516
    %v1518 = vmul.f32 %v1517, 1.442695
    %v1519 = vpow.pop %v1518
    %v1520 = vsel %vm985, %v1519, 0.0
    %1521 = vadd.xlane.f32.xlu0 %v1520
    %v1522 = vpop.xlane.xlu0 %1521
    %v1523 = vrcp.pop %v1522
    %v1524 = vmul.f32 %v1522, %v1523
    %v1525 = vsub.f32 1.0, %v1524
    %v1526 = vmul.f32 %v1523, %v1525
    %v1527 = vadd.f32 %v1523, %v1526
    %vm1528 = vweird.f32 %v1522
    %vm1529 = vweird.f32 %v1523
    %vm1530 = vmor %vm1528, %vm1529
    %v1531 = vsel %vm1530, %v1523, %v1527
    %v1532 = vand.u32 2147483647, %v1522
    %vm1533 = vcmp.eq.f32.partialorder %v1532, 8.507059e+37
    %v1534 = vand.u32 %v1522, 2147483648
    %v1535 = vor.u32 1.1754944e-38, %v1534
    %v1536 = vsel %vm1533, %v1535, %v1531
    %v1537 = vmul.f32 %v1519, %v1536
    %v1539 = vsel %vm985, %v1537, 0
    %1541 = vmatpush.msra.mxu0 0.0
    %1542 = vmatpush.msra.mxu0 0.0
    %1543 = vmatpush.msra.mxu0 0.0
    %1544 = vmatpush.msra.mxu0 0.0
    %1545 = vmatpush.msra.mxu0 0.0
    %1546 = vmatpush.msra.mxu0 0.0
    %1547 = vmatpush.msra.mxu0 0.0
    %1548 = vmatpush.msra.mxu0 0.0
    %1549 = vmatpush.msra.mxu0 0.0
    %1550 = vmatpush.msra.mxu0 0.0
    %1551 = vmatpush.msra.mxu0 0.0
    %1552 = vmatpush.msra.mxu0 0.0
    %1553 = vmatpush.msra.mxu0 0.0
    %1554 = vmatpush.msra.mxu0 0.0
    %1555 = vmatpush.msra.mxu0 0.0
    %1556 = vmatpush.msra.mxu0 %v1486
    %1557 = vmatmul.f32.gmra.mxu0 %v1539
    %v1558 = vpop.f32.mrf.mxu0
    %v1559 = vadd.f32 0.0, %v1558
    %1560 = vdwg.mxu0
    %v1561 = vld [vmem:[%s1341 + $0x20] sm:$0xff]
    %v1562 = vld [vmem:[%s1341 + $0x28] sm:$0xff]
    %v1563 = vld [vmem:[%s1341 + $0x30] sm:$0xff]
    %v1564 = vld [vmem:[%s1341 + $0x38] sm:$0xff]
    %v1566 = vsel %vm252, %v1559, 0
    %1568 = vmatpush.msra.mxu0 0.0
    %1569 = vmatpush.msra.mxu0 0.0
    %1570 = vmatpush.msra.mxu0 0.0
    %1571 = vmatpush.msra.mxu0 0.0
    %1572 = vmatpush.msra.mxu0 0.0
    %1573 = vmatpush.msra.mxu0 0.0
    %1574 = vmatpush.msra.mxu0 0.0
    %1575 = vmatpush.msra.mxu0 0.0
    %1576 = vmatpush.msra.mxu0 0.0
    %1577 = vmatpush.msra.mxu0 0.0
    %1578 = vmatpush.msra.mxu0 0.0
    %1579 = vmatpush.msra.mxu0 0.0
    %1580 = vmatpush.msra.mxu0 %v1564
    %1581 = vmatpush.msra.mxu0 %v1563
    %1582 = vmatpush.msra.mxu0 %v1562
    %1583 = vmatpush.msra.mxu0 %v1561
    %1584 = vmatmul.f32.gmra.mxu0 %v1566
    %v1585 = vpop.f32.mrf.mxu0
    %v1586 = vadd.f32 0.0, %v1585
    %1587 = vdwg.mxu0
    %v1588 = vadd.f32 %v1401, %v1586
    %v1589 = vld [vmem:[%s1370 + $0x6] sm:$0x1]
    %v1590 = vperm.slane %v1589, 0
    %v1591 = vadd.f32 %v1588, %v1590
    %v1592 = vld [vmem:[%s1370 + $0x7] sm:$0x1]
    %v1593 = vld [vmem:[%s1370 + $0x8] sm:$0x1]
    %v1594 = vsel %vm252, %v1591, 0.0
    %1595 = vadd.xlane.f32.xlu0 %v1594
    %v1596 = vpop.xlane.xlu0 %1595
    %v1597 = vmul.f32 %v1596, %v850
    %v1598 = vsub.f32 %v1591, %v1597
    %v1599 = vmul.f32 %v1598, %v1598
    %v1600 = vsel %vm252, %v1599, 0.0
    %1601 = vadd.xlane.f32.xlu0 %v1600
    %v1602 = vpop.xlane.xlu0 %1601
    %v1603 = vmul.f32 %v1602, %v850
    %v1604 = vadd.f32 %v1603, 1e-05
    %v1605 = vrsqrt.pop %v1604
    %v1606 = vmul.f32 %v1605, %v1604
    %v1607 = vmul.f32 %v1606, %v1605
    %v1608 = vmul.f32 0.5, %v1607
    %v1609 = vsub.f32 1.5, %v1608
    %v1610 = vmul.f32 %v1605, %v1609
    %vm1611 = vweird.f32 %v1604
    %vm1612 = vweird.f32 %v1605
    %vm1613 = vmor %vm1611, %vm1612
    %v1614 = vsel %vm1613, %v1605, %v1610
    %v1615 = vmul.f32 %v1598, %v1614
    %v1616 = vperm.slane %v1592, 0
    %v1617 = vmul.f32 %v1615, %v1616
    %v1618 = vperm.slane %v1593, 0
    %v1619 = vadd.f32 %v1617, %v1618
    %v1620 = vld [vmem:[%s1341 + $0x40] sm:$0xff]
    %v1621 = vld [vmem:[%s1341 + $0x48] sm:$0xff]
    %v1622 = vld [vmem:[%s1341 + $0x50] sm:$0xff]
    %v1623 = vld [vmem:[%s1341 + $0x58] sm:$0xff]
    %v1624 = vld [vmem:[%s1370 + $0x9] sm:$0x1]
    %v1625 = vperm.slane %v1624, 0
    %v1627 = vsel %vm252, %v1619, 0
    %1629 = vmatpush.msra.mxu0 0.0
    %1630 = vmatpush.msra.mxu0 0.0
    %1631 = vmatpush.msra.mxu0 0.0
    %1632 = vmatpush.msra.mxu0 0.0
    %1633 = vmatpush.msra.mxu0 0.0
    %1634 = vmatpush.msra.mxu0 0.0
    %1635 = vmatpush.msra.mxu0 0.0
    %1636 = vmatpush.msra.mxu0 0.0
    %1637 = vmatpush.msra.mxu0 0.0
    %1638 = vmatpush.msra.mxu0 0.0
    %1639 = vmatpush.msra.mxu0 0.0
    %1640 = vmatpush.msra.mxu0 0.0
    %1641 = vmatpush.msra.mxu0 %v1623
    %1642 = vmatpush.msra.mxu0 %v1622
    %1643 = vmatpush.msra.mxu0 %v1621
    %1644 = vmatpush.msra.mxu0 %v1620
    %1645 = vmatmul.f32.gmra.mxu0 %v1627
    %v1646 = vpop.f32.mrf.mxu0
    %v1647 = vadd.f32 %v1625, %v1646
    %1648 = vdwg.mxu0
    %v1649 = vmax.f32 %v1647, 0.0
    %v1650 = vld [vmem:[%s1341 + $0x60] sm:$0xff]
    %v1651 = vld [vmem:[%s1341 + $0x68] sm:$0xff]
    %v1652 = vld [vmem:[%s1341 + $0x70] sm:$0xff]
    %v1653 = vld [vmem:[%s1341 + $0x78] sm:$0xff]
    %v1655 = vsel %vm1126, %v1649, 0
    %v1658 = vsel %vm1126, %v1650, 0
    %v1661 = vsel %vm1126, %v1651, 0
    %v1664 = vsel %vm1126, %v1652, 0
    %v1667 = vsel %vm1126, %v1653, 0
    %1669 = vmatpush.xpose.msra.mxu0 0.0
    %1670 = vmatpush.xpose.msra.mxu0 0.0
    %1671 = vmatpush.xpose.msra.mxu0 0.0
    %1672 = vmatpush.xpose.msra.mxu0 0.0
    %1673 = vmatpush.xpose.msra.mxu0 0.0
    %1674 = vmatpush.xpose.msra.mxu0 0.0
    %1675 = vmatpush.xpose.msra.mxu0 0.0
    %1676 = vmatpush.xpose.msra.mxu0 0.0
    %1677 = vmatpush.xpose.msra.mxu0 0.0
    %1678 = vmatpush.xpose.msra.mxu0 0.0
    %1679 = vmatpush.xpose.msra.mxu0 0.0
    %1680 = vmatpush.xpose.msra.mxu0 0.0
    %1681 = vmatpush.xpose.msra.mxu0 %v1667
    %1682 = vmatpush.xpose.msra.mxu0 %v1664
    %1683 = vmatpush.xpose.msra.mxu0 %v1661
    %1684 = vmatpush.xpose.msra.mxu0 %v1658
    %1685 = vmatmul.f32.gmra.mxu0 %v1655
    %v1686 = vpop.f32.mrf.mxu0
    %v1687 = vadd.f32 0.0, %v1686
    %1688 = vdwg.mxu0
    %v1689 = vadd.f32 %v1619, %v1687
    %v1690 = vld [vmem:[%s1370 + $0xa] sm:$0x1]
    %v1691 = vperm.slane %v1690, 0
    %v1692 = vadd.f32 %v1689, %v1691
    %v1693 = vld [vmem:[%s1370 + $0xb] sm:$0x1]
    %v1694 = vld [vmem:[%s1370 + $0xc] sm:$0x1]
    %v1695 = vsel %vm252, %v1692, 0.0
    %1696 = vadd.xlane.f32.xlu0 %v1695
    %v1697 = vpop.xlane.xlu0 %1696
    %v1698 = vmul.f32 %v1697, %v850
    %v1699 = vsub.f32 %v1692, %v1698
    %v1700 = vmul.f32 %v1699, %v1699
    %v1701 = vsel %vm252, %v1700, 0.0
    %1702 = vadd.xlane.f32.xlu0 %v1701
    %v1703 = vpop.xlane.xlu0 %1702
    %v1704 = vmul.f32 %v1703, %v850
    %v1705 = vadd.f32 %v1704, 1e-05
    %v1706 = vrsqrt.pop %v1705
    %v1707 = vmul.f32 %v1706, %v1705
    %v1708 = vmul.f32 %v1707, %v1706
    %v1709 = vmul.f32 0.5, %v1708
    %v1710 = vsub.f32 1.5, %v1709
    %v1711 = vmul.f32 %v1706, %v1710
    %vm1712 = vweird.f32 %v1705
    %vm1713 = vweird.f32 %v1706
    %vm1714 = vmor %vm1712, %vm1713
    %v1715 = vsel %vm1714, %v1706, %v1711
    %v1716 = vmul.f32 %v1699, %v1715
    %v1717 = vperm.slane %v1693, 0
    %v1718 = vmul.f32 %v1716, %v1717
    %v1719 = vperm.slane %v1694, 0
    %v1720 = vadd.f32 %v1718, %v1719
    %s1721 = scalar_lea.vmem [#allocation2], 64
    %v1722 = vld [vmem:[%s1721] sm:$0xff]
    %v1723 = vld [vmem:[%s1721 + $0x8] sm:$0xff]
    %v1724 = vld [vmem:[%s1721 + $0x10] sm:$0xff]
    %v1725 = vld [vmem:[%s1721 + $0x18] sm:$0xff]
    %v1726 = vld [vmem:[%s1721 + $0x20] sm:$0xff]
    %v1727 = vld [vmem:[%s1721 + $0x28] sm:$0xff]
    %v1728 = vld [vmem:[%s1721 + $0x30] sm:$0xff]
    %v1729 = vld [vmem:[%s1721 + $0x38] sm:$0xff]
    %v1731 = vsel %vm252, %v1720, 0
    %1733 = vmatpush.msra.mxu0 0.0
    %1734 = vmatpush.msra.mxu0 0.0
    %1735 = vmatpush.msra.mxu0 0.0
    %1736 = vmatpush.msra.mxu0 0.0
    %1737 = vmatpush.msra.mxu0 0.0
    %1738 = vmatpush.msra.mxu0 0.0
    %1739 = vmatpush.msra.mxu0 0.0
    %1740 = vmatpush.msra.mxu0 0.0
    %1741 = vmatpush.msra.mxu0 0.0
    %1742 = vmatpush.msra.mxu0 0.0
    %1743 = vmatpush.msra.mxu0 0.0
    %1744 = vmatpush.msra.mxu0 0.0
    %1745 = vmatpush.msra.mxu0 %v1728
    %1746 = vmatpush.msra.mxu0 %v1726
    %1747 = vmatpush.msra.mxu0 %v1724
    %1748 = vmatpush.msra.mxu0 %v1722
    %1749 = vmatmul.f32.gmra.mxu0 %v1731
    %v1750 = vpop.f32.mrf.mxu0
    %v1751 = vadd.f32 0.0, %v1750
    %1752 = vdwg.mxu0
    %1753 = vmatpush.msra.mxu0 0.0
    %1754 = vmatpush.msra.mxu0 0.0
    %1755 = vmatpush.msra.mxu0 0.0
    %1756 = vmatpush.msra.mxu0 0.0
    %1757 = vmatpush.msra.mxu0 0.0
    %1758 = vmatpush.msra.mxu0 0.0
    %1759 = vmatpush.msra.mxu0 0.0
    %1760 = vmatpush.msra.mxu0 0.0
    %1761 = vmatpush.msra.mxu0 0.0
    %1762 = vmatpush.msra.mxu0 0.0
    %1763 = vmatpush.msra.mxu0 0.0
    %1764 = vmatpush.msra.mxu0 0.0
    %1765 = vmatpush.msra.mxu0 %v1729
    %1766 = vmatpush.msra.mxu0 %v1727
    %1767 = vmatpush.msra.mxu0 %v1725
    %1768 = vmatpush.msra.mxu0 %v1723
    %1769 = vmatmul.f32.gmra.mxu0 %v1731
    %v1770 = vpop.f32.mrf.mxu0
    %v1771 = vadd.f32 0.0, %v1770
    %1772 = vdwg.mxu0
    %v1773 = vld [vmem:[%s1370 + $0xd] sm:$0x1]
    %v1774 = vperm.slane %v1773, 0
    %v1775 = vadd.f32 %v1751, %v1774
    %v1776 = vld [vmem:[%s1370 + $0xe] sm:$0x1]
    %v1777 = vperm.slane %v1776, 0
    %v1778 = vadd.f32 %v1771, %v1777
    %v1779 = vpack.c.bf16 %v1778, %v1778
    %v1781 = vsel %vm252, %v1779, 0
    %1783 = vmatpush.bf16.msra.mxu0 0
    %1784 = vmatpush.bf16.msra.mxu0 0
    %1785 = vmatpush.bf16.msra.mxu0 0
    %1786 = vmatpush.bf16.msra.mxu0 0
    %1787 = vmatpush.bf16.msra.mxu0 0
    %1788 = vmatpush.bf16.msra.mxu0 0
    %1789 = vmatpush.bf16.msra.mxu0 %v689
    %1790 = vmatpush.bf16.msra.mxu0 %v687
    %1791 = vmatmul.bf16.gmra.mxu0 %v1781
    %v1792 = vpop.f32.mrf.mxu0
    %v1793 = vadd.f32 0.0, %v1792
    %v1794 = vpop.f32.mrf.mxu0
    %1795 = vdwg.mxu0
    %1796 = vmatpush.bf16.msra.mxu0 0
    %1797 = vmatpush.bf16.msra.mxu0 0
    %1798 = vmatpush.bf16.msra.mxu0 0
    %1799 = vmatpush.bf16.msra.mxu0 0
    %1800 = vmatpush.bf16.msra.mxu0 0
    %1801 = vmatpush.bf16.msra.mxu0 0
    %1802 = vmatpush.bf16.msra.mxu0 %v690
    %1803 = vmatpush.bf16.msra.mxu0 %v688
    %1804 = vmatmul.bf16.gmra.mxu0 %v1781
    %v1805 = vpop.f32.mrf.mxu0
    %v1806 = vadd.f32 0.0, %v1805
    %v1807 = vpop.f32.mrf.mxu0
    %1808 = vdwg.mxu0
    %vm1809 = vcmask 130048
    %1810 = vst.msk [vmem:[#allocation5] sm:$0xff] %vm1809, %v1775
    %1811 = vst [vmem:[#allocation6] sm:$0xff] %v1793
    %1812 = vst [vmem:[#allocation6 + $0x8] sm:$0xff] %v1806
    %s1813 = scalar_lea.vmem %s0, 64
    %v1814 = vld [vmem:[%s1813] sm:$0xff]
    %v1815 = vld [vmem:[%s1813 + $0x8] sm:$0xff]
    %v1816 = vld [vmem:[%s1813 + $0x10] sm:$0xff]
    %v1817 = vld [vmem:[%s1813 + $0x18] sm:$0xff]
    %v1818 = vld [vmem:[%s1813 + $0x20] sm:$0xff]
    %v1819 = vld [vmem:[%s1813 + $0x28] sm:$0xff]
    %v1820 = vld [vmem:[%s1813 + $0x30] sm:$0xff]
    %v1821 = vld [vmem:[%s1813 + $0x38] sm:$0xff]
    %v1822 = vld [vmem:[%s1] sm:$0xff]
    %v1823 = vld [vmem:[%s1 + $0x8] sm:$0xff]
    %v1824 = vld [vmem:[%s1 + $0x10] sm:$0xff]
    %v1825 = vld [vmem:[%s1 + $0x18] sm:$0xff]
    %v1826 = vadd.f32 %v1814, %v1815
    %1827 = vadd.xlane.f32.xlu0 %v1826
    %v1828 = vpop.xlane.xlu0 %1827
    %v1829 = vadd.f32 %v1816, %v1817
    %1830 = vadd.xlane.f32.xlu0 %v1829
    %v1831 = vpop.xlane.xlu0 %1830
    %v1832 = vadd.f32 %v1818, %v1819
    %1833 = vadd.xlane.f32.xlu0 %v1832
    %v1834 = vpop.xlane.xlu0 %1833
    %v1835 = vadd.f32 %v1820, %v1821
    %1836 = vadd.xlane.f32.xlu0 %v1835
    %v1837 = vpop.xlane.xlu0 %1836
    %v1838 = vmul.f32 %v1828, %v85
    %v1839 = vmul.f32 %v1831, %v85
    %v1840 = vmul.f32 %v1834, %v85
    %v1841 = vmul.f32 %v1837, %v85
    %v1842 = vsub.f32 %v1814, %v1838
    %v1843 = vsub.f32 %v1815, %v1838
    %v1844 = vsub.f32 %v1816, %v1839
    %v1845 = vsub.f32 %v1817, %v1839
    %v1846 = vsub.f32 %v1818, %v1840
    %v1847 = vsub.f32 %v1819, %v1840
    %v1848 = vsub.f32 %v1820, %v1841
    %v1849 = vsub.f32 %v1821, %v1841
    %v1850 = vmul.f32 %v1842, %v1842
    %v1851 = vmul.f32 %v1843, %v1843
    %v1852 = vmul.f32 %v1844, %v1844
    %v1853 = vmul.f32 %v1845, %v1845
    %v1854 = vmul.f32 %v1846, %v1846
    %v1855 = vmul.f32 %v1847, %v1847
    %v1856 = vmul.f32 %v1848, %v1848
    %v1857 = vmul.f32 %v1849, %v1849
    %v1858 = vadd.f32 %v1850, %v1851
    %1859 = vadd.xlane.f32.xlu0 %v1858
    %v1860 = vpop.xlane.xlu0 %1859
    %v1861 = vadd.f32 %v1852, %v1853
    %1862 = vadd.xlane.f32.xlu0 %v1861
    %v1863 = vpop.xlane.xlu0 %1862
    %v1864 = vadd.f32 %v1854, %v1855
    %1865 = vadd.xlane.f32.xlu0 %v1864
    %v1866 = vpop.xlane.xlu0 %1865
    %v1867 = vadd.f32 %v1856, %v1857
    %1868 = vadd.xlane.f32.xlu0 %v1867
    %v1869 = vpop.xlane.xlu0 %1868
    %v1870 = vmul.f32 %v1860, %v85
    %v1871 = vmul.f32 %v1863, %v85
    %v1872 = vmul.f32 %v1866, %v85
    %v1873 = vmul.f32 %v1869, %v85
    %v1874 = vadd.f32 %v1870, 1e-05
    %v1875 = vadd.f32 %v1871, 1e-05
    %v1876 = vadd.f32 %v1872, 1e-05
    %v1877 = vadd.f32 %v1873, 1e-05
    %v1878 = vrsqrt.pop %v1874
    %v1879 = vmul.f32 %v1878, %v1874
    %v1880 = vmul.f32 %v1879, %v1878
    %v1881 = vmul.f32 0.5, %v1880
    %v1882 = vsub.f32 1.5, %v1881
    %v1883 = vmul.f32 %v1878, %v1882
    %vm1884 = vweird.f32 %v1874
    %vm1885 = vweird.f32 %v1878
    %vm1886 = vmor %vm1884, %vm1885
    %v1887 = vsel %vm1886, %v1878, %v1883
    %v1888 = vrsqrt.pop %v1875
    %v1889 = vmul.f32 %v1888, %v1875
    %v1890 = vmul.f32 %v1889, %v1888
    %v1891 = vmul.f32 0.5, %v1890
    %v1892 = vsub.f32 1.5, %v1891
    %v1893 = vmul.f32 %v1888, %v1892
    %vm1894 = vweird.f32 %v1875
    %vm1895 = vweird.f32 %v1888
    %vm1896 = vmor %vm1894, %vm1895
    %v1897 = vsel %vm1896, %v1888, %v1893
    %v1898 = vrsqrt.pop %v1876
    %v1899 = vmul.f32 %v1898, %v1876
    %v1900 = vmul.f32 %v1899, %v1898
    %v1901 = vmul.f32 0.5, %v1900
    %v1902 = vsub.f32 1.5, %v1901
    %v1903 = vmul.f32 %v1898, %v1902
    %vm1904 = vweird.f32 %v1876
    %vm1905 = vweird.f32 %v1898
    %vm1906 = vmor %vm1904, %vm1905
    %v1907 = vsel %vm1906, %v1898, %v1903
    %v1908 = vrsqrt.pop %v1877
    %v1909 = vmul.f32 %v1908, %v1877
    %v1910 = vmul.f32 %v1909, %v1908
    %v1911 = vmul.f32 0.5, %v1910
    %v1912 = vsub.f32 1.5, %v1911
    %v1913 = vmul.f32 %v1908, %v1912
    %vm1914 = vweird.f32 %v1877
    %vm1915 = vweird.f32 %v1908
    %vm1916 = vmor %vm1914, %vm1915
    %v1917 = vsel %vm1916, %v1908, %v1913
    %v1918 = vmul.f32 %v1842, %v1887
    %v1919 = vmul.f32 %v1843, %v1887
    %v1920 = vmul.f32 %v1844, %v1897
    %v1921 = vmul.f32 %v1845, %v1897
    %v1922 = vmul.f32 %v1846, %v1907
    %v1923 = vmul.f32 %v1847, %v1907
    %v1924 = vmul.f32 %v1848, %v1917
    %v1925 = vmul.f32 %v1849, %v1917
    %1927 = vset.pattern.permute.xlu0 0
    %1928 = vperm.xlu0 %1927, %v1822
    %v1929 = vpop.permute.xlu0 %1928
    %1932 = vset.pattern.permute.xlu0 0
    %1933 = vperm.xlu0 %1932, %v1823
    %v1934 = vpop.permute.xlu0 %1933
    %1937 = vset.pattern.permute.xlu0 0
    %1938 = vperm.xlu0 %1937, %v1824
    %v1939 = vpop.permute.xlu0 %1938
    %1942 = vset.pattern.permute.xlu0 0
    %1943 = vperm.xlu0 %1942, %v1825
    %v1944 = vpop.permute.xlu0 %1943
    %v1946 = vmul.f32 %v1918, %v1929
    %v1947 = vmul.f32 %v1919, %v1929
    %v1948 = vmul.f32 %v1920, %v1934
    %v1949 = vmul.f32 %v1921, %v1934
    %v1950 = vmul.f32 %v1922, %v1939
    %v1951 = vmul.f32 %v1923, %v1939
    %v1952 = vmul.f32 %v1924, %v1944
    %v1953 = vmul.f32 %v1925, %v1944
    %1954 = vset.pattern.permute.xlu0 1
    %1955 = vperm.xlu0 %1954, %v1822
    %v1956 = vpop.permute.xlu0 %1955
    %1958 = vset.pattern.permute.xlu0 1
    %1959 = vperm.xlu0 %1958, %v1823
    %v1960 = vpop.permute.xlu0 %1959
    %1962 = vset.pattern.permute.xlu0 1
    %1963 = vperm.xlu0 %1962, %v1824
    %v1964 = vpop.permute.xlu0 %1963
    %1966 = vset.pattern.permute.xlu0 1
    %1967 = vperm.xlu0 %1966, %v1825
    %v1968 = vpop.permute.xlu0 %1967
    %v1970 = vadd.f32 %v1946, %v1956
    %v1971 = vadd.f32 %v1947, %v1956
    %v1972 = vadd.f32 %v1948, %v1960
    %v1973 = vadd.f32 %v1949, %v1960
    %v1974 = vadd.f32 %v1950, %v1964
    %v1975 = vadd.f32 %v1951, %v1964
    %v1976 = vadd.f32 %v1952, %v1968
    %v1977 = vadd.f32 %v1953, %v1968
    %v1978 = vmax.f32 %v1970, 0.0
    %v1979 = vmax.f32 %v1971, 0.0
    %v1980 = vmax.f32 %v1972, 0.0
    %v1981 = vmax.f32 %v1973, 0.0
    %v1982 = vmax.f32 %v1974, 0.0
    %v1983 = vmax.f32 %v1975, 0.0
    %v1984 = vmax.f32 %v1976, 0.0
    %v1985 = vmax.f32 %v1977, 0.0
    %v1986 = vld [vmem:[%s3] sm:$0xf]
    %v1987 = vld [vmem:[%s3 + $0x4] sm:$0xf]
    %v1988 = vld [vmem:[%s3 + $0x8] sm:$0xf]
    %v1989 = vld [vmem:[%s3 + $0xc] sm:$0xf]
    %v1990 = vpack.c.bf16 %v1980, %v1978
    %v1991 = vpack.c.bf16 %v1981, %v1979
    %v1992 = vpack.c.bf16 %v1984, %v1982
    %v1993 = vpack.c.bf16 %v1985, %v1983
    %v1998 = vunpack.c.l.b16 %v1986
    %v1999 = vunpack.c.l.b16 %v1987
    %v2000 = vunpack.c.l.b16 %v1988
    %v2001 = vunpack.c.l.b16 %v1989
    %v2002 = vpack.c.b16 %v1999, %v1998
    %v2003 = vpack.c.b16 %v2001, %v2000
    %v2005 = vsel %vm252, %v2002, 0
    %v2008 = vsel %vm252, %v2003, 0
    %2010 = vmatpush.bf16.msra.mxu0 0
    %2011 = vmatpush.bf16.msra.mxu0 0
    %2012 = vmatpush.bf16.msra.mxu0 0
    %2013 = vmatpush.bf16.msra.mxu0 0
    %2014 = vmatpush.bf16.msra.mxu0 0
    %2015 = vmatpush.bf16.msra.mxu0 0
    %2016 = vmatpush.bf16.msra.mxu0 %v1992
    %2017 = vmatpush.bf16.msra.mxu0 %v1990
    %2018 = vmatmul.bf16.gmra.mxu0 %v2005
    %v2019 = vpop.f32.mrf.mxu0
    %v2020 = vadd.f32 0.0, %v2019
    %v2021 = vpop.f32.mrf.mxu0
    %v2022 = vadd.f32 0.0, %v2021
    %2023 = vmatmul.bf16.gmra.mxu0 %v2008
    %v2024 = vpop.f32.mrf.mxu0
    %v2025 = vadd.f32 0.0, %v2024
    %v2026 = vpop.f32.mrf.mxu0
    %v2027 = vadd.f32 0.0, %v2026
    %2028 = vdwg.mxu0
    %2029 = vmatpush.bf16.msra.mxu0 0
    %2030 = vmatpush.bf16.msra.mxu0 0
    %2031 = vmatpush.bf16.msra.mxu0 0
    %2032 = vmatpush.bf16.msra.mxu0 0
    %2033 = vmatpush.bf16.msra.mxu0 0
    %2034 = vmatpush.bf16.msra.mxu0 0
    %2035 = vmatpush.bf16.msra.mxu0 %v1993
    %2036 = vmatpush.bf16.msra.mxu0 %v1991
    %2037 = vmatmul.bf16.gmra.mxu0 %v2005
    %v2038 = vpop.f32.mrf.mxu0
    %v2039 = vadd.f32 0.0, %v2038
    %v2040 = vpop.f32.mrf.mxu0
    %v2041 = vadd.f32 0.0, %v2040
    %2042 = vmatmul.bf16.gmra.mxu0 %v2008
    %v2043 = vpop.f32.mrf.mxu0
    %v2044 = vadd.f32 0.0, %v2043
    %v2045 = vpop.f32.mrf.mxu0
    %v2046 = vadd.f32 0.0, %v2045
    %2047 = vdwg.mxu0
    %v2048 = vld [vmem:[%s2] sm:$0xff]
    %v2049 = vld [vmem:[%s2 + $0x8] sm:$0xff]
    %v2050 = vld [vmem:[%s2 + $0x10] sm:$0xff]
    %v2051 = vld [vmem:[%s2 + $0x18] sm:$0xff]
    %v2052 = vadd.f32 %v2020, %v2039
    %2053 = vadd.xlane.f32.xlu0 %v2052
    %v2054 = vpop.xlane.xlu0 %2053
    %v2055 = vadd.f32 %v2022, %v2041
    %2056 = vadd.xlane.f32.xlu0 %v2055
    %v2057 = vpop.xlane.xlu0 %2056
    %v2058 = vadd.f32 %v2025, %v2044
    %2059 = vadd.xlane.f32.xlu0 %v2058
    %v2060 = vpop.xlane.xlu0 %2059
    %v2061 = vadd.f32 %v2027, %v2046
    %2062 = vadd.xlane.f32.xlu0 %v2061
    %v2063 = vpop.xlane.xlu0 %2062
    %v2064 = vmul.f32 %v2054, %v85
    %v2065 = vmul.f32 %v2057, %v85
    %v2066 = vmul.f32 %v2060, %v85
    %v2067 = vmul.f32 %v2063, %v85
    %v2068 = vsub.f32 %v2020, %v2064
    %v2069 = vsub.f32 %v2039, %v2064
    %v2070 = vsub.f32 %v2022, %v2065
    %v2071 = vsub.f32 %v2041, %v2065
    %v2072 = vsub.f32 %v2025, %v2066
    %v2073 = vsub.f32 %v2044, %v2066
    %v2074 = vsub.f32 %v2027, %v2067
    %v2075 = vsub.f32 %v2046, %v2067
    %v2076 = vmul.f32 %v2068, %v2068
    %v2077 = vmul.f32 %v2069, %v2069
    %v2078 = vmul.f32 %v2070, %v2070
    %v2079 = vmul.f32 %v2071, %v2071
    %v2080 = vmul.f32 %v2072, %v2072
    %v2081 = vmul.f32 %v2073, %v2073
    %v2082 = vmul.f32 %v2074, %v2074
    %v2083 = vmul.f32 %v2075, %v2075
    %v2084 = vadd.f32 %v2076, %v2077
    %2085 = vadd.xlane.f32.xlu0 %v2084
    %v2086 = vpop.xlane.xlu0 %2085
    %v2087 = vadd.f32 %v2078, %v2079
    %2088 = vadd.xlane.f32.xlu0 %v2087
    %v2089 = vpop.xlane.xlu0 %2088
    %v2090 = vadd.f32 %v2080, %v2081
    %2091 = vadd.xlane.f32.xlu0 %v2090
    %v2092 = vpop.xlane.xlu0 %2091
    %v2093 = vadd.f32 %v2082, %v2083
    %2094 = vadd.xlane.f32.xlu0 %v2093
    %v2095 = vpop.xlane.xlu0 %2094
    %v2096 = vmul.f32 %v2086, %v85
    %v2097 = vmul.f32 %v2089, %v85
    %v2098 = vmul.f32 %v2092, %v85
    %v2099 = vmul.f32 %v2095, %v85
    %v2100 = vadd.f32 %v2096, 1e-05
    %v2101 = vadd.f32 %v2097, 1e-05
    %v2102 = vadd.f32 %v2098, 1e-05
    %v2103 = vadd.f32 %v2099, 1e-05
    %v2104 = vrsqrt.pop %v2100
    %v2105 = vmul.f32 %v2104, %v2100
    %v2106 = vmul.f32 %v2105, %v2104
    %v2107 = vmul.f32 0.5, %v2106
    %v2108 = vsub.f32 1.5, %v2107
    %v2109 = vmul.f32 %v2104, %v2108
    %vm2110 = vweird.f32 %v2100
    %vm2111 = vweird.f32 %v2104
    %vm2112 = vmor %vm2110, %vm2111
    %v2113 = vsel %vm2112, %v2104, %v2109
    %v2114 = vrsqrt.pop %v2101
    %v2115 = vmul.f32 %v2114, %v2101
    %v2116 = vmul.f32 %v2115, %v2114
    %v2117 = vmul.f32 0.5, %v2116
    %v2118 = vsub.f32 1.5, %v2117
    %v2119 = vmul.f32 %v2114, %v2118
    %vm2120 = vweird.f32 %v2101
    %vm2121 = vweird.f32 %v2114
    %vm2122 = vmor %vm2120, %vm2121
    %v2123 = vsel %vm2122, %v2114, %v2119
    %v2124 = vrsqrt.pop %v2102
    %v2125 = vmul.f32 %v2124, %v2102
    %v2126 = vmul.f32 %v2125, %v2124
    %v2127 = vmul.f32 0.5, %v2126
    %v2128 = vsub.f32 1.5, %v2127
    %v2129 = vmul.f32 %v2124, %v2128
    %vm2130 = vweird.f32 %v2102
    %vm2131 = vweird.f32 %v2124
    %vm2132 = vmor %vm2130, %vm2131
    %v2133 = vsel %vm2132, %v2124, %v2129
    %v2134 = vrsqrt.pop %v2103
    %v2135 = vmul.f32 %v2134, %v2103
    %v2136 = vmul.f32 %v2135, %v2134
    %v2137 = vmul.f32 0.5, %v2136
    %v2138 = vsub.f32 1.5, %v2137
    %v2139 = vmul.f32 %v2134, %v2138
    %vm2140 = vweird.f32 %v2103
    %vm2141 = vweird.f32 %v2134
    %vm2142 = vmor %vm2140, %vm2141
    %v2143 = vsel %vm2142, %v2134, %v2139
    %v2144 = vmul.f32 %v2068, %v2113
    %v2145 = vmul.f32 %v2069, %v2113
    %v2146 = vmul.f32 %v2070, %v2123
    %v2147 = vmul.f32 %v2071, %v2123
    %v2148 = vmul.f32 %v2072, %v2133
    %v2149 = vmul.f32 %v2073, %v2133
    %v2150 = vmul.f32 %v2074, %v2143
    %v2151 = vmul.f32 %v2075, %v2143
    %2153 = vset.pattern.permute.xlu0 0
    %2154 = vperm.xlu0 %2153, %v2048
    %v2155 = vpop.permute.xlu0 %2154
    %2158 = vset.pattern.permute.xlu0 0
    %2159 = vperm.xlu0 %2158, %v2049
    %v2160 = vpop.permute.xlu0 %2159
    %2163 = vset.pattern.permute.xlu0 0
    %2164 = vperm.xlu0 %2163, %v2050
    %v2165 = vpop.permute.xlu0 %2164
    %2168 = vset.pattern.permute.xlu0 0
    %2169 = vperm.xlu0 %2168, %v2051
    %v2170 = vpop.permute.xlu0 %2169
    %v2172 = vmul.f32 %v2144, %v2155
    %v2173 = vmul.f32 %v2145, %v2155
    %v2174 = vmul.f32 %v2146, %v2160
    %v2175 = vmul.f32 %v2147, %v2160
    %v2176 = vmul.f32 %v2148, %v2165
    %v2177 = vmul.f32 %v2149, %v2165
    %v2178 = vmul.f32 %v2150, %v2170
    %v2179 = vmul.f32 %v2151, %v2170
    %2180 = vset.pattern.permute.xlu0 1
    %2181 = vperm.xlu0 %2180, %v2048
    %v2182 = vpop.permute.xlu0 %2181
    %2184 = vset.pattern.permute.xlu0 1
    %2185 = vperm.xlu0 %2184, %v2049
    %v2186 = vpop.permute.xlu0 %2185
    %2188 = vset.pattern.permute.xlu0 1
    %2189 = vperm.xlu0 %2188, %v2050
    %v2190 = vpop.permute.xlu0 %2189
    %2192 = vset.pattern.permute.xlu0 1
    %2193 = vperm.xlu0 %2192, %v2051
    %v2194 = vpop.permute.xlu0 %2193
    %v2196 = vadd.f32 %v2172, %v2182
    %v2197 = vadd.f32 %v2173, %v2182
    %v2198 = vadd.f32 %v2174, %v2186
    %v2199 = vadd.f32 %v2175, %v2186
    %v2200 = vadd.f32 %v2176, %v2190
    %v2201 = vadd.f32 %v2177, %v2190
    %v2202 = vadd.f32 %v2178, %v2194
    %v2203 = vadd.f32 %v2179, %v2194
    %v2204 = vmax.f32 %v2196, 0.0
    %v2205 = vmax.f32 %v2197, 0.0
    %v2206 = vmax.f32 %v2198, 0.0
    %v2207 = vmax.f32 %v2199, 0.0
    %v2208 = vmax.f32 %v2200, 0.0
    %v2209 = vmax.f32 %v2201, 0.0
    %v2210 = vmax.f32 %v2202, 0.0
    %v2211 = vmax.f32 %v2203, 0.0
    %v2212 = vld [vmem:[%s3 + $0x10] sm:$0xf]
    %v2213 = vld [vmem:[%s3 + $0x14] sm:$0xf]
    %v2214 = vld [vmem:[%s3 + $0x18] sm:$0xf]
    %v2215 = vld [vmem:[%s3 + $0x1c] sm:$0xf]
    %v2216 = vpack.c.bf16 %v2206, %v2204
    %v2217 = vpack.c.bf16 %v2207, %v2205
    %v2218 = vpack.c.bf16 %v2210, %v2208
    %v2219 = vpack.c.bf16 %v2211, %v2209
    %2220 = vset.pattern.permute.xlu0 2
    %2221 = vperm.xlu0 %2220, %v2048
    %v2222 = vpop.permute.xlu0 %2221
    %2224 = vset.pattern.permute.xlu0 2
    %2225 = vperm.xlu0 %2224, %v2049
    %v2226 = vpop.permute.xlu0 %2225
    %2228 = vset.pattern.permute.xlu0 2
    %2229 = vperm.xlu0 %2228, %v2050
    %v2230 = vpop.permute.xlu0 %2229
    %2232 = vset.pattern.permute.xlu0 2
    %2233 = vperm.xlu0 %2232, %v2051
    %v2234 = vpop.permute.xlu0 %2233
    %v2240 = vunpack.c.l.b16 %v2212
    %v2241 = vunpack.c.l.b16 %v2213
    %v2242 = vunpack.c.l.b16 %v2214
    %v2243 = vunpack.c.l.b16 %v2215
    %v2244 = vpack.c.b16 %v2241, %v2240
    %v2245 = vpack.c.b16 %v2243, %v2242
    %v2247 = vsel %vm252, %v2244, 0
    %v2250 = vsel %vm252, %v2245, 0
    %2252 = vmatpush.bf16.msra.mxu0 0
    %2253 = vmatpush.bf16.msra.mxu0 0
    %2254 = vmatpush.bf16.msra.mxu0 0
    %2255 = vmatpush.bf16.msra.mxu0 0
    %2256 = vmatpush.bf16.msra.mxu0 0
    %2257 = vmatpush.bf16.msra.mxu0 0
    %2258 = vmatpush.bf16.msra.mxu0 %v2218
    %2259 = vmatpush.bf16.msra.mxu0 %v2216
    %2260 = vmatmul.bf16.gmra.mxu0 %v2247
    %v2261 = vpop.f32.mrf.mxu0
    %v2262 = vadd.f32 %v2222, %v2261
    %v2263 = vpop.f32.mrf.mxu0
    %v2264 = vadd.f32 %v2226, %v2263
    %2265 = vmatmul.bf16.gmra.mxu0 %v2250
    %v2266 = vpop.f32.mrf.mxu0
    %v2267 = vadd.f32 %v2230, %v2266
    %v2268 = vpop.f32.mrf.mxu0
    %v2269 = vadd.f32 %v2234, %v2268
    %2270 = vdwg.mxu0
    %2271 = vmatpush.bf16.msra.mxu0 0
    %2272 = vmatpush.bf16.msra.mxu0 0
    %2273 = vmatpush.bf16.msra.mxu0 0
    %2274 = vmatpush.bf16.msra.mxu0 0
    %2275 = vmatpush.bf16.msra.mxu0 0
    %2276 = vmatpush.bf16.msra.mxu0 0
    %2277 = vmatpush.bf16.msra.mxu0 %v2219
    %2278 = vmatpush.bf16.msra.mxu0 %v2217
    %2279 = vmatmul.bf16.gmra.mxu0 %v2247
    %v2280 = vpop.f32.mrf.mxu0
    %v2281 = vadd.f32 %v2222, %v2280
    %v2282 = vpop.f32.mrf.mxu0
    %v2283 = vadd.f32 %v2226, %v2282
    %2284 = vmatmul.bf16.gmra.mxu0 %v2250
    %v2285 = vpop.f32.mrf.mxu0
    %v2286 = vadd.f32 %v2230, %v2285
    %v2287 = vpop.f32.mrf.mxu0
    %v2288 = vadd.f32 %v2234, %v2287
    %2289 = vdwg.mxu0
    %v2290 = vadd.f32 %v2262, %v2281
    %2291 = vadd.xlane.f32.xlu0 %v2290
    %v2292 = vpop.xlane.xlu0 %2291
    %v2293 = vadd.f32 %v2264, %v2283
    %2294 = vadd.xlane.f32.xlu0 %v2293
    %v2295 = vpop.xlane.xlu0 %2294
    %v2296 = vadd.f32 %v2267, %v2286
    %2297 = vadd.xlane.f32.xlu0 %v2296
    %v2298 = vpop.xlane.xlu0 %2297
    %v2299 = vadd.f32 %v2269, %v2288
    %2300 = vadd.xlane.f32.xlu0 %v2299
    %v2301 = vpop.xlane.xlu0 %2300
    %v2302 = vmul.f32 %v2292, %v85
    %v2303 = vmul.f32 %v2295, %v85
    %v2304 = vmul.f32 %v2298, %v85
    %v2305 = vmul.f32 %v2301, %v85
    %v2306 = vsub.f32 %v2262, %v2302
    %v2307 = vsub.f32 %v2281, %v2302
    %v2308 = vsub.f32 %v2264, %v2303
    %v2309 = vsub.f32 %v2283, %v2303
    %v2310 = vsub.f32 %v2267, %v2304
    %v2311 = vsub.f32 %v2286, %v2304
    %v2312 = vsub.f32 %v2269, %v2305
    %v2313 = vsub.f32 %v2288, %v2305
    %v2314 = vmul.f32 %v2306, %v2306
    %v2315 = vmul.f32 %v2307, %v2307
    %v2316 = vmul.f32 %v2308, %v2308
    %v2317 = vmul.f32 %v2309, %v2309
    %v2318 = vmul.f32 %v2310, %v2310
    %v2319 = vmul.f32 %v2311, %v2311
    %v2320 = vmul.f32 %v2312, %v2312
    %v2321 = vmul.f32 %v2313, %v2313
    %v2322 = vadd.f32 %v2314, %v2315
    %2323 = vadd.xlane.f32.xlu0 %v2322
    %v2324 = vpop.xlane.xlu0 %2323
    %v2325 = vadd.f32 %v2316, %v2317
    %2326 = vadd.xlane.f32.xlu0 %v2325
    %v2327 = vpop.xlane.xlu0 %2326
    %v2328 = vadd.f32 %v2318, %v2319
    %2329 = vadd.xlane.f32.xlu0 %v2328
    %v2330 = vpop.xlane.xlu0 %2329
    %v2331 = vadd.f32 %v2320, %v2321
    %2332 = vadd.xlane.f32.xlu0 %v2331
    %v2333 = vpop.xlane.xlu0 %2332
    %v2334 = vmul.f32 %v2324, %v85
    %v2335 = vmul.f32 %v2327, %v85
    %v2336 = vmul.f32 %v2330, %v85
    %v2337 = vmul.f32 %v2333, %v85
    %v2338 = vadd.f32 %v2334, 1e-05
    %v2339 = vadd.f32 %v2335, 1e-05
    %v2340 = vadd.f32 %v2336, 1e-05
    %v2341 = vadd.f32 %v2337, 1e-05
    %v2342 = vrsqrt.pop %v2338
    %v2343 = vmul.f32 %v2342, %v2338
    %v2344 = vmul.f32 %v2343, %v2342
    %v2345 = vmul.f32 0.5, %v2344
    %v2346 = vsub.f32 1.5, %v2345
    %v2347 = vmul.f32 %v2342, %v2346
    %vm2348 = vweird.f32 %v2338
    %vm2349 = vweird.f32 %v2342
    %vm2350 = vmor %vm2348, %vm2349
    %v2351 = vsel %vm2350, %v2342, %v2347
    %v2352 = vrsqrt.pop %v2339
    %v2353 = vmul.f32 %v2352, %v2339
    %v2354 = vmul.f32 %v2353, %v2352
    %v2355 = vmul.f32 0.5, %v2354
    %v2356 = vsub.f32 1.5, %v2355
    %v2357 = vmul.f32 %v2352, %v2356
    %vm2358 = vweird.f32 %v2339
    %vm2359 = vweird.f32 %v2352
    %vm2360 = vmor %vm2358, %vm2359
    %v2361 = vsel %vm2360, %v2352, %v2357
    %v2362 = vrsqrt.pop %v2340
    %v2363 = vmul.f32 %v2362, %v2340
    %v2364 = vmul.f32 %v2363, %v2362
    %v2365 = vmul.f32 0.5, %v2364
    %v2366 = vsub.f32 1.5, %v2365
    %v2367 = vmul.f32 %v2362, %v2366
    %vm2368 = vweird.f32 %v2340
    %vm2369 = vweird.f32 %v2362
    %vm2370 = vmor %vm2368, %vm2369
    %v2371 = vsel %vm2370, %v2362, %v2367
    %v2372 = vrsqrt.pop %v2341
    %v2373 = vmul.f32 %v2372, %v2341
    %v2374 = vmul.f32 %v2373, %v2372
    %v2375 = vmul.f32 0.5, %v2374
    %v2376 = vsub.f32 1.5, %v2375
    %v2377 = vmul.f32 %v2372, %v2376
    %vm2378 = vweird.f32 %v2341
    %vm2379 = vweird.f32 %v2372
    %vm2380 = vmor %vm2378, %vm2379
    %v2381 = vsel %vm2380, %v2372, %v2377
    %v2382 = vmul.f32 %v2306, %v2351
    %v2383 = vmul.f32 %v2307, %v2351
    %v2384 = vmul.f32 %v2308, %v2361
    %v2385 = vmul.f32 %v2309, %v2361
    %v2386 = vmul.f32 %v2310, %v2371
    %v2387 = vmul.f32 %v2311, %v2371
    %v2388 = vmul.f32 %v2312, %v2381
    %v2389 = vmul.f32 %v2313, %v2381
    %2390 = vset.pattern.permute.xlu0 3
    %2391 = vperm.xlu0 %2390, %v2048
    %v2392 = vpop.permute.xlu0 %2391
    %2394 = vset.pattern.permute.xlu0 3
    %2395 = vperm.xlu0 %2394, %v2049
    %v2396 = vpop.permute.xlu0 %2395
    %2398 = vset.pattern.permute.xlu0 3
    %2399 = vperm.xlu0 %2398, %v2050
    %v2400 = vpop.permute.xlu0 %2399
    %2402 = vset.pattern.permute.xlu0 3
    %2403 = vperm.xlu0 %2402, %v2051
    %v2404 = vpop.permute.xlu0 %2403
    %v2406 = vmul.f32 %v2382, %v2392
    %v2407 = vmul.f32 %v2383, %v2392
    %v2408 = vmul.f32 %v2384, %v2396
    %v2409 = vmul.f32 %v2385, %v2396
    %v2410 = vmul.f32 %v2386, %v2400
    %v2411 = vmul.f32 %v2387, %v2400
    %v2412 = vmul.f32 %v2388, %v2404
    %v2413 = vmul.f32 %v2389, %v2404
    %2414 = vset.pattern.permute.xlu0 4
    %2415 = vperm.xlu0 %2414, %v2048
    %v2416 = vpop.permute.xlu0 %2415
    %2418 = vset.pattern.permute.xlu0 4
    %2419 = vperm.xlu0 %2418, %v2049
    %v2420 = vpop.permute.xlu0 %2419
    %2422 = vset.pattern.permute.xlu0 4
    %2423 = vperm.xlu0 %2422, %v2050
    %v2424 = vpop.permute.xlu0 %2423
    %2426 = vset.pattern.permute.xlu0 4
    %2427 = vperm.xlu0 %2426, %v2051
    %v2428 = vpop.permute.xlu0 %2427
    %v2430 = vadd.f32 %v2406, %v2416
    %v2431 = vadd.f32 %v2407, %v2416
    %v2432 = vadd.f32 %v2408, %v2420
    %v2433 = vadd.f32 %v2409, %v2420
    %v2434 = vadd.f32 %v2410, %v2424
    %v2435 = vadd.f32 %v2411, %v2424
    %v2436 = vadd.f32 %v2412, %v2428
    %v2437 = vadd.f32 %v2413, %v2428
    %v2438 = vpack.c.bf16 %v2432, %v2430
    %v2439 = vpack.c.bf16 %v2433, %v2431
    %v2440 = vpack.c.bf16 %v2436, %v2434
    %v2441 = vpack.c.bf16 %v2437, %v2435
    %2442 = vmatpush.bf16.msra.mxu0 0
    %2443 = vmatpush.bf16.msra.mxu0 0
    %2444 = vmatpush.bf16.msra.mxu0 0
    %2445 = vmatpush.bf16.msra.mxu0 0
    %2446 = vmatpush.bf16.msra.mxu0 0
    %2447 = vmatpush.bf16.msra.mxu0 0
    %2448 = vmatpush.bf16.msra.mxu0 %v2440
    %2449 = vmatpush.bf16.msra.mxu0 %v2438
    %2450 = vmatmul.bf16.gmra.mxu0 %v692
    %v2451 = vpop.f32.mrf.mxu0
    %v2452 = vadd.f32 0.0, %v2451
    %v2453 = vpop.f32.mrf.mxu0
    %2454 = vdwg.mxu0
    %2455 = vmatpush.bf16.msra.mxu0 0
    %2456 = vmatpush.bf16.msra.mxu0 0
    %2457 = vmatpush.bf16.msra.mxu0 0
    %2458 = vmatpush.bf16.msra.mxu0 0
    %2459 = vmatpush.bf16.msra.mxu0 0
    %2460 = vmatpush.bf16.msra.mxu0 0
    %2461 = vmatpush.bf16.msra.mxu0 %v2441
    %2462 = vmatpush.bf16.msra.mxu0 %v2439
    %2463 = vmatmul.bf16.gmra.mxu0 %v692
    %v2464 = vpop.f32.mrf.mxu0
    %v2465 = vadd.f32 0.0, %v2464
    %v2466 = vpop.f32.mrf.mxu0
    %2467 = vdwg.mxu0
    %v2468 = vxor.u32 %v2452, 2147483648
    %v2469 = vxor.u32 %v2465, 2147483648
    %v2470 = vmul.f32 %v2468, 1.442695
    %v2471 = vpow.pop %v2470
    %v2472 = vmul.f32 %v2469, 1.442695
    %v2473 = vpow.pop %v2472
    %v2474 = vadd.f32 %v2471, 1.0
    %v2475 = vadd.f32 %v2473, 1.0
    %v2476 = vrcp.pop %v2474
    %v2477 = vmul.f32 %v2474, %v2476
    %v2478 = vsub.f32 1.0, %v2477
    %v2479 = vmul.f32 %v2476, %v2478
    %v2480 = vadd.f32 %v2476, %v2479
    %vm2481 = vweird.f32 %v2474
    %vm2482 = vweird.f32 %v2476
    %vm2483 = vmor %vm2481, %vm2482
    %v2484 = vsel %vm2483, %v2476, %v2480
    %v2485 = vand.u32 2147483647, %v2474
    %vm2486 = vcmp.eq.f32.partialorder %v2485, 8.507059e+37
    %v2487 = vand.u32 %v2474, 2147483648
    %v2488 = vor.u32 1.1754944e-38, %v2487
    %v2489 = vsel %vm2486, %v2488, %v2484
    %v2490 = vmul.f32 1.0, %v2489
    %v2491 = vrcp.pop %v2475
    %v2492 = vmul.f32 %v2475, %v2491
    %v2493 = vsub.f32 1.0, %v2492
    %v2494 = vmul.f32 %v2491, %v2493
    %v2495 = vadd.f32 %v2491, %v2494
    %vm2496 = vweird.f32 %v2475
    %vm2497 = vweird.f32 %v2491
    %vm2498 = vmor %vm2496, %vm2497
    %v2499 = vsel %vm2498, %v2491, %v2495
    %v2500 = vand.u32 2147483647, %v2475
    %vm2501 = vcmp.eq.f32.partialorder %v2500, 8.507059e+37
    %v2502 = vand.u32 %v2475, 2147483648
    %v2503 = vor.u32 1.1754944e-38, %v2502
    %v2504 = vsel %vm2501, %v2503, %v2499
    %v2505 = vmul.f32 1.0, %v2504
    %v2506 = vadd.f32 %v2490, %v2505
    %2507 = vadd.xlane.f32.xlu0 %v2506
    %v2508 = vpop.xlane.xlu0 %2507
    %v2509 = vadd.f32 %v2508, 1e-06
    %v2510 = vrcp.pop %v2509
    %v2511 = vmul.f32 %v2509, %v2510
    %v2512 = vsub.f32 1.0, %v2511
    %v2513 = vmul.f32 %v2510, %v2512
    %v2514 = vadd.f32 %v2510, %v2513
    %vm2515 = vweird.f32 %v2509
    %vm2516 = vweird.f32 %v2510
    %vm2517 = vmor %vm2515, %vm2516
    %v2518 = vsel %vm2517, %v2510, %v2514
    %v2519 = vand.u32 2147483647, %v2509
    %vm2520 = vcmp.eq.f32.partialorder %v2519, 8.507059e+37
    %v2521 = vand.u32 %v2509, 2147483648
    %v2522 = vor.u32 1.1754944e-38, %v2521
    %v2523 = vsel %vm2520, %v2522, %v2518
    %v2524 = vmul.f32 1.0, %v2523
    %v2525 = vmul.f32 %v2490, %v2524
    %v2526 = vmul.f32 %v2505, %v2524
    %v2527 = vpack.c.bf16 %v2525, %v2525
    %v2528 = vpack.c.bf16 %v2526, %v2526
    %2529 = vmatpush.bf16.xpose.msra.mxu0 0
    %2530 = vmatpush.bf16.xpose.msra.mxu0 0
    %2531 = vmatpush.bf16.xpose.msra.mxu0 0
    %2532 = vmatpush.bf16.xpose.msra.mxu0 0
    %2533 = vmatpush.bf16.xpose.msra.mxu0 0
    %2534 = vmatpush.bf16.xpose.msra.mxu0 0
    %2535 = vmatpush.bf16.xpose.msra.mxu0 %v2440
    %2536 = vmatpush.bf16.xpose.msra.mxu0 %v2438
    %2537 = vmatmul.bf16.gmra.mxu0 %v2527
    %v2538 = vpop.f32.mrf.mxu0
    %v2539 = vadd.f32 0.0, %v2538
    %v2540 = vpop.f32.mrf.mxu0
    %2541 = vdwg.mxu0
    %2542 = vmatpush.bf16.xpose.msra.mxu0 0
    %2543 = vmatpush.bf16.xpose.msra.mxu0 0
    %2544 = vmatpush.bf16.xpose.msra.mxu0 0
    %2545 = vmatpush.bf16.xpose.msra.mxu0 0
    %2546 = vmatpush.bf16.xpose.msra.mxu0 0
    %2547 = vmatpush.bf16.xpose.msra.mxu0 0
    %2548 = vmatpush.bf16.xpose.msra.mxu0 %v2441
    %2549 = vmatpush.bf16.xpose.msra.mxu0 %v2439
    %2550 = vmatmul.bf16.gmra.mxu0 %v2528
    %v2551 = vpop.f32.mrf.mxu0
    %v2552 = vadd.f32 %v2539, %v2551
    %v2553 = vpop.f32.mrf.mxu0
    %2554 = vdwg.mxu0
    %v2555 = vadd.f32 %v53, %v2552
    %v2556 = vld [vmem:[%s5] sm:$0xff]
    %v2557 = vld [vmem:[%s5 + $0x8] sm:$0xff]
    %v2558 = vld [vmem:[%s5 + $0x10] sm:$0xff]
    %v2559 = vld [vmem:[%s5 + $0x18] sm:$0xff]
    %v2561 = vsel %vm252, %v2552, 0
    %2563 = vmatpush.msra.mxu0 0.0
    %2564 = vmatpush.msra.mxu0 0.0
    %2565 = vmatpush.msra.mxu0 0.0
    %2566 = vmatpush.msra.mxu0 0.0
    %2567 = vmatpush.msra.mxu0 0.0
    %2568 = vmatpush.msra.mxu0 0.0
    %2569 = vmatpush.msra.mxu0 0.0
    %2570 = vmatpush.msra.mxu0 0.0
    %2571 = vmatpush.msra.mxu0 0.0
    %2572 = vmatpush.msra.mxu0 0.0
    %2573 = vmatpush.msra.mxu0 0.0
    %2574 = vmatpush.msra.mxu0 0.0
    %2575 = vmatpush.msra.mxu0 %v2559
    %2576 = vmatpush.msra.mxu0 %v2558
    %2577 = vmatpush.msra.mxu0 %v2557
    %2578 = vmatpush.msra.mxu0 %v2556
    %2579 = vmatmul.f32.gmra.mxu0 %v2561
    %v2580 = vpop.f32.mrf.mxu0
    %v2581 = vadd.f32 0.0, %v2580
    %2582 = vdwg.mxu0
    %v2583 = vadd.f32 %v2555, %v2581
    %v2584 = vld [vmem:[%s6] sm:$0x1]
    %v2585 = vperm.slane %v2584, 0
    %v2586 = vadd.f32 %v2583, %v2585
    %v2587 = vld [vmem:[%s6 + $0x1] sm:$0x1]
    %v2588 = vld [vmem:[%s6 + $0x2] sm:$0x1]
    %v2589 = vsel %vm252, %v2586, 0.0
    %2590 = vadd.xlane.f32.xlu0 %v2589
    %v2591 = vpop.xlane.xlu0 %2590
    %v2592 = vmul.f32 %v2591, %v850
    %v2593 = vsub.f32 %v2586, %v2592
    %v2594 = vmul.f32 %v2593, %v2593
    %v2595 = vsel %vm252, %v2594, 0.0
    %2596 = vadd.xlane.f32.xlu0 %v2595
    %v2597 = vpop.xlane.xlu0 %2596
    %v2598 = vmul.f32 %v2597, %v850
    %v2599 = vadd.f32 %v2598, 1e-05
    %v2600 = vrsqrt.pop %v2599
    %v2601 = vmul.f32 %v2600, %v2599
    %v2602 = vmul.f32 %v2601, %v2600
    %v2603 = vmul.f32 0.5, %v2602
    %v2604 = vsub.f32 1.5, %v2603
    %v2605 = vmul.f32 %v2600, %v2604
    %vm2606 = vweird.f32 %v2599
    %vm2607 = vweird.f32 %v2600
    %vm2608 = vmor %vm2606, %vm2607
    %v2609 = vsel %vm2608, %v2600, %v2605
    %v2610 = vmul.f32 %v2593, %v2609
    %v2611 = vperm.slane %v2587, 0
    %v2612 = vmul.f32 %v2610, %v2611
    %v2613 = vperm.slane %v2588, 0
    %v2614 = vadd.f32 %v2612, %v2613
    %v2615 = vld [vmem:[%s7] sm:$0xff]
    %v2616 = vld [vmem:[%s7 + $0x8] sm:$0xff]
    %v2617 = vld [vmem:[%s7 + $0x10] sm:$0xff]
    %v2618 = vld [vmem:[%s7 + $0x18] sm:$0xff]
    %v2619 = vld [vmem:[%s7 + $0x20] sm:$0xff]
    %v2620 = vld [vmem:[%s7 + $0x28] sm:$0xff]
    %v2621 = vld [vmem:[%s7 + $0x30] sm:$0xff]
    %v2622 = vld [vmem:[%s7 + $0x38] sm:$0xff]
    %v2623 = vld [vmem:[%s7 + $0x40] sm:$0xff]
    %v2624 = vld [vmem:[%s7 + $0x48] sm:$0xff]
    %v2625 = vld [vmem:[%s7 + $0x50] sm:$0xff]
    %v2626 = vld [vmem:[%s7 + $0x58] sm:$0xff]
    %v2628 = vsel %vm252, %v2614, 0
    %2630 = vmatpush.msra.mxu0 0.0
    %2631 = vmatpush.msra.mxu0 0.0
    %2632 = vmatpush.msra.mxu0 0.0
    %2633 = vmatpush.msra.mxu0 0.0
    %2634 = vmatpush.msra.mxu0 0.0
    %2635 = vmatpush.msra.mxu0 0.0
    %2636 = vmatpush.msra.mxu0 0.0
    %2637 = vmatpush.msra.mxu0 0.0
    %2638 = vmatpush.msra.mxu0 0.0
    %2639 = vmatpush.msra.mxu0 0.0
    %2640 = vmatpush.msra.mxu0 0.0
    %2641 = vmatpush.msra.mxu0 0.0
    %2642 = vmatpush.msra.mxu0 %v2624
    %2643 = vmatpush.msra.mxu0 %v2621
    %2644 = vmatpush.msra.mxu0 %v2618
    %2645 = vmatpush.msra.mxu0 %v2615
    %2646 = vmatmul.f32.gmra.mxu0 %v2628
    %v2647 = vpop.f32.mrf.mxu0
    %v2648 = vadd.f32 0.0, %v2647
    %2649 = vdwg.mxu0
    %2650 = vmatpush.msra.mxu0 0.0
    %2651 = vmatpush.msra.mxu0 0.0
    %2652 = vmatpush.msra.mxu0 0.0
    %2653 = vmatpush.msra.mxu0 0.0
    %2654 = vmatpush.msra.mxu0 0.0
    %2655 = vmatpush.msra.mxu0 0.0
    %2656 = vmatpush.msra.mxu0 0.0
    %2657 = vmatpush.msra.mxu0 0.0
    %2658 = vmatpush.msra.mxu0 0.0
    %2659 = vmatpush.msra.mxu0 0.0
    %2660 = vmatpush.msra.mxu0 0.0
    %2661 = vmatpush.msra.mxu0 0.0
    %2662 = vmatpush.msra.mxu0 %v2625
    %2663 = vmatpush.msra.mxu0 %v2622
    %2664 = vmatpush.msra.mxu0 %v2619
    %2665 = vmatpush.msra.mxu0 %v2616
    %2666 = vmatmul.f32.gmra.mxu0 %v2628
    %v2667 = vpop.f32.mrf.mxu0
    %v2668 = vadd.f32 0.0, %v2667
    %2669 = vdwg.mxu0
    %2670 = vmatpush.msra.mxu0 0.0
    %2671 = vmatpush.msra.mxu0 0.0
    %2672 = vmatpush.msra.mxu0 0.0
    %2673 = vmatpush.msra.mxu0 0.0
    %2674 = vmatpush.msra.mxu0 0.0
    %2675 = vmatpush.msra.mxu0 0.0
    %2676 = vmatpush.msra.mxu0 0.0
    %2677 = vmatpush.msra.mxu0 0.0
    %2678 = vmatpush.msra.mxu0 0.0
    %2679 = vmatpush.msra.mxu0 0.0
    %2680 = vmatpush.msra.mxu0 0.0
    %2681 = vmatpush.msra.mxu0 0.0
    %2682 = vmatpush.msra.mxu0 %v2626
    %2683 = vmatpush.msra.mxu0 %v2623
    %2684 = vmatpush.msra.mxu0 %v2620
    %2685 = vmatpush.msra.mxu0 %v2617
    %2686 = vmatmul.f32.gmra.mxu0 %v2628
    %v2687 = vpop.f32.mrf.mxu0
    %v2688 = vadd.f32 0.0, %v2687
    %2689 = vdwg.mxu0
    %v2690 = vld [vmem:[%s6 + $0x3] sm:$0x1]
    %v2691 = vperm.slane %v2690, 0
    %v2692 = vadd.f32 %v2648, %v2691
    %v2693 = vld [vmem:[%s6 + $0x4] sm:$0x1]
    %v2694 = vperm.slane %v2693, 0
    %v2695 = vadd.f32 %v2668, %v2694
    %v2696 = vld [vmem:[%s6 + $0x5] sm:$0x1]
    %v2697 = vperm.slane %v2696, 0
    %v2698 = vadd.f32 %v2688, %v2697
    %v2700 = vsel %vm252, %v2692, 0
    %v2703 = vsel %vm252, %v2695, 0
    %2705 = vmatpush.xpose.msra.mxu0 0.0
    %2706 = vmatpush.xpose.msra.mxu0 0.0
    %2707 = vmatpush.xpose.msra.mxu0 0.0
    %2708 = vmatpush.xpose.msra.mxu0 0.0
    %2709 = vmatpush.xpose.msra.mxu0 0.0
    %2710 = vmatpush.xpose.msra.mxu0 0.0
    %2711 = vmatpush.xpose.msra.mxu0 0.0
    %2712 = vmatpush.xpose.msra.mxu0 0.0
    %2713 = vmatpush.xpose.msra.mxu0 0.0
    %2714 = vmatpush.xpose.msra.mxu0 0.0
    %2715 = vmatpush.xpose.msra.mxu0 0.0
    %2716 = vmatpush.xpose.msra.mxu0 0.0
    %2717 = vmatpush.xpose.msra.mxu0 0.0
    %2718 = vmatpush.xpose.msra.mxu0 0.0
    %2719 = vmatpush.xpose.msra.mxu0 0.0
    %2720 = vmatpush.xpose.msra.mxu0 %v2703
    %2721 = vmatmul.f32.gmra.mxu0 %v2700
    %v2722 = vpop.f32.mrf.mxu0
    %v2723 = vadd.f32 0.0, %v2722
    %2724 = vdwg.mxu0
    %v2725 = vmul.f32 %v2723, 0.17677669
    %v2726 = vsel %vm985, %v2725, -inf
    %2727 = vmax.xlane.f32.xlu0 %v2726
    %v2728 = vpop.xlane.xlu0 %2727
    %v2729 = vsub.f32 %v2725, %v2728
    %v2730 = vmul.f32 %v2729, 1.442695
    %v2731 = vpow.pop %v2730
    %v2732 = vsel %vm985, %v2731, 0.0
    %2733 = vadd.xlane.f32.xlu0 %v2732
    %v2734 = vpop.xlane.xlu0 %2733
    %v2735 = vrcp.pop %v2734
    %v2736 = vmul.f32 %v2734, %v2735
    %v2737 = vsub.f32 1.0, %v2736
    %v2738 = vmul.f32 %v2735, %v2737
    %v2739 = vadd.f32 %v2735, %v2738
    %vm2740 = vweird.f32 %v2734
    %vm2741 = vweird.f32 %v2735
    %vm2742 = vmor %vm2740, %vm2741
    %v2743 = vsel %vm2742, %v2735, %v2739
    %v2744 = vand.u32 2147483647, %v2734
    %vm2745 = vcmp.eq.f32.partialorder %v2744, 8.507059e+37
    %v2746 = vand.u32 %v2734, 2147483648
    %v2747 = vor.u32 1.1754944e-38, %v2746
    %v2748 = vsel %vm2745, %v2747, %v2743
    %v2749 = vmul.f32 %v2731, %v2748
    %v2751 = vsel %vm985, %v2749, 0
    %2753 = vmatpush.msra.mxu0 0.0
    %2754 = vmatpush.msra.mxu0 0.0
    %2755 = vmatpush.msra.mxu0 0.0
    %2756 = vmatpush.msra.mxu0 0.0
    %2757 = vmatpush.msra.mxu0 0.0
    %2758 = vmatpush.msra.mxu0 0.0
    %2759 = vmatpush.msra.mxu0 0.0
    %2760 = vmatpush.msra.mxu0 0.0
    %2761 = vmatpush.msra.mxu0 0.0
    %2762 = vmatpush.msra.mxu0 0.0
    %2763 = vmatpush.msra.mxu0 0.0
    %2764 = vmatpush.msra.mxu0 0.0
    %2765 = vmatpush.msra.mxu0 0.0
    %2766 = vmatpush.msra.mxu0 0.0
    %2767 = vmatpush.msra.mxu0 0.0
    %2768 = vmatpush.msra.mxu0 %v2698
    %2769 = vmatmul.f32.gmra.mxu0 %v2751
    %v2770 = vpop.f32.mrf.mxu0
    %v2771 = vadd.f32 0.0, %v2770
    %2772 = vdwg.mxu0
    %v2773 = vld [vmem:[%s5 + $0x20] sm:$0xff]
    %v2774 = vld [vmem:[%s5 + $0x28] sm:$0xff]
    %v2775 = vld [vmem:[%s5 + $0x30] sm:$0xff]
    %v2776 = vld [vmem:[%s5 + $0x38] sm:$0xff]
    %v2778 = vsel %vm252, %v2771, 0
    %2780 = vmatpush.msra.mxu0 0.0
    %2781 = vmatpush.msra.mxu0 0.0
    %2782 = vmatpush.msra.mxu0 0.0
    %2783 = vmatpush.msra.mxu0 0.0
    %2784 = vmatpush.msra.mxu0 0.0
    %2785 = vmatpush.msra.mxu0 0.0
    %2786 = vmatpush.msra.mxu0 0.0
    %2787 = vmatpush.msra.mxu0 0.0
    %2788 = vmatpush.msra.mxu0 0.0
    %2789 = vmatpush.msra.mxu0 0.0
    %2790 = vmatpush.msra.mxu0 0.0
    %2791 = vmatpush.msra.mxu0 0.0
    %2792 = vmatpush.msra.mxu0 %v2776
    %2793 = vmatpush.msra.mxu0 %v2775
    %2794 = vmatpush.msra.mxu0 %v2774
    %2795 = vmatpush.msra.mxu0 %v2773
    %2796 = vmatmul.f32.gmra.mxu0 %v2778
    %v2797 = vpop.f32.mrf.mxu0
    %v2798 = vadd.f32 0.0, %v2797
    %2799 = vdwg.mxu0
    %v2800 = vadd.f32 %v2614, %v2798
    %v2801 = vld [vmem:[%s6 + $0x6] sm:$0x1]
    %v2802 = vperm.slane %v2801, 0
    %v2803 = vadd.f32 %v2800, %v2802
    %v2804 = vld [vmem:[%s6 + $0x7] sm:$0x1]
    %v2805 = vld [vmem:[%s6 + $0x8] sm:$0x1]
    %v2806 = vsel %vm252, %v2803, 0.0
    %2807 = vadd.xlane.f32.xlu0 %v2806
    %v2808 = vpop.xlane.xlu0 %2807
    %v2809 = vmul.f32 %v2808, %v850
    %v2810 = vsub.f32 %v2803, %v2809
    %v2811 = vmul.f32 %v2810, %v2810
    %v2812 = vsel %vm252, %v2811, 0.0
    %2813 = vadd.xlane.f32.xlu0 %v2812
    %v2814 = vpop.xlane.xlu0 %2813
    %v2815 = vmul.f32 %v2814, %v850
    %v2816 = vadd.f32 %v2815, 1e-05
    %v2817 = vrsqrt.pop %v2816
    %v2818 = vmul.f32 %v2817, %v2816
    %v2819 = vmul.f32 %v2818, %v2817
    %v2820 = vmul.f32 0.5, %v2819
    %v2821 = vsub.f32 1.5, %v2820
    %v2822 = vmul.f32 %v2817, %v2821
    %vm2823 = vweird.f32 %v2816
    %vm2824 = vweird.f32 %v2817
    %vm2825 = vmor %vm2823, %vm2824
    %v2826 = vsel %vm2825, %v2817, %v2822
    %v2827 = vmul.f32 %v2810, %v2826
    %v2828 = vperm.slane %v2804, 0
    %v2829 = vmul.f32 %v2827, %v2828
    %v2830 = vperm.slane %v2805, 0
    %v2831 = vadd.f32 %v2829, %v2830
    %v2832 = vld [vmem:[%s5 + $0x40] sm:$0xff]
    %v2833 = vld [vmem:[%s5 + $0x48] sm:$0xff]
    %v2834 = vld [vmem:[%s5 + $0x50] sm:$0xff]
    %v2835 = vld [vmem:[%s5 + $0x58] sm:$0xff]
    %v2836 = vld [vmem:[%s6 + $0x9] sm:$0x1]
    %v2837 = vperm.slane %v2836, 0
    %v2839 = vsel %vm252, %v2831, 0
    %2841 = vmatpush.msra.mxu0 0.0
    %2842 = vmatpush.msra.mxu0 0.0
    %2843 = vmatpush.msra.mxu0 0.0
    %2844 = vmatpush.msra.mxu0 0.0
    %2845 = vmatpush.msra.mxu0 0.0
    %2846 = vmatpush.msra.mxu0 0.0
    %2847 = vmatpush.msra.mxu0 0.0
    %2848 = vmatpush.msra.mxu0 0.0
    %2849 = vmatpush.msra.mxu0 0.0
    %2850 = vmatpush.msra.mxu0 0.0
    %2851 = vmatpush.msra.mxu0 0.0
    %2852 = vmatpush.msra.mxu0 0.0
    %2853 = vmatpush.msra.mxu0 %v2835
    %2854 = vmatpush.msra.mxu0 %v2834
    %2855 = vmatpush.msra.mxu0 %v2833
    %2856 = vmatpush.msra.mxu0 %v2832
    %2857 = vmatmul.f32.gmra.mxu0 %v2839
    %v2858 = vpop.f32.mrf.mxu0
    %v2859 = vadd.f32 %v2837, %v2858
    %2860 = vdwg.mxu0
    %v2861 = vmax.f32 %v2859, 0.0
    %v2862 = vld [vmem:[%s5 + $0x60] sm:$0xff]
    %v2863 = vld [vmem:[%s5 + $0x68] sm:$0xff]
    %v2864 = vld [vmem:[%s5 + $0x70] sm:$0xff]
    %v2865 = vld [vmem:[%s5 + $0x78] sm:$0xff]
    %v2867 = vsel %vm1126, %v2861, 0
    %v2870 = vsel %vm1126, %v2862, 0
    %v2873 = vsel %vm1126, %v2863, 0
    %v2876 = vsel %vm1126, %v2864, 0
    %v2879 = vsel %vm1126, %v2865, 0
    %2881 = vmatpush.xpose.msra.mxu0 0.0
    %2882 = vmatpush.xpose.msra.mxu0 0.0
    %2883 = vmatpush.xpose.msra.mxu0 0.0
    %2884 = vmatpush.xpose.msra.mxu0 0.0
    %2885 = vmatpush.xpose.msra.mxu0 0.0
    %2886 = vmatpush.xpose.msra.mxu0 0.0
    %2887 = vmatpush.xpose.msra.mxu0 0.0
    %2888 = vmatpush.xpose.msra.mxu0 0.0
    %2889 = vmatpush.xpose.msra.mxu0 0.0
    %2890 = vmatpush.xpose.msra.mxu0 0.0
    %2891 = vmatpush.xpose.msra.mxu0 0.0
    %2892 = vmatpush.xpose.msra.mxu0 0.0
    %2893 = vmatpush.xpose.msra.mxu0 %v2879
    %2894 = vmatpush.xpose.msra.mxu0 %v2876
    %2895 = vmatpush.xpose.msra.mxu0 %v2873
    %2896 = vmatpush.xpose.msra.mxu0 %v2870
    %2897 = vmatmul.f32.gmra.mxu0 %v2867
    %v2898 = vpop.f32.mrf.mxu0
    %v2899 = vadd.f32 0.0, %v2898
    %2900 = vdwg.mxu0
    %v2901 = vadd.f32 %v2831, %v2899
    %v2902 = vld [vmem:[%s6 + $0xa] sm:$0x1]
    %v2903 = vperm.slane %v2902, 0
    %v2904 = vadd.f32 %v2901, %v2903
    %v2905 = vld [vmem:[%s6 + $0xb] sm:$0x1]
    %v2906 = vld [vmem:[%s6 + $0xc] sm:$0x1]
    %v2907 = vsel %vm252, %v2904, 0.0
    %2908 = vadd.xlane.f32.xlu0 %v2907
    %v2909 = vpop.xlane.xlu0 %2908
    %v2910 = vmul.f32 %v2909, %v850
    %v2911 = vsub.f32 %v2904, %v2910
    %v2912 = vmul.f32 %v2911, %v2911
    %v2913 = vsel %vm252, %v2912, 0.0
    %2914 = vadd.xlane.f32.xlu0 %v2913
    %v2915 = vpop.xlane.xlu0 %2914
    %v2916 = vmul.f32 %v2915, %v850
    %v2917 = vadd.f32 %v2916, 1e-05
    %v2918 = vrsqrt.pop %v2917
    %v2919 = vmul.f32 %v2918, %v2917
    %v2920 = vmul.f32 %v2919, %v2918
    %v2921 = vmul.f32 0.5, %v2920
    %v2922 = vsub.f32 1.5, %v2921
    %v2923 = vmul.f32 %v2918, %v2922
    %vm2924 = vweird.f32 %v2917
    %vm2925 = vweird.f32 %v2918
    %vm2926 = vmor %vm2924, %vm2925
    %v2927 = vsel %vm2926, %v2918, %v2923
    %v2928 = vmul.f32 %v2911, %v2927
    %v2929 = vperm.slane %v2905, 0
    %v2930 = vmul.f32 %v2928, %v2929
    %v2931 = vperm.slane %v2906, 0
    %v2932 = vadd.f32 %v2930, %v2931
    %v2933 = vld [vmem:[#allocation2 + $0x8] sm:$0xff]
    %v2934 = vld [vmem:[#allocation2 + $0x18] sm:$0xff]
    %v2935 = vld [vmem:[#allocation2 + $0x28] sm:$0xff]
    %v2936 = vld [vmem:[#allocation2 + $0x38] sm:$0xff]
    %v2938 = vsel %vm252, %v2932, 0
    %2940 = vmatpush.msra.mxu0 0.0
    %2941 = vmatpush.msra.mxu0 0.0
    %2942 = vmatpush.msra.mxu0 0.0
    %2943 = vmatpush.msra.mxu0 0.0
    %2944 = vmatpush.msra.mxu0 0.0
    %2945 = vmatpush.msra.mxu0 0.0
    %2946 = vmatpush.msra.mxu0 0.0
    %2947 = vmatpush.msra.mxu0 0.0
    %2948 = vmatpush.msra.mxu0 0.0
    %2949 = vmatpush.msra.mxu0 0.0
    %2950 = vmatpush.msra.mxu0 0.0
    %2951 = vmatpush.msra.mxu0 0.0
    %2952 = vmatpush.msra.mxu0 %v2936
    %2953 = vmatpush.msra.mxu0 %v2935
    %2954 = vmatpush.msra.mxu0 %v2934
    %2955 = vmatpush.msra.mxu0 %v2933
    %2956 = vmatmul.f32.gmra.mxu0 %v2938
    %v2957 = vpop.f32.mrf.mxu0
    %v2958 = vadd.f32 0.0, %v2957
    %2959 = vdwg.mxu0
    %v2960 = vld [vmem:[%s6 + $0xe] sm:$0x1]
    %v2961 = vperm.slane %v2960, 0
    %v2962 = vadd.f32 %v2958, %v2961
    %v2963 = vpack.c.bf16 %v2962, %v2962
    %v2965 = vsel %vm252, %v2963, 0
    %2967 = vmatpush.bf16.msra.mxu0 0
    %2968 = vmatpush.bf16.msra.mxu0 0
    %2969 = vmatpush.bf16.msra.mxu0 0
    %2970 = vmatpush.bf16.msra.mxu0 0
    %2971 = vmatpush.bf16.msra.mxu0 0
    %2972 = vmatpush.bf16.msra.mxu0 0
    %2973 = vmatpush.bf16.msra.mxu0 %v2440
    %2974 = vmatpush.bf16.msra.mxu0 %v2438
    %2975 = vmatmul.bf16.gmra.mxu0 %v2965
    %v2976 = vpop.f32.mrf.mxu0
    %v2977 = vadd.f32 0.0, %v2976
    %v2978 = vpop.f32.mrf.mxu0
    %2979 = vdwg.mxu0
    %2980 = vmatpush.bf16.msra.mxu0 0
    %2981 = vmatpush.bf16.msra.mxu0 0
    %2982 = vmatpush.bf16.msra.mxu0 0
    %2983 = vmatpush.bf16.msra.mxu0 0
    %2984 = vmatpush.bf16.msra.mxu0 0
    %2985 = vmatpush.bf16.msra.mxu0 0
    %2986 = vmatpush.bf16.msra.mxu0 %v2441
    %2987 = vmatpush.bf16.msra.mxu0 %v2439
    %2988 = vmatmul.bf16.gmra.mxu0 %v2965
    %v2989 = vpop.f32.mrf.mxu0
    %v2990 = vadd.f32 0.0, %v2989
    %v2991 = vpop.f32.mrf.mxu0
    %2992 = vdwg.mxu0
    %v2993 = vxor.u32 %v2977, 2147483648
    %v2994 = vxor.u32 %v2990, 2147483648
    %v2995 = vmul.f32 %v2993, 1.442695
    %v2996 = vpow.pop %v2995
    %v2997 = vmul.f32 %v2994, 1.442695
    %v2998 = vpow.pop %v2997
    %v2999 = vadd.f32 %v2996, 1.0
    %v3000 = vadd.f32 %v2998, 1.0
    %v3001 = vrcp.pop %v2999
    %v3002 = vmul.f32 %v2999, %v3001
    %v3003 = vsub.f32 1.0, %v3002
    %v3004 = vmul.f32 %v3001, %v3003
    %v3005 = vadd.f32 %v3001, %v3004
    %vm3006 = vweird.f32 %v2999
    %vm3007 = vweird.f32 %v3001
    %vm3008 = vmor %vm3006, %vm3007
    %v3009 = vsel %vm3008, %v3001, %v3005
    %v3010 = vand.u32 2147483647, %v2999
    %vm3011 = vcmp.eq.f32.partialorder %v3010, 8.507059e+37
    %v3012 = vand.u32 %v2999, 2147483648
    %v3013 = vor.u32 1.1754944e-38, %v3012
    %v3014 = vsel %vm3011, %v3013, %v3009
    %v3015 = vmul.f32 1.0, %v3014
    %v3016 = vrcp.pop %v3000
    %v3017 = vmul.f32 %v3000, %v3016
    %v3018 = vsub.f32 1.0, %v3017
    %v3019 = vmul.f32 %v3016, %v3018
    %v3020 = vadd.f32 %v3016, %v3019
    %vm3021 = vweird.f32 %v3000
    %vm3022 = vweird.f32 %v3016
    %vm3023 = vmor %vm3021, %vm3022
    %v3024 = vsel %vm3023, %v3016, %v3020
    %v3025 = vand.u32 2147483647, %v3000
    %vm3026 = vcmp.eq.f32.partialorder %v3025, 8.507059e+37
    %v3027 = vand.u32 %v3000, 2147483648
    %v3028 = vor.u32 1.1754944e-38, %v3027
    %v3029 = vsel %vm3026, %v3028, %v3024
    %v3030 = vmul.f32 1.0, %v3029
    %v3031 = vadd.f32 %v3015, %v3030
    %3032 = vadd.xlane.f32.xlu0 %v3031
    %v3033 = vpop.xlane.xlu0 %3032
    %v3034 = vadd.f32 %v3033, 1e-06
    %v3035 = vrcp.pop %v3034
    %v3036 = vmul.f32 %v3034, %v3035
    %v3037 = vsub.f32 1.0, %v3036
    %v3038 = vmul.f32 %v3035, %v3037
    %v3039 = vadd.f32 %v3035, %v3038
    %vm3040 = vweird.f32 %v3034
    %vm3041 = vweird.f32 %v3035
    %vm3042 = vmor %vm3040, %vm3041
    %v3043 = vsel %vm3042, %v3035, %v3039
    %v3044 = vand.u32 2147483647, %v3034
    %vm3045 = vcmp.eq.f32.partialorder %v3044, 8.507059e+37
    %v3046 = vand.u32 %v3034, 2147483648
    %v3047 = vor.u32 1.1754944e-38, %v3046
    %v3048 = vsel %vm3045, %v3047, %v3043
    %v3049 = vmul.f32 1.0, %v3048
    %v3050 = vmul.f32 %v3015, %v3049
    %v3051 = vmul.f32 %v3030, %v3049
    %v3052 = vpack.c.bf16 %v3050, %v3050
    %v3053 = vpack.c.bf16 %v3051, %v3051
    %3054 = vmatpush.bf16.xpose.msra.mxu0 0
    %3055 = vmatpush.bf16.xpose.msra.mxu0 0
    %3056 = vmatpush.bf16.xpose.msra.mxu0 0
    %3057 = vmatpush.bf16.xpose.msra.mxu0 0
    %3058 = vmatpush.bf16.xpose.msra.mxu0 0
    %3059 = vmatpush.bf16.xpose.msra.mxu0 0
    %3060 = vmatpush.bf16.xpose.msra.mxu0 %v2440
    %3061 = vmatpush.bf16.xpose.msra.mxu0 %v2438
    %3062 = vmatmul.bf16.gmra.mxu0 %v3052
    %v3063 = vpop.f32.mrf.mxu0
    %v3064 = vadd.f32 0.0, %v3063
    %v3065 = vpop.f32.mrf.mxu0
    %3066 = vdwg.mxu0
    %3067 = vmatpush.bf16.xpose.msra.mxu0 0
    %3068 = vmatpush.bf16.xpose.msra.mxu0 0
    %3069 = vmatpush.bf16.xpose.msra.mxu0 0
    %3070 = vmatpush.bf16.xpose.msra.mxu0 0
    %3071 = vmatpush.bf16.xpose.msra.mxu0 0
    %3072 = vmatpush.bf16.xpose.msra.mxu0 0
    %3073 = vmatpush.bf16.xpose.msra.mxu0 %v2441
    %3074 = vmatpush.bf16.xpose.msra.mxu0 %v2439
    %3075 = vmatmul.bf16.gmra.mxu0 %v3053
    %v3076 = vpop.f32.mrf.mxu0
    %v3077 = vadd.f32 %v3064, %v3076
    %v3078 = vpop.f32.mrf.mxu0
    %3079 = vdwg.mxu0
    %v3080 = vld [vmem:[%s1341] sm:$0xff]
    %v3081 = vld [vmem:[%s1341 + $0x8] sm:$0xff]
    %v3082 = vld [vmem:[%s1341 + $0x10] sm:$0xff]
    %v3083 = vld [vmem:[%s1341 + $0x18] sm:$0xff]
    %v3085 = vsel %vm252, %v3077, 0
    %3087 = vmatpush.msra.mxu0 0.0
    %3088 = vmatpush.msra.mxu0 0.0
    %3089 = vmatpush.msra.mxu0 0.0
    %3090 = vmatpush.msra.mxu0 0.0
    %3091 = vmatpush.msra.mxu0 0.0
    %3092 = vmatpush.msra.mxu0 0.0
    %3093 = vmatpush.msra.mxu0 0.0
    %3094 = vmatpush.msra.mxu0 0.0
    %3095 = vmatpush.msra.mxu0 0.0
    %3096 = vmatpush.msra.mxu0 0.0
    %3097 = vmatpush.msra.mxu0 0.0
    %3098 = vmatpush.msra.mxu0 0.0
    %3099 = vmatpush.msra.mxu0 %v3083
    %3100 = vmatpush.msra.mxu0 %v3082
    %3101 = vmatpush.msra.mxu0 %v3081
    %3102 = vmatpush.msra.mxu0 %v3080
    %3103 = vmatmul.f32.gmra.mxu0 %v3085
    %v3104 = vpop.f32.mrf.mxu0
    %v3105 = vadd.f32 0.0, %v3104
    %3106 = vdwg.mxu0
    %v3107 = vadd.f32 %v2932, %v3105
    %v3108 = vld [vmem:[%s1370] sm:$0x1]
    %v3109 = vperm.slane %v3108, 0
    %v3110 = vadd.f32 %v3107, %v3109
    %v3111 = vld [vmem:[%s1370 + $0x1] sm:$0x1]
    %v3112 = vld [vmem:[%s1370 + $0x2] sm:$0x1]
    %v3113 = vsel %vm252, %v3110, 0.0
    %3114 = vadd.xlane.f32.xlu0 %v3113
    %v3115 = vpop.xlane.xlu0 %3114
    %v3116 = vmul.f32 %v3115, %v850
    %v3117 = vsub.f32 %v3110, %v3116
    %v3118 = vmul.f32 %v3117, %v3117
    %v3119 = vsel %vm252, %v3118, 0.0
    %3120 = vadd.xlane.f32.xlu0 %v3119
    %v3121 = vpop.xlane.xlu0 %3120
    %v3122 = vmul.f32 %v3121, %v850
    %v3123 = vadd.f32 %v3122, 1e-05
    %v3124 = vrsqrt.pop %v3123
    %v3125 = vmul.f32 %v3124, %v3123
    %v3126 = vmul.f32 %v3125, %v3124
    %v3127 = vmul.f32 0.5, %v3126
    %v3128 = vsub.f32 1.5, %v3127
    %v3129 = vmul.f32 %v3124, %v3128
    %vm3130 = vweird.f32 %v3123
    %vm3131 = vweird.f32 %v3124
    %vm3132 = vmor %vm3130, %vm3131
    %v3133 = vsel %vm3132, %v3124, %v3129
    %v3134 = vmul.f32 %v3117, %v3133
    %v3135 = vperm.slane %v3111, 0
    %v3136 = vmul.f32 %v3134, %v3135
    %v3137 = vperm.slane %v3112, 0
    %v3138 = vadd.f32 %v3136, %v3137
    %v3139 = vld [vmem:[%s1402] sm:$0xff]
    %v3140 = vld [vmem:[%s1402 + $0x8] sm:$0xff]
    %v3141 = vld [vmem:[%s1402 + $0x10] sm:$0xff]
    %v3142 = vld [vmem:[%s1402 + $0x18] sm:$0xff]
    %v3143 = vld [vmem:[%s1402 + $0x20] sm:$0xff]
    %v3144 = vld [vmem:[%s1402 + $0x28] sm:$0xff]
    %v3145 = vld [vmem:[%s1402 + $0x30] sm:$0xff]
    %v3146 = vld [vmem:[%s1402 + $0x38] sm:$0xff]
    %v3147 = vld [vmem:[%s1402 + $0x40] sm:$0xff]
    %v3148 = vld [vmem:[%s1402 + $0x48] sm:$0xff]
    %v3149 = vld [vmem:[%s1402 + $0x50] sm:$0xff]
    %v3150 = vld [vmem:[%s1402 + $0x58] sm:$0xff]
    %v3152 = vsel %vm252, %v3138, 0
    %3154 = vmatpush.msra.mxu0 0.0
    %3155 = vmatpush.msra.mxu0 0.0
    %3156 = vmatpush.msra.mxu0 0.0
    %3157 = vmatpush.msra.mxu0 0.0
    %3158 = vmatpush.msra.mxu0 0.0
    %3159 = vmatpush.msra.mxu0 0.0
    %3160 = vmatpush.msra.mxu0 0.0
    %3161 = vmatpush.msra.mxu0 0.0
    %3162 = vmatpush.msra.mxu0 0.0
    %3163 = vmatpush.msra.mxu0 0.0
    %3164 = vmatpush.msra.mxu0 0.0
    %3165 = vmatpush.msra.mxu0 0.0
    %3166 = vmatpush.msra.mxu0 %v3148
    %3167 = vmatpush.msra.mxu0 %v3145
    %3168 = vmatpush.msra.mxu0 %v3142
    %3169 = vmatpush.msra.mxu0 %v3139
    %3170 = vmatmul.f32.gmra.mxu0 %v3152
    %v3171 = vpop.f32.mrf.mxu0
    %v3172 = vadd.f32 0.0, %v3171
    %3173 = vdwg.mxu0
    %3174 = vmatpush.msra.mxu0 0.0
    %3175 = vmatpush.msra.mxu0 0.0
    %3176 = vmatpush.msra.mxu0 0.0
    %3177 = vmatpush.msra.mxu0 0.0
    %3178 = vmatpush.msra.mxu0 0.0
    %3179 = vmatpush.msra.mxu0 0.0
    %3180 = vmatpush.msra.mxu0 0.0
    %3181 = vmatpush.msra.mxu0 0.0
    %3182 = vmatpush.msra.mxu0 0.0
    %3183 = vmatpush.msra.mxu0 0.0
    %3184 = vmatpush.msra.mxu0 0.0
    %3185 = vmatpush.msra.mxu0 0.0
    %3186 = vmatpush.msra.mxu0 %v3149
    %3187 = vmatpush.msra.mxu0 %v3146
    %3188 = vmatpush.msra.mxu0 %v3143
    %3189 = vmatpush.msra.mxu0 %v3140
    %3190 = vmatmul.f32.gmra.mxu0 %v3152
    %v3191 = vpop.f32.mrf.mxu0
    %v3192 = vadd.f32 0.0, %v3191
    %3193 = vdwg.mxu0
    %3194 = vmatpush.msra.mxu0 0.0
    %3195 = vmatpush.msra.mxu0 0.0
    %3196 = vmatpush.msra.mxu0 0.0
    %3197 = vmatpush.msra.mxu0 0.0
    %3198 = vmatpush.msra.mxu0 0.0
    %3199 = vmatpush.msra.mxu0 0.0
    %3200 = vmatpush.msra.mxu0 0.0
    %3201 = vmatpush.msra.mxu0 0.0
    %3202 = vmatpush.msra.mxu0 0.0
    %3203 = vmatpush.msra.mxu0 0.0
    %3204 = vmatpush.msra.mxu0 0.0
    %3205 = vmatpush.msra.mxu0 0.0
    %3206 = vmatpush.msra.mxu0 %v3150
    %3207 = vmatpush.msra.mxu0 %v3147
    %3208 = vmatpush.msra.mxu0 %v3144
    %3209 = vmatpush.msra.mxu0 %v3141
    %3210 = vmatmul.f32.gmra.mxu0 %v3152
    %v3211 = vpop.f32.mrf.mxu0
    %v3212 = vadd.f32 0.0, %v3211
    %3213 = vdwg.mxu0
    %v3214 = vld [vmem:[%s1370 + $0x3] sm:$0x1]
    %v3215 = vperm.slane %v3214, 0
    %v3216 = vadd.f32 %v3172, %v3215
    %v3217 = vld [vmem:[%s1370 + $0x4] sm:$0x1]
    %v3218 = vperm.slane %v3217, 0
    %v3219 = vadd.f32 %v3192, %v3218
    %v3220 = vld [vmem:[%s1370 + $0x5] sm:$0x1]
    %v3221 = vperm.slane %v3220, 0
    %v3222 = vadd.f32 %v3212, %v3221
    %v3224 = vsel %vm252, %v3216, 0
    %v3227 = vsel %vm252, %v3219, 0
    %3229 = vmatpush.xpose.msra.mxu0 0.0
    %3230 = vmatpush.xpose.msra.mxu0 0.0
    %3231 = vmatpush.xpose.msra.mxu0 0.0
    %3232 = vmatpush.xpose.msra.mxu0 0.0
    %3233 = vmatpush.xpose.msra.mxu0 0.0
    %3234 = vmatpush.xpose.msra.mxu0 0.0
    %3235 = vmatpush.xpose.msra.mxu0 0.0
    %3236 = vmatpush.xpose.msra.mxu0 0.0
    %3237 = vmatpush.xpose.msra.mxu0 0.0
    %3238 = vmatpush.xpose.msra.mxu0 0.0
    %3239 = vmatpush.xpose.msra.mxu0 0.0
    %3240 = vmatpush.xpose.msra.mxu0 0.0
    %3241 = vmatpush.xpose.msra.mxu0 0.0
    %3242 = vmatpush.xpose.msra.mxu0 0.0
    %3243 = vmatpush.xpose.msra.mxu0 0.0
    %3244 = vmatpush.xpose.msra.mxu0 %v3227
    %3245 = vmatmul.f32.gmra.mxu0 %v3224
    %v3246 = vpop.f32.mrf.mxu0
    %v3247 = vadd.f32 0.0, %v3246
    %3248 = vdwg.mxu0
    %v3249 = vmul.f32 %v3247, 0.17677669
    %v3250 = vsel %vm985, %v3249, -inf
    %3251 = vmax.xlane.f32.xlu0 %v3250
    %v3252 = vpop.xlane.xlu0 %3251
    %v3253 = vsub.f32 %v3249, %v3252
    %v3254 = vmul.f32 %v3253, 1.442695
    %v3255 = vpow.pop %v3254
    %v3256 = vsel %vm985, %v3255, 0.0
    %3257 = vadd.xlane.f32.xlu0 %v3256
    %v3258 = vpop.xlane.xlu0 %3257
    %v3259 = vrcp.pop %v3258
    %v3260 = vmul.f32 %v3258, %v3259
    %v3261 = vsub.f32 1.0, %v3260
    %v3262 = vmul.f32 %v3259, %v3261
    %v3263 = vadd.f32 %v3259, %v3262
    %vm3264 = vweird.f32 %v3258
    %vm3265 = vweird.f32 %v3259
    %vm3266 = vmor %vm3264, %vm3265
    %v3267 = vsel %vm3266, %v3259, %v3263
    %v3268 = vand.u32 2147483647, %v3258
    %vm3269 = vcmp.eq.f32.partialorder %v3268, 8.507059e+37
    %v3270 = vand.u32 %v3258, 2147483648
    %v3271 = vor.u32 1.1754944e-38, %v3270
    %v3272 = vsel %vm3269, %v3271, %v3267
    %v3273 = vmul.f32 %v3255, %v3272
    %v3275 = vsel %vm985, %v3273, 0
    %3277 = vmatpush.msra.mxu0 0.0
    %3278 = vmatpush.msra.mxu0 0.0
    %3279 = vmatpush.msra.mxu0 0.0
    %3280 = vmatpush.msra.mxu0 0.0
    %3281 = vmatpush.msra.mxu0 0.0
    %3282 = vmatpush.msra.mxu0 0.0
    %3283 = vmatpush.msra.mxu0 0.0
    %3284 = vmatpush.msra.mxu0 0.0
    %3285 = vmatpush.msra.mxu0 0.0
    %3286 = vmatpush.msra.mxu0 0.0
    %3287 = vmatpush.msra.mxu0 0.0
    %3288 = vmatpush.msra.mxu0 0.0
    %3289 = vmatpush.msra.mxu0 0.0
    %3290 = vmatpush.msra.mxu0 0.0
    %3291 = vmatpush.msra.mxu0 0.0
    %3292 = vmatpush.msra.mxu0 %v3222
    %3293 = vmatmul.f32.gmra.mxu0 %v3275
    %v3294 = vpop.f32.mrf.mxu0
    %v3295 = vadd.f32 0.0, %v3294
    %3296 = vdwg.mxu0
    %v3297 = vld [vmem:[%s1341 + $0x20] sm:$0xff]
    %v3298 = vld [vmem:[%s1341 + $0x28] sm:$0xff]
    %v3299 = vld [vmem:[%s1341 + $0x30] sm:$0xff]
    %v3300 = vld [vmem:[%s1341 + $0x38] sm:$0xff]
    %v3302 = vsel %vm252, %v3295, 0
    %3304 = vmatpush.msra.mxu0 0.0
    %3305 = vmatpush.msra.mxu0 0.0
    %3306 = vmatpush.msra.mxu0 0.0
    %3307 = vmatpush.msra.mxu0 0.0
    %3308 = vmatpush.msra.mxu0 0.0
    %3309 = vmatpush.msra.mxu0 0.0
    %3310 = vmatpush.msra.mxu0 0.0
    %3311 = vmatpush.msra.mxu0 0.0
    %3312 = vmatpush.msra.mxu0 0.0
    %3313 = vmatpush.msra.mxu0 0.0
    %3314 = vmatpush.msra.mxu0 0.0
    %3315 = vmatpush.msra.mxu0 0.0
    %3316 = vmatpush.msra.mxu0 %v3300
    %3317 = vmatpush.msra.mxu0 %v3299
    %3318 = vmatpush.msra.mxu0 %v3298
    %3319 = vmatpush.msra.mxu0 %v3297
    %3320 = vmatmul.f32.gmra.mxu0 %v3302
    %v3321 = vpop.f32.mrf.mxu0
    %v3322 = vadd.f32 0.0, %v3321
    %3323 = vdwg.mxu0
    %v3324 = vadd.f32 %v3138, %v3322
    %v3325 = vld [vmem:[%s1370 + $0x6] sm:$0x1]
    %v3326 = vperm.slane %v3325, 0
    %v3327 = vadd.f32 %v3324, %v3326
    %v3328 = vld [vmem:[%s1370 + $0x7] sm:$0x1]
    %v3329 = vld [vmem:[%s1370 + $0x8] sm:$0x1]
    %v3330 = vsel %vm252, %v3327, 0.0
    %3331 = vadd.xlane.f32.xlu0 %v3330
    %v3332 = vpop.xlane.xlu0 %3331
    %v3333 = vmul.f32 %v3332, %v850
    %v3334 = vsub.f32 %v3327, %v3333
    %v3335 = vmul.f32 %v3334, %v3334
    %v3336 = vsel %vm252, %v3335, 0.0
    %3337 = vadd.xlane.f32.xlu0 %v3336
    %v3338 = vpop.xlane.xlu0 %3337
    %v3339 = vmul.f32 %v3338, %v850
    %v3340 = vadd.f32 %v3339, 1e-05
    %v3341 = vrsqrt.pop %v3340
    %v3342 = vmul.f32 %v3341, %v3340
    %v3343 = vmul.f32 %v3342, %v3341
    %v3344 = vmul.f32 0.5, %v3343
    %v3345 = vsub.f32 1.5, %v3344
    %v3346 = vmul.f32 %v3341, %v3345
    %vm3347 = vweird.f32 %v3340
    %vm3348 = vweird.f32 %v3341
    %vm3349 = vmor %vm3347, %vm3348
    %v3350 = vsel %vm3349, %v3341, %v3346
    %v3351 = vmul.f32 %v3334, %v3350
    %v3352 = vperm.slane %v3328, 0
    %v3353 = vmul.f32 %v3351, %v3352
    %v3354 = vperm.slane %v3329, 0
    %v3355 = vadd.f32 %v3353, %v3354
    %v3356 = vld [vmem:[%s1341 + $0x40] sm:$0xff]
    %v3357 = vld [vmem:[%s1341 + $0x48] sm:$0xff]
    %v3358 = vld [vmem:[%s1341 + $0x50] sm:$0xff]
    %v3359 = vld [vmem:[%s1341 + $0x58] sm:$0xff]
    %v3360 = vld [vmem:[%s1370 + $0x9] sm:$0x1]
    %v3361 = vperm.slane %v3360, 0
    %v3363 = vsel %vm252, %v3355, 0
    %3365 = vmatpush.msra.mxu0 0.0
    %3366 = vmatpush.msra.mxu0 0.0
    %3367 = vmatpush.msra.mxu0 0.0
    %3368 = vmatpush.msra.mxu0 0.0
    %3369 = vmatpush.msra.mxu0 0.0
    %3370 = vmatpush.msra.mxu0 0.0
    %3371 = vmatpush.msra.mxu0 0.0
    %3372 = vmatpush.msra.mxu0 0.0
    %3373 = vmatpush.msra.mxu0 0.0
    %3374 = vmatpush.msra.mxu0 0.0
    %3375 = vmatpush.msra.mxu0 0.0
    %3376 = vmatpush.msra.mxu0 0.0
    %3377 = vmatpush.msra.mxu0 %v3359
    %3378 = vmatpush.msra.mxu0 %v3358
    %3379 = vmatpush.msra.mxu0 %v3357
    %3380 = vmatpush.msra.mxu0 %v3356
    %3381 = vmatmul.f32.gmra.mxu0 %v3363
    %v3382 = vpop.f32.mrf.mxu0
    %v3383 = vadd.f32 %v3361, %v3382
    %3384 = vdwg.mxu0
    %v3385 = vmax.f32 %v3383, 0.0
    %v3386 = vld [vmem:[%s1341 + $0x60] sm:$0xff]
    %v3387 = vld [vmem:[%s1341 + $0x68] sm:$0xff]
    %v3388 = vld [vmem:[%s1341 + $0x70] sm:$0xff]
    %v3389 = vld [vmem:[%s1341 + $0x78] sm:$0xff]
    %v3391 = vsel %vm1126, %v3385, 0
    %v3394 = vsel %vm1126, %v3386, 0
    %v3397 = vsel %vm1126, %v3387, 0
    %v3400 = vsel %vm1126, %v3388, 0
    %v3403 = vsel %vm1126, %v3389, 0
    %3405 = vmatpush.xpose.msra.mxu0 0.0
    %3406 = vmatpush.xpose.msra.mxu0 0.0
    %3407 = vmatpush.xpose.msra.mxu0 0.0
    %3408 = vmatpush.xpose.msra.mxu0 0.0
    %3409 = vmatpush.xpose.msra.mxu0 0.0
    %3410 = vmatpush.xpose.msra.mxu0 0.0
    %3411 = vmatpush.xpose.msra.mxu0 0.0
    %3412 = vmatpush.xpose.msra.mxu0 0.0
    %3413 = vmatpush.xpose.msra.mxu0 0.0
    %3414 = vmatpush.xpose.msra.mxu0 0.0
    %3415 = vmatpush.xpose.msra.mxu0 0.0
    %3416 = vmatpush.xpose.msra.mxu0 0.0
    %3417 = vmatpush.xpose.msra.mxu0 %v3403
    %3418 = vmatpush.xpose.msra.mxu0 %v3400
    %3419 = vmatpush.xpose.msra.mxu0 %v3397
    %3420 = vmatpush.xpose.msra.mxu0 %v3394
    %3421 = vmatmul.f32.gmra.mxu0 %v3391
    %v3422 = vpop.f32.mrf.mxu0
    %v3423 = vadd.f32 0.0, %v3422
    %3424 = vdwg.mxu0
    %v3425 = vadd.f32 %v3355, %v3423
    %v3426 = vld [vmem:[%s1370 + $0xa] sm:$0x1]
    %v3427 = vperm.slane %v3426, 0
    %v3428 = vadd.f32 %v3425, %v3427
    %v3429 = vld [vmem:[%s1370 + $0xb] sm:$0x1]
    %v3430 = vld [vmem:[%s1370 + $0xc] sm:$0x1]
    %v3431 = vsel %vm252, %v3428, 0.0
    %3432 = vadd.xlane.f32.xlu0 %v3431
    %v3433 = vpop.xlane.xlu0 %3432
    %v3434 = vmul.f32 %v3433, %v850
    %v3435 = vsub.f32 %v3428, %v3434
    %v3436 = vmul.f32 %v3435, %v3435
    %v3437 = vsel %vm252, %v3436, 0.0
    %3438 = vadd.xlane.f32.xlu0 %v3437
    %v3439 = vpop.xlane.xlu0 %3438
    %v3440 = vmul.f32 %v3439, %v850
    %v3441 = vadd.f32 %v3440, 1e-05
    %v3442 = vrsqrt.pop %v3441
    %v3443 = vmul.f32 %v3442, %v3441
    %v3444 = vmul.f32 %v3443, %v3442
    %v3445 = vmul.f32 0.5, %v3444
    %v3446 = vsub.f32 1.5, %v3445
    %v3447 = vmul.f32 %v3442, %v3446
    %vm3448 = vweird.f32 %v3441
    %vm3449 = vweird.f32 %v3442
    %vm3450 = vmor %vm3448, %vm3449
    %v3451 = vsel %vm3450, %v3442, %v3447
    %v3452 = vmul.f32 %v3435, %v3451
    %v3453 = vperm.slane %v3429, 0
    %v3454 = vmul.f32 %v3452, %v3453
    %v3455 = vperm.slane %v3430, 0
    %v3456 = vadd.f32 %v3454, %v3455
    %v3457 = vld [vmem:[%s1721] sm:$0xff]
    %v3458 = vld [vmem:[%s1721 + $0x8] sm:$0xff]
    %v3459 = vld [vmem:[%s1721 + $0x10] sm:$0xff]
    %v3460 = vld [vmem:[%s1721 + $0x18] sm:$0xff]
    %v3461 = vld [vmem:[%s1721 + $0x20] sm:$0xff]
    %v3462 = vld [vmem:[%s1721 + $0x28] sm:$0xff]
    %v3463 = vld [vmem:[%s1721 + $0x30] sm:$0xff]
    %v3464 = vld [vmem:[%s1721 + $0x38] sm:$0xff]
    %v3466 = vsel %vm252, %v3456, 0
    %3468 = vmatpush.msra.mxu0 0.0
    %3469 = vmatpush.msra.mxu0 0.0
    %3470 = vmatpush.msra.mxu0 0.0
    %3471 = vmatpush.msra.mxu0 0.0
    %3472 = vmatpush.msra.mxu0 0.0
    %3473 = vmatpush.msra.mxu0 0.0
    %3474 = vmatpush.msra.mxu0 0.0
    %3475 = vmatpush.msra.mxu0 0.0
    %3476 = vmatpush.msra.mxu0 0.0
    %3477 = vmatpush.msra.mxu0 0.0
    %3478 = vmatpush.msra.mxu0 0.0
    %3479 = vmatpush.msra.mxu0 0.0
    %3480 = vmatpush.msra.mxu0 %v3463
    %3481 = vmatpush.msra.mxu0 %v3461
    %3482 = vmatpush.msra.mxu0 %v3459
    %3483 = vmatpush.msra.mxu0 %v3457
    %3484 = vmatmul.f32.gmra.mxu0 %v3466
    %v3485 = vpop.f32.mrf.mxu0
    %v3486 = vadd.f32 0.0, %v3485
    %3487 = vdwg.mxu0
    %3488 = vmatpush.msra.mxu0 0.0
    %3489 = vmatpush.msra.mxu0 0.0
    %3490 = vmatpush.msra.mxu0 0.0
    %3491 = vmatpush.msra.mxu0 0.0
    %3492 = vmatpush.msra.mxu0 0.0
    %3493 = vmatpush.msra.mxu0 0.0
    %3494 = vmatpush.msra.mxu0 0.0
    %3495 = vmatpush.msra.mxu0 0.0
    %3496 = vmatpush.msra.mxu0 0.0
    %3497 = vmatpush.msra.mxu0 0.0
    %3498 = vmatpush.msra.mxu0 0.0
    %3499 = vmatpush.msra.mxu0 0.0
    %3500 = vmatpush.msra.mxu0 %v3464
    %3501 = vmatpush.msra.mxu0 %v3462
    %3502 = vmatpush.msra.mxu0 %v3460
    %3503 = vmatpush.msra.mxu0 %v3458
    %3504 = vmatmul.f32.gmra.mxu0 %v3466
    %v3505 = vpop.f32.mrf.mxu0
    %v3506 = vadd.f32 0.0, %v3505
    %3507 = vdwg.mxu0
    %v3508 = vld [vmem:[%s1370 + $0xd] sm:$0x1]
    %v3509 = vperm.slane %v3508, 0
    %v3510 = vadd.f32 %v3486, %v3509
    %v3511 = vld [vmem:[%s1370 + $0xe] sm:$0x1]
    %v3512 = vperm.slane %v3511, 0
    %v3513 = vadd.f32 %v3506, %v3512
    %v3514 = vpack.c.bf16 %v3513, %v3513
    %v3516 = vsel %vm252, %v3514, 0
    %3518 = vmatpush.bf16.msra.mxu0 0
    %3519 = vmatpush.bf16.msra.mxu0 0
    %3520 = vmatpush.bf16.msra.mxu0 0
    %3521 = vmatpush.bf16.msra.mxu0 0
    %3522 = vmatpush.bf16.msra.mxu0 0
    %3523 = vmatpush.bf16.msra.mxu0 0
    %3524 = vmatpush.bf16.msra.mxu0 %v2440
    %3525 = vmatpush.bf16.msra.mxu0 %v2438
    %3526 = vmatmul.bf16.gmra.mxu0 %v3516
    %v3527 = vpop.f32.mrf.mxu0
    %v3528 = vadd.f32 0.0, %v3527
    %v3529 = vpop.f32.mrf.mxu0
    %3530 = vdwg.mxu0
    %3531 = vmatpush.bf16.msra.mxu0 0
    %3532 = vmatpush.bf16.msra.mxu0 0
    %3533 = vmatpush.bf16.msra.mxu0 0
    %3534 = vmatpush.bf16.msra.mxu0 0
    %3535 = vmatpush.bf16.msra.mxu0 0
    %3536 = vmatpush.bf16.msra.mxu0 0
    %3537 = vmatpush.bf16.msra.mxu0 %v2441
    %3538 = vmatpush.bf16.msra.mxu0 %v2439
    %3539 = vmatmul.bf16.gmra.mxu0 %v3516
    %v3540 = vpop.f32.mrf.mxu0
    %v3541 = vadd.f32 0.0, %v3540
    %v3542 = vpop.f32.mrf.mxu0
    %3543 = vdwg.mxu0
    %s3544 = scalar_lea.vmem [#allocation5], 8
    %3545 = vst.msk [vmem:[%s3544] sm:$0xff] %vm1809, %v3510
    %s3546 = scalar_lea.vmem [#allocation6], 16
    %3547 = vst [vmem:[%s3546] sm:$0xff] %v3528
    %3548 = vst [vmem:[%s3546 + $0x8] sm:$0xff] %v3541
    // Predicated region
    $region42: #{tpu_custom_call.1} parent=1 // pred_check
      _
    $region43: #{tpu_custom_call.1} parent=1 // pred_check_branch
      %3550 = sbr.rel (0) target = $region45
    $region44: #{tpu_custom_call.1} parent=1 // pred_region
      %3552 = vsyncadd [#allocation4], 0
      %s3553 = sshll.u32 [#allocation5], 4
      %s3554 = int_to_ptr.vmem [resolvable:$true] %s3553
      %s3555 = sshll.u32 %s9, 4
      %s3556 = int_to_ptr.hbm [resolvable:$true] %s3555
      %3561 = dma.vmem_to_hbm [thread:$0]  %s3554, 256, %s3556, [#allocation4], 128, 128, 8
    $region45: #{tpu_custom_call.1} parent=1 // pred_fallthru
      _
    // Predicated region
    $region46: #{tpu_custom_call.1} parent=1 // pred_check
      _
    $region47: #{tpu_custom_call.1} parent=1 // pred_check_branch
      %3563 = sbr.rel (0) target = $region49
    $region48: #{tpu_custom_call.1} parent=1 // pred_region
      %3565 = vsyncadd [#allocation7], 0
      %s3566 = sshll.u32 [#allocation6], 4
      %s3567 = int_to_ptr.vmem [resolvable:$true] %s3566
      %s3568 = sshll.u32 %s10, 4
      %s3569 = int_to_ptr.hbm [resolvable:$true] %s3568
      %3574 = dma.vmem_to_hbm [thread:$0]  %s3567, 512, %s3569, [#allocation7], 256, 256, 16
    $region49: #{tpu_custom_call.1} parent=1 // pred_fallthru
      _
    // Predicated region
    $region50: #{tpu_custom_call.1} parent=1 // pred_check
      _
    $region51: #{tpu_custom_call.1} parent=1 // pred_check_branch
      %3576 = sbr.rel (0) target = $region53
    $region52: #{tpu_custom_call.1} parent=1 // pred_region
      %3578 = dma.done [#allocation4], 256
    $region53: #{tpu_custom_call.1} parent=1 // pred_fallthru
      _
    // Predicated region
    $region54: #{tpu_custom_call.1} parent=1 // pred_check
      _
    $region55: #{tpu_custom_call.1} parent=1 // pred_check_branch
      %3580 = sbr.rel (0) target = $region57
    $region56: #{tpu_custom_call.1} parent=1 // pred_region
      %3582 = dma.done [#allocation7], 512
    $region57: #{tpu_custom_call.1} parent=1 // pred_fallthru
      _
    %3583 = vsyncpa [#allocation3], 1
    %3584 = vsyncpa [#allocation4], 1
    %3585 = vsyncpa [#allocation7], 1

</llo_original>
